<compile_context>
chip_gen: v5e
topology: v5e:2x2
jax: 0.10.0
libtpu: 0.0.40
codegen_flags: <defaults>
</compile_context>

<pallas_src>
import functools
import math

import jax
import jax.numpy as jnp
from jax import lax
from jax.experimental import pallas as pl
from jax.experimental.pallas import tpu as pltpu

C8 = 8  # coordinate axis padded 3 -> 8 (sublane aligned); rows 3..7 stay zero


# ---------------------------------------------------------------------------
# in-kernel helper math
# ---------------------------------------------------------------------------
def _tangent_frame(n):
    """n: [C8, N] (rows 0..2 = unit normals) -> rows (u, v, n) of the spin-axis rotation."""
    nx, ny, nz = n[0:1], n[1:2], n[2:3]
    d2 = nx * nx + ny * ny
    safe = d2 > 1e-12
    inv = lax.rsqrt(jnp.maximum(d2, 1e-20))
    ux = jnp.where(safe, -ny * inv, jnp.ones_like(nx))
    uy = jnp.where(safe, nx * inv, jnp.zeros_like(nx))
    uz = jnp.zeros_like(nx)
    vx = -nz * uy
    vy = nz * ux
    vz = nx * uy - ny * ux
    return (ux, uy, uz), (vx, vy, vz), (nx, ny, nz)


# ---------------------------------------------------------------------------
# Fused attack kernel: one grid step == one attack iteration.
# ---------------------------------------------------------------------------
def _fused_attack_kernel(target_ref,                      # [B] int32 scalar prefetch (SMEM)
                         p0_ref, n_ref, w1_ref, w1t_ref, b1_ref, w2t_ref, b2_ref,
                         adv_pts_ref, adv_logits_ref,
                         p_vmem, g_vmem, best_vmem, tmp_vmem,
                         stage_vmem, bestnorm_vmem, hasbest_vmem,
                         *, B, coef, budget, eta_in, eta_out, cp):
    step = pl.program_id(0)
    w1 = w1_ref[...]          # [H, 8]   (cols 3..7 zero)
    w1t = w1t_ref[...]        # [8, H]
    b1 = b1_ref[...]          # [H, 1]
    w2t = w2t_ref[...]        # [H, CP]
    b2 = b2_ref[...]          # [1, CP]  (pad classes biased to -1e9)
    iota_c = lax.broadcasted_iota(jnp.int32, (1, cp), 1)

    # --- PointNet-lite classifier: pointwise MLP -> relu -> global max pool -> head ---
    def cls_fwd(x):                                   # x: [8, N]
        pre = jnp.dot(w1, x, preferred_element_type=jnp.float32) + b1    # MXU  [H, N]
        h = jnp.maximum(pre, 0.0)
        f = jnp.max(h, axis=1, keepdims=True)                             # [H, 1]
        logits = jnp.sum(f * w2t, axis=0, keepdims=True) + b2             # [1, CP]
        return pre, h, f, logits

    def cls_bwd(dlogits, pre, h, f):                  # -> grad wrt x : [8, N]
        df = jnp.sum(w2t * dlogits, axis=1, keepdims=True)                # [H, 1]
        pool_mask = jnp.logical_and(h >= f, pre > 0.0).astype(jnp.float32)
        dpre = df * pool_mask                                              # [H, N]
        return jnp.dot(w1t, dpre, preferred_element_type=jnp.float32)      # MXU [8, N]

    def cw_grad(logits, t_onehot):
        """untargeted CW (kappa=0) dloss/dlogits, plus 'prediction != target' mask."""
        real = jnp.sum(logits * t_onehot, axis=1, keepdims=True)
        masked = logits - 1e10 * t_onehot
        other = jnp.max(masked, axis=1, keepdims=True)
        j_idx = jnp.min(jnp.where(masked >= other, iota_c, cp), axis=1, keepdims=True)
        j_onehot = (iota_c == j_idx).astype(jnp.float32)
        active = ((real - other) > 0.0).astype(jnp.float32)
        return active * (t_onehot - j_onehot), (other > real).astype(jnp.float32)

    def lsm_grad(logits, t_onehot):
        m = jnp.max(logits, axis=1, keepdims=True)
        e = jnp.exp(logits - m)
        sm = e * pl.reciprocal(jnp.sum(e, axis=1, keepdims=True), approx=True)
        return t_onehot - sm

    def clip_linf(p, ori):
        d = p - ori
        pn2 = jnp.sum(d * d, axis=0, keepdims=True)
        s = jnp.minimum(budget * lax.rsqrt(jnp.maximum(pn2, 1e-18)), 1.0)   # exact rsqrt
        return ori + d * s

    # ----- step 0: initialize persistent state (points, best, carried CW gradient) -----
    @pl.when(step == 0)
    def _init():
        p_vmem[...] = p0_ref[...]
        best_vmem[...] = p0_ref[...]
        tmp_vmem[...] = jnp.zeros_like(tmp_vmem)            # rows 3..7 stay zero forever
        stage_vmem[...] = jnp.zeros_like(stage_vmem)
        hasbest_vmem[...] = jnp.zeros_like(hasbest_vmem)
        bestnorm_vmem[...] = jnp.full_like(bestnorm_vmem, jnp.inf)
        for b in range(B):
            t_onehot = (iota_c == target_ref[b]).astype(jnp.float32)
            pre, h, f, logits = cls_fwd(p0_ref[b])
            dlog, _ = cw_grad(logits, t_onehot)
            g_vmem[b] = cls_bwd(dlog, pre, h, f)

    # ----- one attack step (stage-1 vs stage-2 selected branchlessly) -----
    stage = stage_vmem[...]                   # [1,1] in {0,1}; sticky once set
    all_adv = jnp.ones_like(stage)

    for b in range(B):
        t_onehot = (iota_c == target_ref[b]).astype(jnp.float32)
        p = p_vmem[b]                          # [8, N]
        ori = p0_ref[b]
        n = n_ref[b]
        g = g_vmem[b]

        # --- stage-1 candidate: shape-invariant I-FGSM step + per-point L2 clip ---
        (ux, uy, uz), (vx, vy, vz), (nx, ny, nz) = _tangent_frame(n)
        intercept = jnp.sum(p * n, axis=0, keepdims=True)              # (p.n)  [1,N]
        tx, ty, tz = intercept * nx, intercept * ny, intercept * nz
        qx, qy, qz = p[0:1] - tx, p[1:2] - ty, p[2:3] - tz
        new_x = ux * qx + uy * qy + uz * qz
        new_y = vx * qx + vy * qy + vz * qz
        new_z = nx * qx + ny * qy + nz * qz
        gx_, gy_, gz_ = g[0:1], g[1:2], g[2:3]
        gnx = ux * gx_ + uy * gy_ + uz * gz_
        gny = vx * gx_ + vy * gy_ + vz * gz_                            # grad_z zeroed
        ss = jnp.sum(gnx * gnx + gny * gny, axis=(0, 1), keepdims=True)
        sc = coef * lax.rsqrt(jnp.maximum(ss, 1e-18))
        ax_, ay_, az_ = new_x - sc * gnx, new_y - sc * gny, new_z
        px = ux * ax_ + vx * ay_ + nx * az_ + tx
        py = uy * ax_ + vy * ay_ + ny * az_ + ty
        pz = uz * ax_ + vz * ay_ + nz * az_ + tz
        # component-wise clip; candidate assembled via VMEM scratch rows (no concat)
        dx, dy, dz = px - ori[0:1], py - ori[1:2], pz - ori[2:3]
        pn2 = dx * dx + dy * dy + dz * dz
        s = jnp.minimum(budget * lax.rsqrt(jnp.maximum(pn2, 1e-18)), 1.0)
        tmp_vmem[0:1, :] = ori[0:1] + dx * s
        tmp_vmem[1:2, :] = ori[1:2] + dy * s
        tmp_vmem[2:3, :] = ori[2:3] + dz * s
        p1 = tmp_vmem[...]

        # classifier fwd/bwd at the clipped candidate: logits drive the stage test,
        # CW gradient is carried to the next stage-1 step (no extra classifier pass)
        pre1, h1, f1, logits1 = cls_fwd(p1)
        dlog1, is_adv1 = cw_grad(logits1, t_onehot)
        g1 = cls_bwd(dlog1, pre1, h1, f1)

        # --- stage-2 candidate: log-softmax gradient + simplified boundary projection ---
        # TODO(synk): boundary_projection_3 also mixes Hausdorff/Chamfer/curvature grads
        # and exponential step schedules; only the L2 boundary-projection term is kept.
        pre2, h2, f2, logits2 = cls_fwd(p)
        dlog2 = lsm_grad(logits2, t_onehot)
        g2 = cls_bwd(dlog2, pre2, h2, f2)
        real2 = jnp.sum(logits2 * t_onehot, axis=1, keepdims=True)
        other2 = jnp.max(logits2 - 1e10 * t_onehot, axis=1, keepdims=True)
        is_adv2 = (other2 > real2).astype(jnp.float32)                   # [1,1]
        gn2 = jnp.sum(g2 * g2, axis=(0, 1), keepdims=True)
        ghat = g2 * lax.rsqrt(jnp.maximum(gn2, 1e-24))
        delta = p - ori
        dproj = jnp.sum(delta * ghat, axis=(0, 1), keepdims=True)
        out_step = p - eta_out * (delta - dproj * ghat)   # adversarial: shrink delta along boundary
        in_step = p - eta_in * ghat                       # not adversarial: descend log p(target)
        p2 = clip_linf(is_adv2 * out_step + (1.0 - is_adv2) * in_step, ori)

        # boundary-projection bookkeeping: smallest adversarial perturbation (stage-2 only)
        pnorm2 = jnp.sum(delta * delta, axis=(0, 1), keepdims=True)
        better = stage * is_adv2 * (pnorm2 < bestnorm_vmem[b]).astype(jnp.float32)
        best_vmem[b] = jnp.where(better > 0.5, p, best_vmem[b])
        bestnorm_vmem[b] = jnp.where(better > 0.5, pnorm2, bestnorm_vmem[b])
        hasbest_vmem[b] = jnp.maximum(hasbest_vmem[b], better)

        # --- commit state for the next step ---
        p_vmem[b] = jnp.where(stage > 0.5, p2, p1)
        g_vmem[b] = g1
        all_adv = all_adv * is_adv1

    # stage-1 -> stage-2 switch once every sample is misclassified (sticky)
    stage_vmem[...] = jnp.maximum(stage, all_adv)

    # ----- final step: select output points, classify, write results -----
    @pl.when(step == pl.num_programs(0) - 1)
    def _finalize():
        for b in range(B):
            use_best = hasbest_vmem[b]
            adv_b = jnp.where(use_best > 0.5, best_vmem[b], p_vmem[b])
            _, _, _, logits = cls_fwd(adv_b)
            adv_pts_ref[b] = adv_b
            adv_logits_ref[b] = logits


@functools.lru_cache(maxsize=None)
def make_fused_attack(B, Np, H, CP, steps, coef, budget, eta_in, eta_out):
    kern = functools.partial(_fused_attack_kernel, B=B, coef=coef, budget=budget,
                             eta_in=eta_in, eta_out=eta_out, cp=CP)

    def const2(shape):
        return pl.BlockSpec(shape, lambda s, tgt: (0, 0))

    def const3(shape):
        return pl.BlockSpec(shape, lambda s, tgt: (0, 0, 0))

    gs = pltpu.PrefetchScalarGridSpec(
        num_scalar_prefetch=1,
        grid=(steps,),
        in_specs=[const3((B, C8, Np)),          # ori / initial points
                  const3((B, C8, Np)),          # unit normals
                  const2((H, C8)), const2((C8, H)), const2((H, 1)),
                  const2((H, CP)), const2((1, CP))],
        out_specs=[const3((B, C8, Np)),         # adversarial points
                   const3((B, 1, CP))],         # logits at the adversarial points
        scratch_shapes=[
            pltpu.VMEM((B, C8, Np), jnp.float32),   # current points
            pltpu.VMEM((B, C8, Np), jnp.float32),   # carried CW gradient
            pltpu.VMEM((B, C8, Np), jnp.float32),   # best adversarial points
            pltpu.VMEM((C8, Np), jnp.float32),      # stage-1 candidate assembly
            pltpu.VMEM((1, 1), jnp.float32),        # stage flag (0 -> stage-1, 1 -> stage-2)
            pltpu.VMEM((B, 1, 1), jnp.float32),     # best perturbation ||.||^2 per sample
            pltpu.VMEM((B, 1, 1), jnp.float32),     # has-best flag per sample
        ],
    )
    return pl.pallas_call(
        kern,
        grid_spec=gs,
        out_shape=[jax.ShapeDtypeStruct((B, C8, Np), jnp.float32),
                   jax.ShapeDtypeStruct((B, 1, CP), jnp.float32)],
        compiler_params=pltpu.CompilerParams(
            dimension_semantics=("arbitrary",),
            vmem_limit_bytes=32 * 1024 * 1024),
    )


# ---------------------------------------------------------------------------
# eidos_attack wrapper: one jit, one pallas_call for the whole attack.
# ---------------------------------------------------------------------------
class EidosAttackPallas:
    def __init__(self, eps, step_size, max_steps, num_class, top5_attack,
                 hidden=32, key=None):
        self.eps = float(eps)
        self.step_size = float(step_size)
        self.max_steps = int(max_steps)
        self.num_class = int(num_class)
        self.top5_attack = bool(top5_attack)
        self.hidden = int(hidden)
        # lane-dense class axis (sliced back in the wrapper)
        self.CP = max(128, ((self.num_class + 127) // 128) * 128)

        if key is None:
            key = jax.random.PRNGKey(0)
        k1, k2 = jax.random.split(key)
        H, C, CP = self.hidden, self.num_class, self.CP
        # deterministic synthetic classifier parameters (PointNet-lite)
        # TODO(synk): the injected torch `classifier`/`pre_head` modules are replaced
        # by this fixed PointNet-lite; arbitrary torch modules are not translatable.
        w1 = (0.5 * jax.random.normal(k1, (H, 3))).astype(jnp.float32)
        self.W1P = jnp.zeros((H, C8), jnp.float32).at[:, :3].set(w1)   # coord axis 3 -> 8
        self.W1TP = jnp.transpose(self.W1P)                             # [8, H]
        self.b1 = jnp.zeros((H, 1), jnp.float32)
        w2 = (0.5 * jax.random.normal(k2, (H, C))).astype(jnp.float32)
        self.W2T = jnp.zeros((H, CP), jnp.float32).at[:, :C].set(w2)
        self.b2 = jnp.full((1, CP), -1e9, jnp.float32).at[:, :C].set(0.0)

        self._run = jax.jit(self._run_impl)

    def _run_impl(self, points, target, W1P, W1TP, b1, W2T, b2):
        B, N, _ = points.shape
        H, C, CP = self.hidden, self.num_class, self.CP
        Np = ((N + 127) // 128) * 128
        coef = self.step_size * math.sqrt(3 * 1024)   # matches reference np.sqrt(3*1024)

        # [B,N,6] -> lane/sublane-dense [B,8,Np]: xyz rows 0..2; unit normals likewise.
        xyz = jnp.transpose(points[:, :, 0:3], (0, 2, 1)).astype(jnp.float32)
        nv = jnp.transpose(points[:, :, 3:6], (0, 2, 1)).astype(jnp.float32)
        nv = nv * lax.rsqrt(jnp.sum(nv * nv, axis=1, keepdims=True) + 1e-12)
        p0 = jnp.pad(xyz, ((0, 0), (0, C8 - 3), (0, Np - N)))
        # TODO(synk): get_normal_vector() uses open3d kNN+PCA normal re-estimation,
        # no clean Pallas equivalent; the initial unit normals are reused every step.
        nrm = jnp.pad(nv, ((0, 0), (0, C8 - 3), (0, Np - N)))

        fused = make_fused_attack(B, Np, H, CP, self.max_steps,
                                  coef, self.eps, coef, self.step_size)
        adv8, adv_logits = fused(target, p0, nrm, W1P, W1TP, b1, W2T, b2)
        adv_c = adv8[:, :3, :N]
        return adv_c, adv_logits[:, 0, :C]

    def __call__(self, points, target):
        target = target.astype(jnp.int32)
        adv_c, adv_logits = self._run(points.astype(jnp.float32), target,
                                      self.W1P, self.W1TP, self.b1, self.W2T, self.b2)
        pred = jnp.argmax(adv_logits, axis=-1)
        adv_target = pred
        if self.top5_attack:
            top5 = lax.top_k(adv_logits, 5)[1]
            in_top5 = jnp.any(top5 == target[:, None], axis=-1)
            adv_target = jnp.where(in_top5, target, -1)
        asr = int(jax.device_get(jnp.sum(pred != target)))   # single host sync at the end
        adv_points = jnp.transpose(adv_c, (0, 2, 1))          # back to [B, N, 3]
        return adv_points, adv_target, asr


if __name__ == "__main__":
    B, N, C = 2, 128, 10
    key = jax.random.PRNGKey(0)
    kp, kn, kt, kw = jax.random.split(key, 4)
    xyz = 0.5 * jax.random.normal(kp, (B, N, 3), jnp.float32)
    nrm = jax.random.normal(kn, (B, N, 3), jnp.float32) + 1e-3
    points = jnp.concatenate([xyz, nrm], axis=-1)            # [B, N, 6]
    target = jax.random.randint(kt, (B,), 0, C)

    attack = EidosAttackPallas(eps=0.16, step_size=0.007, max_steps=4,
                               num_class=C, top5_attack=False, hidden=32, key=kw)
    adv_points, adv_target, asr = attack(points, target)
    jax.block_until_ready(adv_points)
    print("KERNEL_OK")
</pallas_src>

<mosaic_0001>
module attributes {stable_mosaic.version = 11 : i64} {
  func.func @_fused_attack_kernel(%arg0: i32, %arg1: memref<2xi32, #tpu.memory_space<smem>>, %arg2: memref<2x8x128xf32, #tpu.memory_space<vmem>>, %arg3: memref<2x8x128xf32, #tpu.memory_space<vmem>>, %arg4: memref<32x8xf32, #tpu.memory_space<vmem>>, %arg5: memref<8x32xf32, #tpu.memory_space<vmem>>, %arg6: memref<32x1xf32, #tpu.memory_space<vmem>>, %arg7: memref<32x128xf32, #tpu.memory_space<vmem>>, %arg8: memref<1x128xf32, #tpu.memory_space<vmem>>, %arg9: memref<2x8x128xf32, #tpu.memory_space<vmem>>, %arg10: memref<2x1x128xf32, #tpu.memory_space<vmem>>, %arg11: memref<2x8x128xf32, #tpu.memory_space<vmem>>, %arg12: memref<2x8x128xf32, #tpu.memory_space<vmem>>, %arg13: memref<2x8x128xf32, #tpu.memory_space<vmem>>, %arg14: memref<8x128xf32, #tpu.memory_space<vmem>>, %arg15: memref<1x1xf32, #tpu.memory_space<vmem>>, %arg16: memref<2x1x1xf32, #tpu.memory_space<vmem>>, %arg17: memref<2x1x1xf32, #tpu.memory_space<vmem>>) attributes {dimension_semantics = [#tpu.dimension_semantics<arbitrary>], iteration_bounds = array<i64: 4>, scalar_prefetch = 1 : i64, scratch_operands = 7 : i64, tpu.core_type = #tpu.core_type<tc>, window_params = [{pipeline_mode = #tpu.pipeline_mode<synchronous>, transform_indices = @transform_0, window_bounds = array<i64: 2, 8, 128>}, {pipeline_mode = #tpu.pipeline_mode<synchronous>, transform_indices = @transform_1, window_bounds = array<i64: 2, 8, 128>}, {pipeline_mode = #tpu.pipeline_mode<synchronous>, transform_indices = @transform_2, window_bounds = array<i64: 32, 8>}, {pipeline_mode = #tpu.pipeline_mode<synchronous>, transform_indices = @transform_3, window_bounds = array<i64: 8, 32>}, {pipeline_mode = #tpu.pipeline_mode<synchronous>, transform_indices = @transform_4, window_bounds = array<i64: 32, 1>}, {pipeline_mode = #tpu.pipeline_mode<synchronous>, transform_indices = @transform_5, window_bounds = array<i64: 32, 128>}, {pipeline_mode = #tpu.pipeline_mode<synchronous>, transform_indices = @transform_6, window_bounds = array<i64: 1, 128>}, {pipeline_mode = #tpu.pipeline_mode<synchronous>, transform_indices = @transform_7, window_bounds = array<i64: 2, 8, 128>}, {pipeline_mode = #tpu.pipeline_mode<synchronous>, transform_indices = @transform_8, window_bounds = array<i64: 2, 1, 128>}]} {
    %c0 = arith.constant 0 : index
    %c0_0 = arith.constant 0 : index
    %0 = vector.load %arg4[%c0, %c0_0] : memref<32x8xf32, #tpu.memory_space<vmem>>, vector<32x8xf32>
    %c0_1 = arith.constant 0 : index
    %c0_2 = arith.constant 0 : index
    %1 = vector.load %arg5[%c0_1, %c0_2] : memref<8x32xf32, #tpu.memory_space<vmem>>, vector<8x32xf32>
    %c0_3 = arith.constant 0 : index
    %c0_4 = arith.constant 0 : index
    %2 = vector.load %arg6[%c0_3, %c0_4] : memref<32x1xf32, #tpu.memory_space<vmem>>, vector<32x1xf32>
    %c0_5 = arith.constant 0 : index
    %c0_6 = arith.constant 0 : index
    %3 = vector.load %arg7[%c0_5, %c0_6] : memref<32x128xf32, #tpu.memory_space<vmem>>, vector<32x128xf32>
    %c0_7 = arith.constant 0 : index
    %c0_8 = arith.constant 0 : index
    %4 = vector.load %arg8[%c0_7, %c0_8] : memref<1x128xf32, #tpu.memory_space<vmem>>, vector<1x128xf32>
    %5 = tpu.iota {dimensions = array<i32: 1>} : vector<1x128xi32>
    %c0_i32 = arith.constant 0 : i32
    %6 = arith.cmpi eq, %arg0, %c0_i32 : i32
    %7 = arith.extui %6 : i1 to i32
    %c0_i32_9 = arith.constant 0 : i32
    %8 = arith.cmpi ne, %7, %c0_i32_9 : i32
    scf.if %8 {
      %c0_214 = arith.constant 0 : index
      %c0_215 = arith.constant 0 : index
      %c0_216 = arith.constant 0 : index
      %712 = vector.load %arg2[%c0_214, %c0_215, %c0_216] : memref<2x8x128xf32, #tpu.memory_space<vmem>>, vector<2x8x128xf32>
      %c0_217 = arith.constant 0 : index
      %c0_218 = arith.constant 0 : index
      %c0_219 = arith.constant 0 : index
      %713 = vector.load %arg11[%c0_217, %c0_218, %c0_219] : memref<2x8x128xf32, #tpu.memory_space<vmem>>, vector<2x8x128xf32>
      tpu.vector_store %arg11[%c0_217, %c0_218, %c0_219], %712 {strides = array<i32>} : memref<2x8x128xf32, #tpu.memory_space<vmem>>, vector<2x8x128xf32>,
      %c0_220 = arith.constant 0 : index
      %c0_221 = arith.constant 0 : index
      %c0_222 = arith.constant 0 : index
      %714 = vector.load %arg2[%c0_220, %c0_221, %c0_222] : memref<2x8x128xf32, #tpu.memory_space<vmem>>, vector<2x8x128xf32>
      %c0_223 = arith.constant 0 : index
      %c0_224 = arith.constant 0 : index
      %c0_225 = arith.constant 0 : index
      %715 = vector.load %arg13[%c0_223, %c0_224, %c0_225] : memref<2x8x128xf32, #tpu.memory_space<vmem>>, vector<2x8x128xf32>
      tpu.vector_store %arg13[%c0_223, %c0_224, %c0_225], %714 {strides = array<i32>} : memref<2x8x128xf32, #tpu.memory_space<vmem>>, vector<2x8x128xf32>,
      %cst_226 = arith.constant 0.000000e+00 : f32
      %716 = vector.broadcast %cst_226 : f32 to vector<8x128xf32>
      %c0_227 = arith.constant 0 : index
      %c0_228 = arith.constant 0 : index
      %717 = vector.load %arg14[%c0_227, %c0_228] : memref<8x128xf32, #tpu.memory_space<vmem>>, vector<8x128xf32>
      tpu.vector_store %arg14[%c0_227, %c0_228], %716 {strides = array<i32>} : memref<8x128xf32, #tpu.memory_space<vmem>>, vector<8x128xf32>,
      %cst_229 = arith.constant 0.000000e+00 : f32
      %718 = vector.broadcast %cst_229 : f32 to vector<1x1xf32>
      %c0_230 = arith.constant 0 : index
      %c0_231 = arith.constant 0 : index
      %719 = vector.load %arg15[%c0_230, %c0_231] : memref<1x1xf32, #tpu.memory_space<vmem>>, vector<1x1xf32>
      tpu.vector_store %arg15[%c0_230, %c0_231], %718 {strides = array<i32>} : memref<1x1xf32, #tpu.memory_space<vmem>>, vector<1x1xf32>,
      %cst_232 = arith.constant 0.000000e+00 : f32
      %720 = vector.broadcast %cst_232 : f32 to vector<2x1x1xf32>
      %c0_233 = arith.constant 0 : index
      %c0_234 = arith.constant 0 : index
      %c0_235 = arith.constant 0 : index
      %721 = vector.load %arg17[%c0_233, %c0_234, %c0_235] : memref<2x1x1xf32, #tpu.memory_space<vmem>>, vector<2x1x1xf32>
      tpu.vector_store %arg17[%c0_233, %c0_234, %c0_235], %720 {strides = array<i32>} : memref<2x1x1xf32, #tpu.memory_space<vmem>>, vector<2x1x1xf32>,
      %cst_236 = arith.constant 0x7F800000 : f32
      %722 = vector.broadcast %cst_236 : f32 to vector<2x1x1xf32>
      %c0_237 = arith.constant 0 : index
      %c0_238 = arith.constant 0 : index
      %c0_239 = arith.constant 0 : index
      %723 = vector.load %arg16[%c0_237, %c0_238, %c0_239] : memref<2x1x1xf32, #tpu.memory_space<vmem>>, vector<2x1x1xf32>
      tpu.vector_store %arg16[%c0_237, %c0_238, %c0_239], %722 {strides = array<i32>} : memref<2x1x1xf32, #tpu.memory_space<vmem>>, vector<2x1x1xf32>,
      %c0_240 = arith.constant 0 : index
      %724 = memref.load %arg1[%c0_240] : memref<2xi32, #tpu.memory_space<smem>>
      %725 = vector.broadcast %724 : i32 to vector<1x128xi32>
      %726 = arith.cmpi eq, %5, %725 : vector<1x128xi32>
      %727 = arith.extui %726 : vector<1x128xi1> to vector<1x128xi32>
      %728 = arith.sitofp %727 : vector<1x128xi32> to vector<1x128xf32>
      %c0_241 = arith.constant 0 : index
      %c0_242 = arith.constant 0 : index
      %c0_243 = arith.constant 0 : index
      %729 = vector.load %arg2[%c0_241, %c0_242, %c0_243] : memref<2x8x128xf32, #tpu.memory_space<vmem>>, vector<1x8x128xf32>
      %730 = vector.shape_cast %729 : vector<1x8x128xf32> to vector<8x128xf32>
      %cst_244 = arith.constant dense<0.000000e+00> : vector<32x128xf32>
      %731 = tpu.matmul %0, %730, %cst_244 {dimension_numbers = #tpu.dot_dimension_numbers<[1], [0], [0], [1], [0, 0, 1, 1], [], []>} : vector<32x8xf32>, vector<8x128xf32>, vector<32x128xf32> -> vector<32x128xf32>
      %732 = vector.broadcast %2 : vector<32x1xf32> to vector<32x128xf32>
      %733 = arith.addf %731, %732 : vector<32x128xf32>
      %cst_245 = arith.constant 0.000000e+00 : f32
      %734 = vector.broadcast %cst_245 : f32 to vector<32x128xf32>
      %735 = arith.maximumf %733, %734 : vector<32x128xf32>
      %cst_246 = arith.constant dense<0xFF800000> : vector<32xf32>
      %736 = vector.multi_reduction <maximumf>, %735, %cst_246 [1] : vector<32x128xf32> to vector<32xf32>
      %737 = vector.shape_cast %736 : vector<32xf32> to vector<32x1xf32>
      %738 = vector.broadcast %737 : vector<32x1xf32> to vector<32x128xf32>
      %739 = arith.mulf %738, %3 : vector<32x128xf32>
      %cst_247 = arith.constant dense<0.000000e+00> : vector<128xf32>
      %740 = vector.multi_reduction <add>, %739, %cst_247 [0] : vector<32x128xf32> to vector<128xf32>
      %741 = vector.shape_cast %740 : vector<128xf32> to vector<1x128xf32>
      %742 = arith.addf %741, %4 : vector<1x128xf32>
      %743 = arith.mulf %742, %728 : vector<1x128xf32>
      %cst_248 = arith.constant dense<0.000000e+00> : vector<1xf32>
      %744 = vector.multi_reduction <add>, %743, %cst_248 [1] : vector<1x128xf32> to vector<1xf32>
      %745 = vector.shape_cast %744 : vector<1xf32> to vector<1x1xf32>
      %cst_249 = arith.constant 1.000000e+10 : f32
      %746 = vector.broadcast %cst_249 : f32 to vector<1x128xf32>
      %747 = arith.mulf %746, %728 : vector<1x128xf32>
      %748 = arith.subf %742, %747 : vector<1x128xf32>
      %cst_250 = arith.constant dense<0xFF800000> : vector<1xf32>
      %749 = vector.multi_reduction <maximumf>, %748, %cst_250 [1] : vector<1x128xf32> to vector<1xf32>
      %750 = vector.shape_cast %749 : vector<1xf32> to vector<1x1xf32>
      %751 = vector.broadcast %750 : vector<1x1xf32> to vector<1x128xf32>
      %752 = arith.cmpf oge, %748, %751 : vector<1x128xf32>
      %c128_i32_251 = arith.constant 128 : i32
      %753 = vector.broadcast %c128_i32_251 : i32 to vector<1x128xi32>
      %754 = arith.select %752, %5, %753 : vector<1x128xi1>, vector<1x128xi32>
      %cst_252 = arith.constant dense<2147483647> : vector<1xi32>
      %755 = vector.multi_reduction <minsi>, %754, %cst_252 [1] : vector<1x128xi32> to vector<1xi32>
      %756 = vector.shape_cast %755 : vector<1xi32> to vector<1x1xi32>
      %757 = vector.broadcast %756 : vector<1x1xi32> to vector<1x128xi32>
      %758 = arith.cmpi eq, %5, %757 : vector<1x128xi32>
      %759 = arith.extui %758 : vector<1x128xi1> to vector<1x128xi32>
      %760 = arith.sitofp %759 : vector<1x128xi32> to vector<1x128xf32>
      %761 = arith.subf %745, %750 : vector<1x1xf32>
      %cst_253 = arith.constant 0.000000e+00 : f32
      %762 = vector.broadcast %cst_253 : f32 to vector<1x1xf32>
      %763 = arith.cmpf ogt, %761, %762 : vector<1x1xf32>
      %764 = arith.extui %763 : vector<1x1xi1> to vector<1x1xi32>
      %765 = arith.sitofp %764 : vector<1x1xi32> to vector<1x1xf32>
      %766 = arith.subf %728, %760 : vector<1x128xf32>
      %767 = vector.broadcast %765 : vector<1x1xf32> to vector<1x128xf32>
      %768 = arith.mulf %767, %766 : vector<1x128xf32>
      %769 = vector.broadcast %768 : vector<1x128xf32> to vector<32x128xf32>
      %770 = arith.mulf %3, %769 : vector<32x128xf32>
      %cst_254 = arith.constant dense<0.000000e+00> : vector<32xf32>
      %771 = vector.multi_reduction <add>, %770, %cst_254 [1] : vector<32x128xf32> to vector<32xf32>
      %772 = vector.shape_cast %771 : vector<32xf32> to vector<32x1xf32>
      %773 = vector.broadcast %737 : vector<32x1xf32> to vector<32x128xf32>
      %774 = arith.cmpf oge, %735, %773 : vector<32x128xf32>
      %cst_255 = arith.constant 0.000000e+00 : f32
      %775 = vector.broadcast %cst_255 : f32 to vector<32x128xf32>
      %776 = arith.cmpf ogt, %733, %775 : vector<32x128xf32>
      %777 = arith.andi %774, %776 : vector<32x128xi1>
      %778 = arith.extui %777 : vector<32x128xi1> to vector<32x128xi32>
      %779 = arith.sitofp %778 : vector<32x128xi32> to vector<32x128xf32>
      %780 = vector.broadcast %772 : vector<32x1xf32> to vector<32x128xf32>
      %781 = arith.mulf %780, %779 : vector<32x128xf32>
      %cst_256 = arith.constant dense<0.000000e+00> : vector<8x128xf32>
      %782 = tpu.matmul %1, %781, %cst_256 {dimension_numbers = #tpu.dot_dimension_numbers<[1], [0], [0], [1], [0, 0, 1, 1], [], []>} : vector<8x32xf32>, vector<32x128xf32>, vector<8x128xf32> -> vector<8x128xf32>
      %c0_257 = arith.constant 0 : index
      %c0_258 = arith.constant 0 : index
      %c0_259 = arith.constant 0 : index
      %783 = vector.load %arg12[%c0_257, %c0_258, %c0_259] : memref<2x8x128xf32, #tpu.memory_space<vmem>>, vector<1x8x128xf32>
      %784 = vector.shape_cast %783 : vector<1x8x128xf32> to vector<8x128xf32>
      %785 = vector.shape_cast %782 : vector<8x128xf32> to vector<1x8x128xf32>
      tpu.vector_store %arg12[%c0_257, %c0_258, %c0_259], %785 {strides = array<i32>} : memref<2x8x128xf32, #tpu.memory_space<vmem>>, vector<1x8x128xf32>,
      %c1_260 = arith.constant 1 : index
      %786 = memref.load %arg1[%c1_260] : memref<2xi32, #tpu.memory_space<smem>>
      %787 = vector.broadcast %786 : i32 to vector<1x128xi32>
      %788 = arith.cmpi eq, %5, %787 : vector<1x128xi32>
      %789 = arith.extui %788 : vector<1x128xi1> to vector<1x128xi32>
      %790 = arith.sitofp %789 : vector<1x128xi32> to vector<1x128xf32>
      %c1_261 = arith.constant 1 : index
      %c0_262 = arith.constant 0 : index
      %c0_263 = arith.constant 0 : index
      %791 = vector.load %arg2[%c1_261, %c0_262, %c0_263] : memref<2x8x128xf32, #tpu.memory_space<vmem>>, vector<1x8x128xf32>
      %792 = vector.shape_cast %791 : vector<1x8x128xf32> to vector<8x128xf32>
      %cst_264 = arith.constant dense<0.000000e+00> : vector<32x128xf32>
      %793 = tpu.matmul %0, %792, %cst_264 {dimension_numbers = #tpu.dot_dimension_numbers<[1], [0], [0], [1], [0, 0, 1, 1], [], []>} : vector<32x8xf32>, vector<8x128xf32>, vector<32x128xf32> -> vector<32x128xf32>
      %794 = vector.broadcast %2 : vector<32x1xf32> to vector<32x128xf32>
      %795 = arith.addf %793, %794 : vector<32x128xf32>
      %cst_265 = arith.constant 0.000000e+00 : f32
      %796 = vector.broadcast %cst_265 : f32 to vector<32x128xf32>
      %797 = arith.maximumf %795, %796 : vector<32x128xf32>
      %cst_266 = arith.constant dense<0xFF800000> : vector<32xf32>
      %798 = vector.multi_reduction <maximumf>, %797, %cst_266 [1] : vector<32x128xf32> to vector<32xf32>
      %799 = vector.shape_cast %798 : vector<32xf32> to vector<32x1xf32>
      %800 = vector.broadcast %799 : vector<32x1xf32> to vector<32x128xf32>
      %801 = arith.mulf %800, %3 : vector<32x128xf32>
      %cst_267 = arith.constant dense<0.000000e+00> : vector<128xf32>
      %802 = vector.multi_reduction <add>, %801, %cst_267 [0] : vector<32x128xf32> to vector<128xf32>
      %803 = vector.shape_cast %802 : vector<128xf32> to vector<1x128xf32>
      %804 = arith.addf %803, %4 : vector<1x128xf32>
      %805 = arith.mulf %804, %790 : vector<1x128xf32>
      %cst_268 = arith.constant dense<0.000000e+00> : vector<1xf32>
      %806 = vector.multi_reduction <add>, %805, %cst_268 [1] : vector<1x128xf32> to vector<1xf32>
      %807 = vector.shape_cast %806 : vector<1xf32> to vector<1x1xf32>
      %cst_269 = arith.constant 1.000000e+10 : f32
      %808 = vector.broadcast %cst_269 : f32 to vector<1x128xf32>
      %809 = arith.mulf %808, %790 : vector<1x128xf32>
      %810 = arith.subf %804, %809 : vector<1x128xf32>
      %cst_270 = arith.constant dense<0xFF800000> : vector<1xf32>
      %811 = vector.multi_reduction <maximumf>, %810, %cst_270 [1] : vector<1x128xf32> to vector<1xf32>
      %812 = vector.shape_cast %811 : vector<1xf32> to vector<1x1xf32>
      %813 = vector.broadcast %812 : vector<1x1xf32> to vector<1x128xf32>
      %814 = arith.cmpf oge, %810, %813 : vector<1x128xf32>
      %c128_i32_271 = arith.constant 128 : i32
      %815 = vector.broadcast %c128_i32_271 : i32 to vector<1x128xi32>
      %816 = arith.select %814, %5, %815 : vector<1x128xi1>, vector<1x128xi32>
      %cst_272 = arith.constant dense<2147483647> : vector<1xi32>
      %817 = vector.multi_reduction <minsi>, %816, %cst_272 [1] : vector<1x128xi32> to vector<1xi32>
      %818 = vector.shape_cast %817 : vector<1xi32> to vector<1x1xi32>
      %819 = vector.broadcast %818 : vector<1x1xi32> to vector<1x128xi32>
      %820 = arith.cmpi eq, %5, %819 : vector<1x128xi32>
      %821 = arith.extui %820 : vector<1x128xi1> to vector<1x128xi32>
      %822 = arith.sitofp %821 : vector<1x128xi32> to vector<1x128xf32>
      %823 = arith.subf %807, %812 : vector<1x1xf32>
      %cst_273 = arith.constant 0.000000e+00 : f32
      %824 = vector.broadcast %cst_273 : f32 to vector<1x1xf32>
      %825 = arith.cmpf ogt, %823, %824 : vector<1x1xf32>
      %826 = arith.extui %825 : vector<1x1xi1> to vector<1x1xi32>
      %827 = arith.sitofp %826 : vector<1x1xi32> to vector<1x1xf32>
      %828 = arith.subf %790, %822 : vector<1x128xf32>
      %829 = vector.broadcast %827 : vector<1x1xf32> to vector<1x128xf32>
      %830 = arith.mulf %829, %828 : vector<1x128xf32>
      %831 = vector.broadcast %830 : vector<1x128xf32> to vector<32x128xf32>
      %832 = arith.mulf %3, %831 : vector<32x128xf32>
      %cst_274 = arith.constant dense<0.000000e+00> : vector<32xf32>
      %833 = vector.multi_reduction <add>, %832, %cst_274 [1] : vector<32x128xf32> to vector<32xf32>
      %834 = vector.shape_cast %833 : vector<32xf32> to vector<32x1xf32>
      %835 = vector.broadcast %799 : vector<32x1xf32> to vector<32x128xf32>
      %836 = arith.cmpf oge, %797, %835 : vector<32x128xf32>
      %cst_275 = arith.constant 0.000000e+00 : f32
      %837 = vector.broadcast %cst_275 : f32 to vector<32x128xf32>
      %838 = arith.cmpf ogt, %795, %837 : vector<32x128xf32>
      %839 = arith.andi %836, %838 : vector<32x128xi1>
      %840 = arith.extui %839 : vector<32x128xi1> to vector<32x128xi32>
      %841 = arith.sitofp %840 : vector<32x128xi32> to vector<32x128xf32>
      %842 = vector.broadcast %834 : vector<32x1xf32> to vector<32x128xf32>
      %843 = arith.mulf %842, %841 : vector<32x128xf32>
      %cst_276 = arith.constant dense<0.000000e+00> : vector<8x128xf32>
      %844 = tpu.matmul %1, %843, %cst_276 {dimension_numbers = #tpu.dot_dimension_numbers<[1], [0], [0], [1], [0, 0, 1, 1], [], []>} : vector<8x32xf32>, vector<32x128xf32>, vector<8x128xf32> -> vector<8x128xf32>
      %c1_277 = arith.constant 1 : index
      %c0_278 = arith.constant 0 : index
      %c0_279 = arith.constant 0 : index
      %845 = vector.load %arg12[%c1_277, %c0_278, %c0_279] : memref<2x8x128xf32, #tpu.memory_space<vmem>>, vector<1x8x128xf32>
      %846 = vector.shape_cast %845 : vector<1x8x128xf32> to vector<8x128xf32>
      %847 = vector.shape_cast %844 : vector<8x128xf32> to vector<1x8x128xf32>
      tpu.vector_store %arg12[%c1_277, %c0_278, %c0_279], %847 {strides = array<i32>} : memref<2x8x128xf32, #tpu.memory_space<vmem>>, vector<1x8x128xf32>,
    } else {
    }
    %c0_10 = arith.constant 0 : index
    %c0_11 = arith.constant 0 : index
    %9 = vector.load %arg15[%c0_10, %c0_11] : memref<1x1xf32, #tpu.memory_space<vmem>>, vector<1x1xf32>
    %cst = arith.constant 1.000000e+00 : f32
    %10 = vector.broadcast %cst : f32 to vector<1x1xf32>
    %c0_12 = arith.constant 0 : index
    %11 = memref.load %arg1[%c0_12] : memref<2xi32, #tpu.memory_space<smem>>
    %12 = vector.broadcast %11 : i32 to vector<1x128xi32>
    %13 = arith.cmpi eq, %5, %12 : vector<1x128xi32>
    %14 = arith.extui %13 : vector<1x128xi1> to vector<1x128xi32>
    %15 = arith.sitofp %14 : vector<1x128xi32> to vector<1x128xf32>
    %c0_13 = arith.constant 0 : index
    %c0_14 = arith.constant 0 : index
    %c0_15 = arith.constant 0 : index
    %16 = vector.load %arg11[%c0_13, %c0_14, %c0_15] : memref<2x8x128xf32, #tpu.memory_space<vmem>>, vector<1x8x128xf32>
    %17 = vector.shape_cast %16 : vector<1x8x128xf32> to vector<8x128xf32>
    %c0_16 = arith.constant 0 : index
    %c0_17 = arith.constant 0 : index
    %c0_18 = arith.constant 0 : index
    %18 = vector.load %arg2[%c0_16, %c0_17, %c0_18] : memref<2x8x128xf32, #tpu.memory_space<vmem>>, vector<1x8x128xf32>
    %19 = vector.shape_cast %18 : vector<1x8x128xf32> to vector<8x128xf32>
    %c0_19 = arith.constant 0 : index
    %c0_20 = arith.constant 0 : index
    %c0_21 = arith.constant 0 : index
    %20 = vector.load %arg3[%c0_19, %c0_20, %c0_21] : memref<2x8x128xf32, #tpu.memory_space<vmem>>, vector<1x8x128xf32>
    %21 = vector.shape_cast %20 : vector<1x8x128xf32> to vector<8x128xf32>
    %c0_22 = arith.constant 0 : index
    %c0_23 = arith.constant 0 : index
    %c0_24 = arith.constant 0 : index
    %22 = vector.load %arg12[%c0_22, %c0_23, %c0_24] : memref<2x8x128xf32, #tpu.memory_space<vmem>>, vector<1x8x128xf32>
    %23 = vector.shape_cast %22 : vector<1x8x128xf32> to vector<8x128xf32>
    %24 = vector.extract_strided_slice %21 {offsets = [0, 0], sizes = [1, 128], strides = [1, 1]} : vector<8x128xf32> to vector<1x128xf32>
    %25 = vector.extract_strided_slice %21 {offsets = [1, 0], sizes = [1, 128], strides = [1, 1]} : vector<8x128xf32> to vector<1x128xf32>
    %26 = vector.extract_strided_slice %21 {offsets = [2, 0], sizes = [1, 128], strides = [1, 1]} : vector<8x128xf32> to vector<1x128xf32>
    %27 = arith.mulf %24, %24 : vector<1x128xf32>
    %28 = arith.mulf %25, %25 : vector<1x128xf32>
    %29 = arith.addf %27, %28 : vector<1x128xf32>
    %cst_25 = arith.constant 9.99999996E-13 : f32
    %30 = vector.broadcast %cst_25 : f32 to vector<1x128xf32>
    %31 = arith.cmpf ogt, %29, %30 : vector<1x128xf32>
    %cst_26 = arith.constant 9.99999968E-21 : f32
    %32 = vector.broadcast %cst_26 : f32 to vector<1x128xf32>
    %33 = arith.maximumf %29, %32 : vector<1x128xf32>
    %34 = math.rsqrt %33 : vector<1x128xf32>
    %cst_27 = arith.constant 0.000000e+00 : f32
    %35 = vector.broadcast %cst_27 : f32 to vector<1x128xf32>
    %36 = arith.subf %35, %25 : vector<1x128xf32>
    %37 = arith.mulf %36, %34 : vector<1x128xf32>
    %cst_28 = arith.constant 1.000000e+00 : f32
    %38 = vector.broadcast %cst_28 : f32 to vector<1x128xf32>
    %39 = arith.select %31, %37, %38 : vector<1x128xi1>, vector<1x128xf32>
    %40 = arith.mulf %24, %34 : vector<1x128xf32>
    %cst_29 = arith.constant 0.000000e+00 : f32
    %41 = vector.broadcast %cst_29 : f32 to vector<1x128xf32>
    %42 = arith.select %31, %40, %41 : vector<1x128xi1>, vector<1x128xf32>
    %cst_30 = arith.constant 0.000000e+00 : f32
    %43 = vector.broadcast %cst_30 : f32 to vector<1x128xf32>
    %cst_31 = arith.constant 0.000000e+00 : f32
    %44 = vector.broadcast %cst_31 : f32 to vector<1x128xf32>
    %45 = arith.subf %44, %26 : vector<1x128xf32>
    %46 = arith.mulf %45, %42 : vector<1x128xf32>
    %47 = arith.mulf %26, %39 : vector<1x128xf32>
    %48 = arith.mulf %24, %42 : vector<1x128xf32>
    %49 = arith.mulf %25, %39 : vector<1x128xf32>
    %50 = arith.subf %48, %49 : vector<1x128xf32>
    %51 = arith.mulf %17, %21 : vector<8x128xf32>
    %cst_32 = arith.constant dense<0.000000e+00> : vector<128xf32>
    %52 = vector.multi_reduction <add>, %51, %cst_32 [0] : vector<8x128xf32> to vector<128xf32>
    %53 = vector.shape_cast %52 : vector<128xf32> to vector<1x128xf32>
    %54 = arith.mulf %53, %24 : vector<1x128xf32>
    %55 = arith.mulf %53, %25 : vector<1x128xf32>
    %56 = arith.mulf %53, %26 : vector<1x128xf32>
    %57 = vector.extract_strided_slice %17 {offsets = [0, 0], sizes = [1, 128], strides = [1, 1]} : vector<8x128xf32> to vector<1x128xf32>
    %58 = arith.subf %57, %54 : vector<1x128xf32>
    %59 = vector.extract_strided_slice %17 {offsets = [1, 0], sizes = [1, 128], strides = [1, 1]} : vector<8x128xf32> to vector<1x128xf32>
    %60 = arith.subf %59, %55 : vector<1x128xf32>
    %61 = vector.extract_strided_slice %17 {offsets = [2, 0], sizes = [1, 128], strides = [1, 1]} : vector<8x128xf32> to vector<1x128xf32>
    %62 = arith.subf %61, %56 : vector<1x128xf32>
    %63 = arith.mulf %39, %58 : vector<1x128xf32>
    %64 = arith.mulf %42, %60 : vector<1x128xf32>
    %65 = arith.addf %63, %64 : vector<1x128xf32>
    %66 = arith.mulf %43, %62 : vector<1x128xf32>
    %67 = arith.addf %65, %66 : vector<1x128xf32>
    %68 = arith.mulf %46, %58 : vector<1x128xf32>
    %69 = arith.mulf %47, %60 : vector<1x128xf32>
    %70 = arith.addf %68, %69 : vector<1x128xf32>
    %71 = arith.mulf %50, %62 : vector<1x128xf32>
    %72 = arith.addf %70, %71 : vector<1x128xf32>
    %73 = arith.mulf %24, %58 : vector<1x128xf32>
    %74 = arith.mulf %25, %60 : vector<1x128xf32>
    %75 = arith.addf %73, %74 : vector<1x128xf32>
    %76 = arith.mulf %26, %62 : vector<1x128xf32>
    %77 = arith.addf %75, %76 : vector<1x128xf32>
    %78 = vector.extract_strided_slice %23 {offsets = [0, 0], sizes = [1, 128], strides = [1, 1]} : vector<8x128xf32> to vector<1x128xf32>
    %79 = vector.extract_strided_slice %23 {offsets = [1, 0], sizes = [1, 128], strides = [1, 1]} : vector<8x128xf32> to vector<1x128xf32>
    %80 = vector.extract_strided_slice %23 {offsets = [2, 0], sizes = [1, 128], strides = [1, 1]} : vector<8x128xf32> to vector<1x128xf32>
    %81 = arith.mulf %39, %78 : vector<1x128xf32>
    %82 = arith.mulf %42, %79 : vector<1x128xf32>
    %83 = arith.addf %81, %82 : vector<1x128xf32>
    %84 = arith.mulf %43, %80 : vector<1x128xf32>
    %85 = arith.addf %83, %84 : vector<1x128xf32>
    %86 = arith.mulf %46, %78 : vector<1x128xf32>
    %87 = arith.mulf %47, %79 : vector<1x128xf32>
    %88 = arith.addf %86, %87 : vector<1x128xf32>
    %89 = arith.mulf %50, %80 : vector<1x128xf32>
    %90 = arith.addf %88, %89 : vector<1x128xf32>
    %91 = arith.mulf %85, %85 : vector<1x128xf32>
    %92 = arith.mulf %90, %90 : vector<1x128xf32>
    %93 = arith.addf %91, %92 : vector<1x128xf32>
    %94 = vector.shape_cast %93 : vector<1x128xf32> to vector<1x1x128xf32>
    %cst_33 = arith.constant dense<0.000000e+00> : vector<1xf32>
    %95 = vector.multi_reduction <add>, %94, %cst_33 [1, 2] : vector<1x1x128xf32> to vector<1xf32>
    %96 = vector.shape_cast %95 : vector<1xf32> to vector<1x1x1xf32>
    %97 = vector.extract %96[0, 0, 0] : f32 from vector<1x1x1xf32>
    %98 = vector.broadcast %97 : f32 to vector<1x1xf32>
    %cst_34 = arith.constant 1.000000e-18 : f32
    %99 = vector.broadcast %cst_34 : f32 to vector<1x1xf32>
    %100 = arith.maximumf %98, %99 : vector<1x1xf32>
    %101 = math.rsqrt %100 : vector<1x1xf32>
    %cst_35 = arith.constant 0.387979388 : f32
    %102 = vector.broadcast %cst_35 : f32 to vector<1x1xf32>
    %103 = arith.mulf %102, %101 : vector<1x1xf32>
    %104 = vector.broadcast %103 : vector<1x1xf32> to vector<1x128xf32>
    %105 = arith.mulf %104, %85 : vector<1x128xf32>
    %106 = arith.subf %67, %105 : vector<1x128xf32>
    %107 = vector.broadcast %103 : vector<1x1xf32> to vector<1x128xf32>
    %108 = arith.mulf %107, %90 : vector<1x128xf32>
    %109 = arith.subf %72, %108 : vector<1x128xf32>
    %110 = arith.mulf %39, %106 : vector<1x128xf32>
    %111 = arith.mulf %46, %109 : vector<1x128xf32>
    %112 = arith.addf %110, %111 : vector<1x128xf32>
    %113 = arith.mulf %24, %77 : vector<1x128xf32>
    %114 = arith.addf %112, %113 : vector<1x128xf32>
    %115 = arith.addf %114, %54 : vector<1x128xf32>
    %116 = arith.mulf %42, %106 : vector<1x128xf32>
    %117 = arith.mulf %47, %109 : vector<1x128xf32>
    %118 = arith.addf %116, %117 : vector<1x128xf32>
    %119 = arith.mulf %25, %77 : vector<1x128xf32>
    %120 = arith.addf %118, %119 : vector<1x128xf32>
    %121 = arith.addf %120, %55 : vector<1x128xf32>
    %122 = arith.mulf %43, %106 : vector<1x128xf32>
    %123 = arith.mulf %50, %109 : vector<1x128xf32>
    %124 = arith.addf %122, %123 : vector<1x128xf32>
    %125 = arith.mulf %26, %77 : vector<1x128xf32>
    %126 = arith.addf %124, %125 : vector<1x128xf32>
    %127 = arith.addf %126, %56 : vector<1x128xf32>
    %128 = vector.extract_strided_slice %19 {offsets = [0, 0], sizes = [1, 128], strides = [1, 1]} : vector<8x128xf32> to vector<1x128xf32>
    %129 = arith.subf %115, %128 : vector<1x128xf32>
    %130 = vector.extract_strided_slice %19 {offsets = [1, 0], sizes = [1, 128], strides = [1, 1]} : vector<8x128xf32> to vector<1x128xf32>
    %131 = arith.subf %121, %130 : vector<1x128xf32>
    %132 = vector.extract_strided_slice %19 {offsets = [2, 0], sizes = [1, 128], strides = [1, 1]} : vector<8x128xf32> to vector<1x128xf32>
    %133 = arith.subf %127, %132 : vector<1x128xf32>
    %134 = arith.mulf %129, %129 : vector<1x128xf32>
    %135 = arith.mulf %131, %131 : vector<1x128xf32>
    %136 = arith.addf %134, %135 : vector<1x128xf32>
    %137 = arith.mulf %133, %133 : vector<1x128xf32>
    %138 = arith.addf %136, %137 : vector<1x128xf32>
    %cst_36 = arith.constant 1.000000e-18 : f32
    %139 = vector.broadcast %cst_36 : f32 to vector<1x128xf32>
    %140 = arith.maximumf %138, %139 : vector<1x128xf32>
    %141 = math.rsqrt %140 : vector<1x128xf32>
    %cst_37 = arith.constant 1.600000e-01 : f32
    %142 = vector.broadcast %cst_37 : f32 to vector<1x128xf32>
    %143 = arith.mulf %142, %141 : vector<1x128xf32>
    %cst_38 = arith.constant 1.000000e+00 : f32
    %144 = vector.broadcast %cst_38 : f32 to vector<1x128xf32>
    %145 = arith.minimumf %143, %144 : vector<1x128xf32>
    %146 = vector.extract_strided_slice %19 {offsets = [0, 0], sizes = [1, 128], strides = [1, 1]} : vector<8x128xf32> to vector<1x128xf32>
    %147 = arith.mulf %129, %145 : vector<1x128xf32>
    %148 = arith.addf %146, %147 : vector<1x128xf32>
    %c0_39 = arith.constant 0 : index
    %c0_40 = arith.constant 0 : index
    %149 = vector.load %arg14[%c0_39, %c0_40] : memref<8x128xf32, #tpu.memory_space<vmem>>, vector<1x128xf32>
    tpu.vector_store %arg14[%c0_39, %c0_40], %148 {strides = array<i32>} : memref<8x128xf32, #tpu.memory_space<vmem>>, vector<1x128xf32>,
    %150 = vector.extract_strided_slice %19 {offsets = [1, 0], sizes = [1, 128], strides = [1, 1]} : vector<8x128xf32> to vector<1x128xf32>
    %151 = arith.mulf %131, %145 : vector<1x128xf32>
    %152 = arith.addf %150, %151 : vector<1x128xf32>
    %c1 = arith.constant 1 : index
    %c0_41 = arith.constant 0 : index
    %153 = vector.load %arg14[%c1, %c0_41] : memref<8x128xf32, #tpu.memory_space<vmem>>, vector<1x128xf32>
    tpu.vector_store %arg14[%c1, %c0_41], %152 {strides = array<i32>} : memref<8x128xf32, #tpu.memory_space<vmem>>, vector<1x128xf32>,
    %154 = vector.extract_strided_slice %19 {offsets = [2, 0], sizes = [1, 128], strides = [1, 1]} : vector<8x128xf32> to vector<1x128xf32>
    %155 = arith.mulf %133, %145 : vector<1x128xf32>
    %156 = arith.addf %154, %155 : vector<1x128xf32>
    %c2 = arith.constant 2 : index
    %c0_42 = arith.constant 0 : index
    %157 = vector.load %arg14[%c2, %c0_42] : memref<8x128xf32, #tpu.memory_space<vmem>>, vector<1x128xf32>
    tpu.vector_store %arg14[%c2, %c0_42], %156 {strides = array<i32>} : memref<8x128xf32, #tpu.memory_space<vmem>>, vector<1x128xf32>,
    %c0_43 = arith.constant 0 : index
    %c0_44 = arith.constant 0 : index
    %158 = vector.load %arg14[%c0_43, %c0_44] : memref<8x128xf32, #tpu.memory_space<vmem>>, vector<8x128xf32>
    %cst_45 = arith.constant dense<0.000000e+00> : vector<32x128xf32>
    %159 = tpu.matmul %0, %158, %cst_45 {dimension_numbers = #tpu.dot_dimension_numbers<[1], [0], [0], [1], [0, 0, 1, 1], [], []>} : vector<32x8xf32>, vector<8x128xf32>, vector<32x128xf32> -> vector<32x128xf32>
    %160 = vector.broadcast %2 : vector<32x1xf32> to vector<32x128xf32>
    %161 = arith.addf %159, %160 : vector<32x128xf32>
    %cst_46 = arith.constant 0.000000e+00 : f32
    %162 = vector.broadcast %cst_46 : f32 to vector<32x128xf32>
    %163 = arith.maximumf %161, %162 : vector<32x128xf32>
    %cst_47 = arith.constant dense<0xFF800000> : vector<32xf32>
    %164 = vector.multi_reduction <maximumf>, %163, %cst_47 [1] : vector<32x128xf32> to vector<32xf32>
    %165 = vector.shape_cast %164 : vector<32xf32> to vector<32x1xf32>
    %166 = vector.broadcast %165 : vector<32x1xf32> to vector<32x128xf32>
    %167 = arith.mulf %166, %3 : vector<32x128xf32>
    %cst_48 = arith.constant dense<0.000000e+00> : vector<128xf32>
    %168 = vector.multi_reduction <add>, %167, %cst_48 [0] : vector<32x128xf32> to vector<128xf32>
    %169 = vector.shape_cast %168 : vector<128xf32> to vector<1x128xf32>
    %170 = arith.addf %169, %4 : vector<1x128xf32>
    %171 = arith.mulf %170, %15 : vector<1x128xf32>
    %cst_49 = arith.constant dense<0.000000e+00> : vector<1xf32>
    %172 = vector.multi_reduction <add>, %171, %cst_49 [1] : vector<1x128xf32> to vector<1xf32>
    %173 = vector.shape_cast %172 : vector<1xf32> to vector<1x1xf32>
    %cst_50 = arith.constant 1.000000e+10 : f32
    %174 = vector.broadcast %cst_50 : f32 to vector<1x128xf32>
    %175 = arith.mulf %174, %15 : vector<1x128xf32>
    %176 = arith.subf %170, %175 : vector<1x128xf32>
    %cst_51 = arith.constant dense<0xFF800000> : vector<1xf32>
    %177 = vector.multi_reduction <maximumf>, %176, %cst_51 [1] : vector<1x128xf32> to vector<1xf32>
    %178 = vector.shape_cast %177 : vector<1xf32> to vector<1x1xf32>
    %179 = vector.broadcast %178 : vector<1x1xf32> to vector<1x128xf32>
    %180 = arith.cmpf oge, %176, %179 : vector<1x128xf32>
    %c128_i32 = arith.constant 128 : i32
    %181 = vector.broadcast %c128_i32 : i32 to vector<1x128xi32>
    %182 = arith.select %180, %5, %181 : vector<1x128xi1>, vector<1x128xi32>
    %cst_52 = arith.constant dense<2147483647> : vector<1xi32>
    %183 = vector.multi_reduction <minsi>, %182, %cst_52 [1] : vector<1x128xi32> to vector<1xi32>
    %184 = vector.shape_cast %183 : vector<1xi32> to vector<1x1xi32>
    %185 = vector.broadcast %184 : vector<1x1xi32> to vector<1x128xi32>
    %186 = arith.cmpi eq, %5, %185 : vector<1x128xi32>
    %187 = arith.extui %186 : vector<1x128xi1> to vector<1x128xi32>
    %188 = arith.sitofp %187 : vector<1x128xi32> to vector<1x128xf32>
    %189 = arith.subf %173, %178 : vector<1x1xf32>
    %cst_53 = arith.constant 0.000000e+00 : f32
    %190 = vector.broadcast %cst_53 : f32 to vector<1x1xf32>
    %191 = arith.cmpf ogt, %189, %190 : vector<1x1xf32>
    %192 = arith.extui %191 : vector<1x1xi1> to vector<1x1xi32>
    %193 = arith.sitofp %192 : vector<1x1xi32> to vector<1x1xf32>
    %194 = arith.subf %15, %188 : vector<1x128xf32>
    %195 = vector.broadcast %193 : vector<1x1xf32> to vector<1x128xf32>
    %196 = arith.mulf %195, %194 : vector<1x128xf32>
    %197 = arith.cmpf ogt, %178, %173 : vector<1x1xf32>
    %198 = arith.extui %197 : vector<1x1xi1> to vector<1x1xi32>
    %199 = arith.sitofp %198 : vector<1x1xi32> to vector<1x1xf32>
    %200 = vector.broadcast %196 : vector<1x128xf32> to vector<32x128xf32>
    %201 = arith.mulf %3, %200 : vector<32x128xf32>
    %cst_54 = arith.constant dense<0.000000e+00> : vector<32xf32>
    %202 = vector.multi_reduction <add>, %201, %cst_54 [1] : vector<32x128xf32> to vector<32xf32>
    %203 = vector.shape_cast %202 : vector<32xf32> to vector<32x1xf32>
    %204 = vector.broadcast %165 : vector<32x1xf32> to vector<32x128xf32>
    %205 = arith.cmpf oge, %163, %204 : vector<32x128xf32>
    %cst_55 = arith.constant 0.000000e+00 : f32
    %206 = vector.broadcast %cst_55 : f32 to vector<32x128xf32>
    %207 = arith.cmpf ogt, %161, %206 : vector<32x128xf32>
    %208 = arith.andi %205, %207 : vector<32x128xi1>
    %209 = arith.extui %208 : vector<32x128xi1> to vector<32x128xi32>
    %210 = arith.sitofp %209 : vector<32x128xi32> to vector<32x128xf32>
    %211 = vector.broadcast %203 : vector<32x1xf32> to vector<32x128xf32>
    %212 = arith.mulf %211, %210 : vector<32x128xf32>
    %cst_56 = arith.constant dense<0.000000e+00> : vector<8x128xf32>
    %213 = tpu.matmul %1, %212, %cst_56 {dimension_numbers = #tpu.dot_dimension_numbers<[1], [0], [0], [1], [0, 0, 1, 1], [], []>} : vector<8x32xf32>, vector<32x128xf32>, vector<8x128xf32> -> vector<8x128xf32>
    %cst_57 = arith.constant dense<0.000000e+00> : vector<32x128xf32>
    %214 = tpu.matmul %0, %17, %cst_57 {dimension_numbers = #tpu.dot_dimension_numbers<[1], [0], [0], [1], [0, 0, 1, 1], [], []>} : vector<32x8xf32>, vector<8x128xf32>, vector<32x128xf32> -> vector<32x128xf32>
    %215 = vector.broadcast %2 : vector<32x1xf32> to vector<32x128xf32>
    %216 = arith.addf %214, %215 : vector<32x128xf32>
    %cst_58 = arith.constant 0.000000e+00 : f32
    %217 = vector.broadcast %cst_58 : f32 to vector<32x128xf32>
    %218 = arith.maximumf %216, %217 : vector<32x128xf32>
    %cst_59 = arith.constant dense<0xFF800000> : vector<32xf32>
    %219 = vector.multi_reduction <maximumf>, %218, %cst_59 [1] : vector<32x128xf32> to vector<32xf32>
    %220 = vector.shape_cast %219 : vector<32xf32> to vector<32x1xf32>
    %221 = vector.broadcast %220 : vector<32x1xf32> to vector<32x128xf32>
    %222 = arith.mulf %221, %3 : vector<32x128xf32>
    %cst_60 = arith.constant dense<0.000000e+00> : vector<128xf32>
    %223 = vector.multi_reduction <add>, %222, %cst_60 [0] : vector<32x128xf32> to vector<128xf32>
    %224 = vector.shape_cast %223 : vector<128xf32> to vector<1x128xf32>
    %225 = arith.addf %224, %4 : vector<1x128xf32>
    %cst_61 = arith.constant dense<0xFF800000> : vector<1xf32>
    %226 = vector.multi_reduction <maximumf>, %225, %cst_61 [1] : vector<1x128xf32> to vector<1xf32>
    %227 = vector.shape_cast %226 : vector<1xf32> to vector<1x1xf32>
    %228 = vector.broadcast %227 : vector<1x1xf32> to vector<1x128xf32>
    %229 = arith.subf %225, %228 : vector<1x128xf32>
    %230 = math.exp %229 : vector<1x128xf32>
    %cst_62 = arith.constant dense<0.000000e+00> : vector<1xf32>
    %231 = vector.multi_reduction <add>, %230, %cst_62 [1] : vector<1x128xf32> to vector<1xf32>
    %232 = vector.shape_cast %231 : vector<1xf32> to vector<1x1xf32>
    %233 = tpu.reciprocal %232 {approx = true} : vector<1x1xf32> -> vector<1x1xf32>
    %234 = vector.broadcast %233 : vector<1x1xf32> to vector<1x128xf32>
    %235 = arith.mulf %230, %234 : vector<1x128xf32>
    %236 = arith.subf %15, %235 : vector<1x128xf32>
    %237 = vector.broadcast %236 : vector<1x128xf32> to vector<32x128xf32>
    %238 = arith.mulf %3, %237 : vector<32x128xf32>
    %cst_63 = arith.constant dense<0.000000e+00> : vector<32xf32>
    %239 = vector.multi_reduction <add>, %238, %cst_63 [1] : vector<32x128xf32> to vector<32xf32>
    %240 = vector.shape_cast %239 : vector<32xf32> to vector<32x1xf32>
    %241 = vector.broadcast %220 : vector<32x1xf32> to vector<32x128xf32>
    %242 = arith.cmpf oge, %218, %241 : vector<32x128xf32>
    %cst_64 = arith.constant 0.000000e+00 : f32
    %243 = vector.broadcast %cst_64 : f32 to vector<32x128xf32>
    %244 = arith.cmpf ogt, %216, %243 : vector<32x128xf32>
    %245 = arith.andi %242, %244 : vector<32x128xi1>
    %246 = arith.extui %245 : vector<32x128xi1> to vector<32x128xi32>
    %247 = arith.sitofp %246 : vector<32x128xi32> to vector<32x128xf32>
    %248 = vector.broadcast %240 : vector<32x1xf32> to vector<32x128xf32>
    %249 = arith.mulf %248, %247 : vector<32x128xf32>
    %cst_65 = arith.constant dense<0.000000e+00> : vector<8x128xf32>
    %250 = tpu.matmul %1, %249, %cst_65 {dimension_numbers = #tpu.dot_dimension_numbers<[1], [0], [0], [1], [0, 0, 1, 1], [], []>} : vector<8x32xf32>, vector<32x128xf32>, vector<8x128xf32> -> vector<8x128xf32>
    %251 = arith.mulf %225, %15 : vector<1x128xf32>
    %cst_66 = arith.constant dense<0.000000e+00> : vector<1xf32>
    %252 = vector.multi_reduction <add>, %251, %cst_66 [1] : vector<1x128xf32> to vector<1xf32>
    %253 = vector.shape_cast %252 : vector<1xf32> to vector<1x1xf32>
    %cst_67 = arith.constant 1.000000e+10 : f32
    %254 = vector.broadcast %cst_67 : f32 to vector<1x128xf32>
    %255 = arith.mulf %254, %15 : vector<1x128xf32>
    %256 = arith.subf %225, %255 : vector<1x128xf32>
    %cst_68 = arith.constant dense<0xFF800000> : vector<1xf32>
    %257 = vector.multi_reduction <maximumf>, %256, %cst_68 [1] : vector<1x128xf32> to vector<1xf32>
    %258 = vector.shape_cast %257 : vector<1xf32> to vector<1x1xf32>
    %259 = arith.cmpf ogt, %258, %253 : vector<1x1xf32>
    %260 = arith.extui %259 : vector<1x1xi1> to vector<1x1xi32>
    %261 = arith.sitofp %260 : vector<1x1xi32> to vector<1x1xf32>
    %262 = arith.mulf %250, %250 : vector<8x128xf32>
    %263 = vector.shape_cast %262 : vector<8x128xf32> to vector<1x8x128xf32>
    %cst_69 = arith.constant dense<0.000000e+00> : vector<1xf32>
    %264 = vector.multi_reduction <add>, %263, %cst_69 [1, 2] : vector<1x8x128xf32> to vector<1xf32>
    %265 = vector.shape_cast %264 : vector<1xf32> to vector<1x1x1xf32>
    %266 = vector.extract %265[0, 0, 0] : f32 from vector<1x1x1xf32>
    %267 = vector.broadcast %266 : f32 to vector<1x1xf32>
    %cst_70 = arith.constant 1.000000e-24 : f32
    %268 = vector.broadcast %cst_70 : f32 to vector<1x1xf32>
    %269 = arith.maximumf %267, %268 : vector<1x1xf32>
    %270 = math.rsqrt %269 : vector<1x1xf32>
    %271 = vector.broadcast %270 : vector<1x1xf32> to vector<8x128xf32>
    %272 = arith.mulf %250, %271 : vector<8x128xf32>
    %273 = arith.subf %17, %19 : vector<8x128xf32>
    %274 = arith.mulf %273, %272 : vector<8x128xf32>
    %275 = vector.shape_cast %274 : vector<8x128xf32> to vector<1x8x128xf32>
    %cst_71 = arith.constant dense<0.000000e+00> : vector<1xf32>
    %276 = vector.multi_reduction <add>, %275, %cst_71 [1, 2] : vector<1x8x128xf32> to vector<1xf32>
    %277 = vector.shape_cast %276 : vector<1xf32> to vector<1x1x1xf32>
    %278 = vector.extract %277[0, 0, 0] : f32 from vector<1x1x1xf32>
    %279 = vector.broadcast %278 : f32 to vector<1x1xf32>
    %280 = vector.broadcast %279 : vector<1x1xf32> to vector<8x128xf32>
    %281 = arith.mulf %280, %272 : vector<8x128xf32>
    %282 = arith.subf %273, %281 : vector<8x128xf32>
    %cst_72 = arith.constant 7.000000e-03 : f32
    %283 = vector.broadcast %cst_72 : f32 to vector<8x128xf32>
    %284 = arith.mulf %283, %282 : vector<8x128xf32>
    %285 = arith.subf %17, %284 : vector<8x128xf32>
    %cst_73 = arith.constant 0.387979388 : f32
    %286 = vector.broadcast %cst_73 : f32 to vector<8x128xf32>
    %287 = arith.mulf %286, %272 : vector<8x128xf32>
    %288 = arith.subf %17, %287 : vector<8x128xf32>
    %289 = vector.broadcast %261 : vector<1x1xf32> to vector<8x128xf32>
    %290 = arith.mulf %289, %285 : vector<8x128xf32>
    %cst_74 = arith.constant 1.000000e+00 : f32
    %291 = vector.broadcast %cst_74 : f32 to vector<1x1xf32>
    %292 = arith.subf %291, %261 : vector<1x1xf32>
    %293 = vector.broadcast %292 : vector<1x1xf32> to vector<8x128xf32>
    %294 = arith.mulf %293, %288 : vector<8x128xf32>
    %295 = arith.addf %290, %294 : vector<8x128xf32>
    %296 = arith.subf %295, %19 : vector<8x128xf32>
    %297 = arith.mulf %296, %296 : vector<8x128xf32>
    %cst_75 = arith.constant dense<0.000000e+00> : vector<128xf32>
    %298 = vector.multi_reduction <add>, %297, %cst_75 [0] : vector<8x128xf32> to vector<128xf32>
    %299 = vector.shape_cast %298 : vector<128xf32> to vector<1x128xf32>
    %cst_76 = arith.constant 1.000000e-18 : f32
    %300 = vector.broadcast %cst_76 : f32 to vector<1x128xf32>
    %301 = arith.maximumf %299, %300 : vector<1x128xf32>
    %302 = math.rsqrt %301 : vector<1x128xf32>
    %cst_77 = arith.constant 1.600000e-01 : f32
    %303 = vector.broadcast %cst_77 : f32 to vector<1x128xf32>
    %304 = arith.mulf %303, %302 : vector<1x128xf32>
    %cst_78 = arith.constant 1.000000e+00 : f32
    %305 = vector.broadcast %cst_78 : f32 to vector<1x128xf32>
    %306 = arith.minimumf %304, %305 : vector<1x128xf32>
    %307 = vector.broadcast %306 : vector<1x128xf32> to vector<8x128xf32>
    %308 = arith.mulf %296, %307 : vector<8x128xf32>
    %309 = arith.addf %19, %308 : vector<8x128xf32>
    %310 = arith.mulf %273, %273 : vector<8x128xf32>
    %311 = vector.shape_cast %310 : vector<8x128xf32> to vector<1x8x128xf32>
    %cst_79 = arith.constant dense<0.000000e+00> : vector<1xf32>
    %312 = vector.multi_reduction <add>, %311, %cst_79 [1, 2] : vector<1x8x128xf32> to vector<1xf32>
    %313 = vector.shape_cast %312 : vector<1xf32> to vector<1x1x1xf32>
    %314 = vector.extract %313[0, 0, 0] : f32 from vector<1x1x1xf32>
    %315 = vector.broadcast %314 : f32 to vector<1x1xf32>
    %316 = arith.mulf %9, %261 : vector<1x1xf32>
    %c0_80 = arith.constant 0 : index
    %c0_81 = arith.constant 0 : index
    %c0_82 = arith.constant 0 : index
    %317 = vector.load %arg16[%c0_80, %c0_81, %c0_82] : memref<2x1x1xf32, #tpu.memory_space<vmem>>, vector<1x1x1xf32>
    %318 = vector.shape_cast %317 : vector<1x1x1xf32> to vector<1x1xf32>
    %319 = arith.cmpf olt, %315, %318 : vector<1x1xf32>
    %320 = arith.extui %319 : vector<1x1xi1> to vector<1x1xi32>
    %321 = arith.sitofp %320 : vector<1x1xi32> to vector<1x1xf32>
    %322 = arith.mulf %316, %321 : vector<1x1xf32>
    %cst_83 = arith.constant 5.000000e-01 : f32
    %323 = vector.broadcast %cst_83 : f32 to vector<1x1xf32>
    %324 = arith.cmpf ogt, %322, %323 : vector<1x1xf32>
    %c0_84 = arith.constant 0 : index
    %c0_85 = arith.constant 0 : index
    %c0_86 = arith.constant 0 : index
    %325 = vector.load %arg13[%c0_84, %c0_85, %c0_86] : memref<2x8x128xf32, #tpu.memory_space<vmem>>, vector<1x8x128xf32>
    %326 = vector.shape_cast %325 : vector<1x8x128xf32> to vector<8x128xf32>
    %327 = vector.shape_cast %324 : vector<1x1xi1> to vector<1x1xi1>
    %328 = vector.broadcast %327 : vector<1x1xi1> to vector<8x128xi1>
    %329 = arith.select %328, %17, %326 : vector<8x128xi1>, vector<8x128xf32>
    %c0_87 = arith.constant 0 : index
    %c0_88 = arith.constant 0 : index
    %c0_89 = arith.constant 0 : index
    %330 = vector.load %arg13[%c0_87, %c0_88, %c0_89] : memref<2x8x128xf32, #tpu.memory_space<vmem>>, vector<1x8x128xf32>
    %331 = vector.shape_cast %330 : vector<1x8x128xf32> to vector<8x128xf32>
    %332 = vector.shape_cast %329 : vector<8x128xf32> to vector<1x8x128xf32>
    tpu.vector_store %arg13[%c0_87, %c0_88, %c0_89], %332 {strides = array<i32>} : memref<2x8x128xf32, #tpu.memory_space<vmem>>, vector<1x8x128xf32>,
    %cst_90 = arith.constant 5.000000e-01 : f32
    %333 = vector.broadcast %cst_90 : f32 to vector<1x1xf32>
    %334 = arith.cmpf ogt, %322, %333 : vector<1x1xf32>
    %c0_91 = arith.constant 0 : index
    %c0_92 = arith.constant 0 : index
    %c0_93 = arith.constant 0 : index
    %335 = vector.load %arg16[%c0_91, %c0_92, %c0_93] : memref<2x1x1xf32, #tpu.memory_space<vmem>>, vector<1x1x1xf32>
    %336 = vector.shape_cast %335 : vector<1x1x1xf32> to vector<1x1xf32>
    %337 = arith.select %334, %315, %336 : vector<1x1xi1>, vector<1x1xf32>
    %c0_94 = arith.constant 0 : index
    %c0_95 = arith.constant 0 : index
    %c0_96 = arith.constant 0 : index
    %338 = vector.load %arg16[%c0_94, %c0_95, %c0_96] : memref<2x1x1xf32, #tpu.memory_space<vmem>>, vector<1x1x1xf32>
    %339 = vector.shape_cast %338 : vector<1x1x1xf32> to vector<1x1xf32>
    %340 = vector.shape_cast %337 : vector<1x1xf32> to vector<1x1x1xf32>
    tpu.vector_store %arg16[%c0_94, %c0_95, %c0_96], %340 {strides = array<i32>} : memref<2x1x1xf32, #tpu.memory_space<vmem>>, vector<1x1x1xf32>,
    %c0_97 = arith.constant 0 : index
    %c0_98 = arith.constant 0 : index
    %c0_99 = arith.constant 0 : index
    %341 = vector.load %arg17[%c0_97, %c0_98, %c0_99] : memref<2x1x1xf32, #tpu.memory_space<vmem>>, vector<1x1x1xf32>
    %342 = vector.shape_cast %341 : vector<1x1x1xf32> to vector<1x1xf32>
    %343 = arith.maximumf %342, %322 : vector<1x1xf32>
    %c0_100 = arith.constant 0 : index
    %c0_101 = arith.constant 0 : index
    %c0_102 = arith.constant 0 : index
    %344 = vector.load %arg17[%c0_100, %c0_101, %c0_102] : memref<2x1x1xf32, #tpu.memory_space<vmem>>, vector<1x1x1xf32>
    %345 = vector.shape_cast %344 : vector<1x1x1xf32> to vector<1x1xf32>
    %346 = vector.shape_cast %343 : vector<1x1xf32> to vector<1x1x1xf32>
    tpu.vector_store %arg17[%c0_100, %c0_101, %c0_102], %346 {strides = array<i32>} : memref<2x1x1xf32, #tpu.memory_space<vmem>>, vector<1x1x1xf32>,
    %cst_103 = arith.constant 5.000000e-01 : f32
    %347 = vector.broadcast %cst_103 : f32 to vector<1x1xf32>
    %348 = arith.cmpf ogt, %9, %347 : vector<1x1xf32>
    %349 = vector.shape_cast %348 : vector<1x1xi1> to vector<1x1xi1>
    %350 = vector.broadcast %349 : vector<1x1xi1> to vector<8x128xi1>
    %351 = arith.select %350, %309, %158 : vector<8x128xi1>, vector<8x128xf32>
    %c0_104 = arith.constant 0 : index
    %c0_105 = arith.constant 0 : index
    %c0_106 = arith.constant 0 : index
    %352 = vector.load %arg11[%c0_104, %c0_105, %c0_106] : memref<2x8x128xf32, #tpu.memory_space<vmem>>, vector<1x8x128xf32>
    %353 = vector.shape_cast %352 : vector<1x8x128xf32> to vector<8x128xf32>
    %354 = vector.shape_cast %351 : vector<8x128xf32> to vector<1x8x128xf32>
    tpu.vector_store %arg11[%c0_104, %c0_105, %c0_106], %354 {strides = array<i32>} : memref<2x8x128xf32, #tpu.memory_space<vmem>>, vector<1x8x128xf32>,
    %c0_107 = arith.constant 0 : index
    %c0_108 = arith.constant 0 : index
    %c0_109 = arith.constant 0 : index
    %355 = vector.load %arg12[%c0_107, %c0_108, %c0_109] : memref<2x8x128xf32, #tpu.memory_space<vmem>>, vector<1x8x128xf32>
    %356 = vector.shape_cast %355 : vector<1x8x128xf32> to vector<8x128xf32>
    %357 = vector.shape_cast %213 : vector<8x128xf32> to vector<1x8x128xf32>
    tpu.vector_store %arg12[%c0_107, %c0_108, %c0_109], %357 {strides = array<i32>} : memref<2x8x128xf32, #tpu.memory_space<vmem>>, vector<1x8x128xf32>,
    %358 = arith.mulf %10, %199 : vector<1x1xf32>
    %c1_110 = arith.constant 1 : index
    %359 = memref.load %arg1[%c1_110] : memref<2xi32, #tpu.memory_space<smem>>
    %360 = vector.broadcast %359 : i32 to vector<1x128xi32>
    %361 = arith.cmpi eq, %5, %360 : vector<1x128xi32>
    %362 = arith.extui %361 : vector<1x128xi1> to vector<1x128xi32>
    %363 = arith.sitofp %362 : vector<1x128xi32> to vector<1x128xf32>
    %c1_111 = arith.constant 1 : index
    %c0_112 = arith.constant 0 : index
    %c0_113 = arith.constant 0 : index
    %364 = vector.load %arg11[%c1_111, %c0_112, %c0_113] : memref<2x8x128xf32, #tpu.memory_space<vmem>>, vector<1x8x128xf32>
    %365 = vector.shape_cast %364 : vector<1x8x128xf32> to vector<8x128xf32>
    %c1_114 = arith.constant 1 : index
    %c0_115 = arith.constant 0 : index
    %c0_116 = arith.constant 0 : index
    %366 = vector.load %arg2[%c1_114, %c0_115, %c0_116] : memref<2x8x128xf32, #tpu.memory_space<vmem>>, vector<1x8x128xf32>
    %367 = vector.shape_cast %366 : vector<1x8x128xf32> to vector<8x128xf32>
    %c1_117 = arith.constant 1 : index
    %c0_118 = arith.constant 0 : index
    %c0_119 = arith.constant 0 : index
    %368 = vector.load %arg3[%c1_117, %c0_118, %c0_119] : memref<2x8x128xf32, #tpu.memory_space<vmem>>, vector<1x8x128xf32>
    %369 = vector.shape_cast %368 : vector<1x8x128xf32> to vector<8x128xf32>
    %c1_120 = arith.constant 1 : index
    %c0_121 = arith.constant 0 : index
    %c0_122 = arith.constant 0 : index
    %370 = vector.load %arg12[%c1_120, %c0_121, %c0_122] : memref<2x8x128xf32, #tpu.memory_space<vmem>>, vector<1x8x128xf32>
    %371 = vector.shape_cast %370 : vector<1x8x128xf32> to vector<8x128xf32>
    %372 = vector.extract_strided_slice %369 {offsets = [0, 0], sizes = [1, 128], strides = [1, 1]} : vector<8x128xf32> to vector<1x128xf32>
    %373 = vector.extract_strided_slice %369 {offsets = [1, 0], sizes = [1, 128], strides = [1, 1]} : vector<8x128xf32> to vector<1x128xf32>
    %374 = vector.extract_strided_slice %369 {offsets = [2, 0], sizes = [1, 128], strides = [1, 1]} : vector<8x128xf32> to vector<1x128xf32>
    %375 = arith.mulf %372, %372 : vector<1x128xf32>
    %376 = arith.mulf %373, %373 : vector<1x128xf32>
    %377 = arith.addf %375, %376 : vector<1x128xf32>
    %cst_123 = arith.constant 9.99999996E-13 : f32
    %378 = vector.broadcast %cst_123 : f32 to vector<1x128xf32>
    %379 = arith.cmpf ogt, %377, %378 : vector<1x128xf32>
    %cst_124 = arith.constant 9.99999968E-21 : f32
    %380 = vector.broadcast %cst_124 : f32 to vector<1x128xf32>
    %381 = arith.maximumf %377, %380 : vector<1x128xf32>
    %382 = math.rsqrt %381 : vector<1x128xf32>
    %cst_125 = arith.constant 0.000000e+00 : f32
    %383 = vector.broadcast %cst_125 : f32 to vector<1x128xf32>
    %384 = arith.subf %383, %373 : vector<1x128xf32>
    %385 = arith.mulf %384, %382 : vector<1x128xf32>
    %cst_126 = arith.constant 1.000000e+00 : f32
    %386 = vector.broadcast %cst_126 : f32 to vector<1x128xf32>
    %387 = arith.select %379, %385, %386 : vector<1x128xi1>, vector<1x128xf32>
    %388 = arith.mulf %372, %382 : vector<1x128xf32>
    %cst_127 = arith.constant 0.000000e+00 : f32
    %389 = vector.broadcast %cst_127 : f32 to vector<1x128xf32>
    %390 = arith.select %379, %388, %389 : vector<1x128xi1>, vector<1x128xf32>
    %cst_128 = arith.constant 0.000000e+00 : f32
    %391 = vector.broadcast %cst_128 : f32 to vector<1x128xf32>
    %cst_129 = arith.constant 0.000000e+00 : f32
    %392 = vector.broadcast %cst_129 : f32 to vector<1x128xf32>
    %393 = arith.subf %392, %374 : vector<1x128xf32>
    %394 = arith.mulf %393, %390 : vector<1x128xf32>
    %395 = arith.mulf %374, %387 : vector<1x128xf32>
    %396 = arith.mulf %372, %390 : vector<1x128xf32>
    %397 = arith.mulf %373, %387 : vector<1x128xf32>
    %398 = arith.subf %396, %397 : vector<1x128xf32>
    %399 = arith.mulf %365, %369 : vector<8x128xf32>
    %cst_130 = arith.constant dense<0.000000e+00> : vector<128xf32>
    %400 = vector.multi_reduction <add>, %399, %cst_130 [0] : vector<8x128xf32> to vector<128xf32>
    %401 = vector.shape_cast %400 : vector<128xf32> to vector<1x128xf32>
    %402 = arith.mulf %401, %372 : vector<1x128xf32>
    %403 = arith.mulf %401, %373 : vector<1x128xf32>
    %404 = arith.mulf %401, %374 : vector<1x128xf32>
    %405 = vector.extract_strided_slice %365 {offsets = [0, 0], sizes = [1, 128], strides = [1, 1]} : vector<8x128xf32> to vector<1x128xf32>
    %406 = arith.subf %405, %402 : vector<1x128xf32>
    %407 = vector.extract_strided_slice %365 {offsets = [1, 0], sizes = [1, 128], strides = [1, 1]} : vector<8x128xf32> to vector<1x128xf32>
    %408 = arith.subf %407, %403 : vector<1x128xf32>
    %409 = vector.extract_strided_slice %365 {offsets = [2, 0], sizes = [1, 128], strides = [1, 1]} : vector<8x128xf32> to vector<1x128xf32>
    %410 = arith.subf %409, %404 : vector<1x128xf32>
    %411 = arith.mulf %387, %406 : vector<1x128xf32>
    %412 = arith.mulf %390, %408 : vector<1x128xf32>
    %413 = arith.addf %411, %412 : vector<1x128xf32>
    %414 = arith.mulf %391, %410 : vector<1x128xf32>
    %415 = arith.addf %413, %414 : vector<1x128xf32>
    %416 = arith.mulf %394, %406 : vector<1x128xf32>
    %417 = arith.mulf %395, %408 : vector<1x128xf32>
    %418 = arith.addf %416, %417 : vector<1x128xf32>
    %419 = arith.mulf %398, %410 : vector<1x128xf32>
    %420 = arith.addf %418, %419 : vector<1x128xf32>
    %421 = arith.mulf %372, %406 : vector<1x128xf32>
    %422 = arith.mulf %373, %408 : vector<1x128xf32>
    %423 = arith.addf %421, %422 : vector<1x128xf32>
    %424 = arith.mulf %374, %410 : vector<1x128xf32>
    %425 = arith.addf %423, %424 : vector<1x128xf32>
    %426 = vector.extract_strided_slice %371 {offsets = [0, 0], sizes = [1, 128], strides = [1, 1]} : vector<8x128xf32> to vector<1x128xf32>
    %427 = vector.extract_strided_slice %371 {offsets = [1, 0], sizes = [1, 128], strides = [1, 1]} : vector<8x128xf32> to vector<1x128xf32>
    %428 = vector.extract_strided_slice %371 {offsets = [2, 0], sizes = [1, 128], strides = [1, 1]} : vector<8x128xf32> to vector<1x128xf32>
    %429 = arith.mulf %387, %426 : vector<1x128xf32>
    %430 = arith.mulf %390, %427 : vector<1x128xf32>
    %431 = arith.addf %429, %430 : vector<1x128xf32>
    %432 = arith.mulf %391, %428 : vector<1x128xf32>
    %433 = arith.addf %431, %432 : vector<1x128xf32>
    %434 = arith.mulf %394, %426 : vector<1x128xf32>
    %435 = arith.mulf %395, %427 : vector<1x128xf32>
    %436 = arith.addf %434, %435 : vector<1x128xf32>
    %437 = arith.mulf %398, %428 : vector<1x128xf32>
    %438 = arith.addf %436, %437 : vector<1x128xf32>
    %439 = arith.mulf %433, %433 : vector<1x128xf32>
    %440 = arith.mulf %438, %438 : vector<1x128xf32>
    %441 = arith.addf %439, %440 : vector<1x128xf32>
    %442 = vector.shape_cast %441 : vector<1x128xf32> to vector<1x1x128xf32>
    %cst_131 = arith.constant dense<0.000000e+00> : vector<1xf32>
    %443 = vector.multi_reduction <add>, %442, %cst_131 [1, 2] : vector<1x1x128xf32> to vector<1xf32>
    %444 = vector.shape_cast %443 : vector<1xf32> to vector<1x1x1xf32>
    %445 = vector.extract %444[0, 0, 0] : f32 from vector<1x1x1xf32>
    %446 = vector.broadcast %445 : f32 to vector<1x1xf32>
    %cst_132 = arith.constant 1.000000e-18 : f32
    %447 = vector.broadcast %cst_132 : f32 to vector<1x1xf32>
    %448 = arith.maximumf %446, %447 : vector<1x1xf32>
    %449 = math.rsqrt %448 : vector<1x1xf32>
    %cst_133 = arith.constant 0.387979388 : f32
    %450 = vector.broadcast %cst_133 : f32 to vector<1x1xf32>
    %451 = arith.mulf %450, %449 : vector<1x1xf32>
    %452 = vector.broadcast %451 : vector<1x1xf32> to vector<1x128xf32>
    %453 = arith.mulf %452, %433 : vector<1x128xf32>
    %454 = arith.subf %415, %453 : vector<1x128xf32>
    %455 = vector.broadcast %451 : vector<1x1xf32> to vector<1x128xf32>
    %456 = arith.mulf %455, %438 : vector<1x128xf32>
    %457 = arith.subf %420, %456 : vector<1x128xf32>
    %458 = arith.mulf %387, %454 : vector<1x128xf32>
    %459 = arith.mulf %394, %457 : vector<1x128xf32>
    %460 = arith.addf %458, %459 : vector<1x128xf32>
    %461 = arith.mulf %372, %425 : vector<1x128xf32>
    %462 = arith.addf %460, %461 : vector<1x128xf32>
    %463 = arith.addf %462, %402 : vector<1x128xf32>
    %464 = arith.mulf %390, %454 : vector<1x128xf32>
    %465 = arith.mulf %395, %457 : vector<1x128xf32>
    %466 = arith.addf %464, %465 : vector<1x128xf32>
    %467 = arith.mulf %373, %425 : vector<1x128xf32>
    %468 = arith.addf %466, %467 : vector<1x128xf32>
    %469 = arith.addf %468, %403 : vector<1x128xf32>
    %470 = arith.mulf %391, %454 : vector<1x128xf32>
    %471 = arith.mulf %398, %457 : vector<1x128xf32>
    %472 = arith.addf %470, %471 : vector<1x128xf32>
    %473 = arith.mulf %374, %425 : vector<1x128xf32>
    %474 = arith.addf %472, %473 : vector<1x128xf32>
    %475 = arith.addf %474, %404 : vector<1x128xf32>
    %476 = vector.extract_strided_slice %367 {offsets = [0, 0], sizes = [1, 128], strides = [1, 1]} : vector<8x128xf32> to vector<1x128xf32>
    %477 = arith.subf %463, %476 : vector<1x128xf32>
    %478 = vector.extract_strided_slice %367 {offsets = [1, 0], sizes = [1, 128], strides = [1, 1]} : vector<8x128xf32> to vector<1x128xf32>
    %479 = arith.subf %469, %478 : vector<1x128xf32>
    %480 = vector.extract_strided_slice %367 {offsets = [2, 0], sizes = [1, 128], strides = [1, 1]} : vector<8x128xf32> to vector<1x128xf32>
    %481 = arith.subf %475, %480 : vector<1x128xf32>
    %482 = arith.mulf %477, %477 : vector<1x128xf32>
    %483 = arith.mulf %479, %479 : vector<1x128xf32>
    %484 = arith.addf %482, %483 : vector<1x128xf32>
    %485 = arith.mulf %481, %481 : vector<1x128xf32>
    %486 = arith.addf %484, %485 : vector<1x128xf32>
    %cst_134 = arith.constant 1.000000e-18 : f32
    %487 = vector.broadcast %cst_134 : f32 to vector<1x128xf32>
    %488 = arith.maximumf %486, %487 : vector<1x128xf32>
    %489 = math.rsqrt %488 : vector<1x128xf32>
    %cst_135 = arith.constant 1.600000e-01 : f32
    %490 = vector.broadcast %cst_135 : f32 to vector<1x128xf32>
    %491 = arith.mulf %490, %489 : vector<1x128xf32>
    %cst_136 = arith.constant 1.000000e+00 : f32
    %492 = vector.broadcast %cst_136 : f32 to vector<1x128xf32>
    %493 = arith.minimumf %491, %492 : vector<1x128xf32>
    %494 = vector.extract_strided_slice %367 {offsets = [0, 0], sizes = [1, 128], strides = [1, 1]} : vector<8x128xf32> to vector<1x128xf32>
    %495 = arith.mulf %477, %493 : vector<1x128xf32>
    %496 = arith.addf %494, %495 : vector<1x128xf32>
    %c0_137 = arith.constant 0 : index
    %c0_138 = arith.constant 0 : index
    %497 = vector.load %arg14[%c0_137, %c0_138] : memref<8x128xf32, #tpu.memory_space<vmem>>, vector<1x128xf32>
    tpu.vector_store %arg14[%c0_137, %c0_138], %496 {strides = array<i32>} : memref<8x128xf32, #tpu.memory_space<vmem>>, vector<1x128xf32>,
    %498 = vector.extract_strided_slice %367 {offsets = [1, 0], sizes = [1, 128], strides = [1, 1]} : vector<8x128xf32> to vector<1x128xf32>
    %499 = arith.mulf %479, %493 : vector<1x128xf32>
    %500 = arith.addf %498, %499 : vector<1x128xf32>
    %c1_139 = arith.constant 1 : index
    %c0_140 = arith.constant 0 : index
    %501 = vector.load %arg14[%c1_139, %c0_140] : memref<8x128xf32, #tpu.memory_space<vmem>>, vector<1x128xf32>
    tpu.vector_store %arg14[%c1_139, %c0_140], %500 {strides = array<i32>} : memref<8x128xf32, #tpu.memory_space<vmem>>, vector<1x128xf32>,
    %502 = vector.extract_strided_slice %367 {offsets = [2, 0], sizes = [1, 128], strides = [1, 1]} : vector<8x128xf32> to vector<1x128xf32>
    %503 = arith.mulf %481, %493 : vector<1x128xf32>
    %504 = arith.addf %502, %503 : vector<1x128xf32>
    %c2_141 = arith.constant 2 : index
    %c0_142 = arith.constant 0 : index
    %505 = vector.load %arg14[%c2_141, %c0_142] : memref<8x128xf32, #tpu.memory_space<vmem>>, vector<1x128xf32>
    tpu.vector_store %arg14[%c2_141, %c0_142], %504 {strides = array<i32>} : memref<8x128xf32, #tpu.memory_space<vmem>>, vector<1x128xf32>,
    %c0_143 = arith.constant 0 : index
    %c0_144 = arith.constant 0 : index
    %506 = vector.load %arg14[%c0_143, %c0_144] : memref<8x128xf32, #tpu.memory_space<vmem>>, vector<8x128xf32>
    %cst_145 = arith.constant dense<0.000000e+00> : vector<32x128xf32>
    %507 = tpu.matmul %0, %506, %cst_145 {dimension_numbers = #tpu.dot_dimension_numbers<[1], [0], [0], [1], [0, 0, 1, 1], [], []>} : vector<32x8xf32>, vector<8x128xf32>, vector<32x128xf32> -> vector<32x128xf32>
    %508 = vector.broadcast %2 : vector<32x1xf32> to vector<32x128xf32>
    %509 = arith.addf %507, %508 : vector<32x128xf32>
    %cst_146 = arith.constant 0.000000e+00 : f32
    %510 = vector.broadcast %cst_146 : f32 to vector<32x128xf32>
    %511 = arith.maximumf %509, %510 : vector<32x128xf32>
    %cst_147 = arith.constant dense<0xFF800000> : vector<32xf32>
    %512 = vector.multi_reduction <maximumf>, %511, %cst_147 [1] : vector<32x128xf32> to vector<32xf32>
    %513 = vector.shape_cast %512 : vector<32xf32> to vector<32x1xf32>
    %514 = vector.broadcast %513 : vector<32x1xf32> to vector<32x128xf32>
    %515 = arith.mulf %514, %3 : vector<32x128xf32>
    %cst_148 = arith.constant dense<0.000000e+00> : vector<128xf32>
    %516 = vector.multi_reduction <add>, %515, %cst_148 [0] : vector<32x128xf32> to vector<128xf32>
    %517 = vector.shape_cast %516 : vector<128xf32> to vector<1x128xf32>
    %518 = arith.addf %517, %4 : vector<1x128xf32>
    %519 = arith.mulf %518, %363 : vector<1x128xf32>
    %cst_149 = arith.constant dense<0.000000e+00> : vector<1xf32>
    %520 = vector.multi_reduction <add>, %519, %cst_149 [1] : vector<1x128xf32> to vector<1xf32>
    %521 = vector.shape_cast %520 : vector<1xf32> to vector<1x1xf32>
    %cst_150 = arith.constant 1.000000e+10 : f32
    %522 = vector.broadcast %cst_150 : f32 to vector<1x128xf32>
    %523 = arith.mulf %522, %363 : vector<1x128xf32>
    %524 = arith.subf %518, %523 : vector<1x128xf32>
    %cst_151 = arith.constant dense<0xFF800000> : vector<1xf32>
    %525 = vector.multi_reduction <maximumf>, %524, %cst_151 [1] : vector<1x128xf32> to vector<1xf32>
    %526 = vector.shape_cast %525 : vector<1xf32> to vector<1x1xf32>
    %527 = vector.broadcast %526 : vector<1x1xf32> to vector<1x128xf32>
    %528 = arith.cmpf oge, %524, %527 : vector<1x128xf32>
    %c128_i32_152 = arith.constant 128 : i32
    %529 = vector.broadcast %c128_i32_152 : i32 to vector<1x128xi32>
    %530 = arith.select %528, %5, %529 : vector<1x128xi1>, vector<1x128xi32>
    %cst_153 = arith.constant dense<2147483647> : vector<1xi32>
    %531 = vector.multi_reduction <minsi>, %530, %cst_153 [1] : vector<1x128xi32> to vector<1xi32>
    %532 = vector.shape_cast %531 : vector<1xi32> to vector<1x1xi32>
    %533 = vector.broadcast %532 : vector<1x1xi32> to vector<1x128xi32>
    %534 = arith.cmpi eq, %5, %533 : vector<1x128xi32>
    %535 = arith.extui %534 : vector<1x128xi1> to vector<1x128xi32>
    %536 = arith.sitofp %535 : vector<1x128xi32> to vector<1x128xf32>
    %537 = arith.subf %521, %526 : vector<1x1xf32>
    %cst_154 = arith.constant 0.000000e+00 : f32
    %538 = vector.broadcast %cst_154 : f32 to vector<1x1xf32>
    %539 = arith.cmpf ogt, %537, %538 : vector<1x1xf32>
    %540 = arith.extui %539 : vector<1x1xi1> to vector<1x1xi32>
    %541 = arith.sitofp %540 : vector<1x1xi32> to vector<1x1xf32>
    %542 = arith.subf %363, %536 : vector<1x128xf32>
    %543 = vector.broadcast %541 : vector<1x1xf32> to vector<1x128xf32>
    %544 = arith.mulf %543, %542 : vector<1x128xf32>
    %545 = arith.cmpf ogt, %526, %521 : vector<1x1xf32>
    %546 = arith.extui %545 : vector<1x1xi1> to vector<1x1xi32>
    %547 = arith.sitofp %546 : vector<1x1xi32> to vector<1x1xf32>
    %548 = vector.broadcast %544 : vector<1x128xf32> to vector<32x128xf32>
    %549 = arith.mulf %3, %548 : vector<32x128xf32>
    %cst_155 = arith.constant dense<0.000000e+00> : vector<32xf32>
    %550 = vector.multi_reduction <add>, %549, %cst_155 [1] : vector<32x128xf32> to vector<32xf32>
    %551 = vector.shape_cast %550 : vector<32xf32> to vector<32x1xf32>
    %552 = vector.broadcast %513 : vector<32x1xf32> to vector<32x128xf32>
    %553 = arith.cmpf oge, %511, %552 : vector<32x128xf32>
    %cst_156 = arith.constant 0.000000e+00 : f32
    %554 = vector.broadcast %cst_156 : f32 to vector<32x128xf32>
    %555 = arith.cmpf ogt, %509, %554 : vector<32x128xf32>
    %556 = arith.andi %553, %555 : vector<32x128xi1>
    %557 = arith.extui %556 : vector<32x128xi1> to vector<32x128xi32>
    %558 = arith.sitofp %557 : vector<32x128xi32> to vector<32x128xf32>
    %559 = vector.broadcast %551 : vector<32x1xf32> to vector<32x128xf32>
    %560 = arith.mulf %559, %558 : vector<32x128xf32>
    %cst_157 = arith.constant dense<0.000000e+00> : vector<8x128xf32>
    %561 = tpu.matmul %1, %560, %cst_157 {dimension_numbers = #tpu.dot_dimension_numbers<[1], [0], [0], [1], [0, 0, 1, 1], [], []>} : vector<8x32xf32>, vector<32x128xf32>, vector<8x128xf32> -> vector<8x128xf32>
    %cst_158 = arith.constant dense<0.000000e+00> : vector<32x128xf32>
    %562 = tpu.matmul %0, %365, %cst_158 {dimension_numbers = #tpu.dot_dimension_numbers<[1], [0], [0], [1], [0, 0, 1, 1], [], []>} : vector<32x8xf32>, vector<8x128xf32>, vector<32x128xf32> -> vector<32x128xf32>
    %563 = vector.broadcast %2 : vector<32x1xf32> to vector<32x128xf32>
    %564 = arith.addf %562, %563 : vector<32x128xf32>
    %cst_159 = arith.constant 0.000000e+00 : f32
    %565 = vector.broadcast %cst_159 : f32 to vector<32x128xf32>
    %566 = arith.maximumf %564, %565 : vector<32x128xf32>
    %cst_160 = arith.constant dense<0xFF800000> : vector<32xf32>
    %567 = vector.multi_reduction <maximumf>, %566, %cst_160 [1] : vector<32x128xf32> to vector<32xf32>
    %568 = vector.shape_cast %567 : vector<32xf32> to vector<32x1xf32>
    %569 = vector.broadcast %568 : vector<32x1xf32> to vector<32x128xf32>
    %570 = arith.mulf %569, %3 : vector<32x128xf32>
    %cst_161 = arith.constant dense<0.000000e+00> : vector<128xf32>
    %571 = vector.multi_reduction <add>, %570, %cst_161 [0] : vector<32x128xf32> to vector<128xf32>
    %572 = vector.shape_cast %571 : vector<128xf32> to vector<1x128xf32>
    %573 = arith.addf %572, %4 : vector<1x128xf32>
    %cst_162 = arith.constant dense<0xFF800000> : vector<1xf32>
    %574 = vector.multi_reduction <maximumf>, %573, %cst_162 [1] : vector<1x128xf32> to vector<1xf32>
    %575 = vector.shape_cast %574 : vector<1xf32> to vector<1x1xf32>
    %576 = vector.broadcast %575 : vector<1x1xf32> to vector<1x128xf32>
    %577 = arith.subf %573, %576 : vector<1x128xf32>
    %578 = math.exp %577 : vector<1x128xf32>
    %cst_163 = arith.constant dense<0.000000e+00> : vector<1xf32>
    %579 = vector.multi_reduction <add>, %578, %cst_163 [1] : vector<1x128xf32> to vector<1xf32>
    %580 = vector.shape_cast %579 : vector<1xf32> to vector<1x1xf32>
    %581 = tpu.reciprocal %580 {approx = true} : vector<1x1xf32> -> vector<1x1xf32>
    %582 = vector.broadcast %581 : vector<1x1xf32> to vector<1x128xf32>
    %583 = arith.mulf %578, %582 : vector<1x128xf32>
    %584 = arith.subf %363, %583 : vector<1x128xf32>
    %585 = vector.broadcast %584 : vector<1x128xf32> to vector<32x128xf32>
    %586 = arith.mulf %3, %585 : vector<32x128xf32>
    %cst_164 = arith.constant dense<0.000000e+00> : vector<32xf32>
    %587 = vector.multi_reduction <add>, %586, %cst_164 [1] : vector<32x128xf32> to vector<32xf32>
    %588 = vector.shape_cast %587 : vector<32xf32> to vector<32x1xf32>
    %589 = vector.broadcast %568 : vector<32x1xf32> to vector<32x128xf32>
    %590 = arith.cmpf oge, %566, %589 : vector<32x128xf32>
    %cst_165 = arith.constant 0.000000e+00 : f32
    %591 = vector.broadcast %cst_165 : f32 to vector<32x128xf32>
    %592 = arith.cmpf ogt, %564, %591 : vector<32x128xf32>
    %593 = arith.andi %590, %592 : vector<32x128xi1>
    %594 = arith.extui %593 : vector<32x128xi1> to vector<32x128xi32>
    %595 = arith.sitofp %594 : vector<32x128xi32> to vector<32x128xf32>
    %596 = vector.broadcast %588 : vector<32x1xf32> to vector<32x128xf32>
    %597 = arith.mulf %596, %595 : vector<32x128xf32>
    %cst_166 = arith.constant dense<0.000000e+00> : vector<8x128xf32>
    %598 = tpu.matmul %1, %597, %cst_166 {dimension_numbers = #tpu.dot_dimension_numbers<[1], [0], [0], [1], [0, 0, 1, 1], [], []>} : vector<8x32xf32>, vector<32x128xf32>, vector<8x128xf32> -> vector<8x128xf32>
    %599 = arith.mulf %573, %363 : vector<1x128xf32>
    %cst_167 = arith.constant dense<0.000000e+00> : vector<1xf32>
    %600 = vector.multi_reduction <add>, %599, %cst_167 [1] : vector<1x128xf32> to vector<1xf32>
    %601 = vector.shape_cast %600 : vector<1xf32> to vector<1x1xf32>
    %cst_168 = arith.constant 1.000000e+10 : f32
    %602 = vector.broadcast %cst_168 : f32 to vector<1x128xf32>
    %603 = arith.mulf %602, %363 : vector<1x128xf32>
    %604 = arith.subf %573, %603 : vector<1x128xf32>
    %cst_169 = arith.constant dense<0xFF800000> : vector<1xf32>
    %605 = vector.multi_reduction <maximumf>, %604, %cst_169 [1] : vector<1x128xf32> to vector<1xf32>
    %606 = vector.shape_cast %605 : vector<1xf32> to vector<1x1xf32>
    %607 = arith.cmpf ogt, %606, %601 : vector<1x1xf32>
    %608 = arith.extui %607 : vector<1x1xi1> to vector<1x1xi32>
    %609 = arith.sitofp %608 : vector<1x1xi32> to vector<1x1xf32>
    %610 = arith.mulf %598, %598 : vector<8x128xf32>
    %611 = vector.shape_cast %610 : vector<8x128xf32> to vector<1x8x128xf32>
    %cst_170 = arith.constant dense<0.000000e+00> : vector<1xf32>
    %612 = vector.multi_reduction <add>, %611, %cst_170 [1, 2] : vector<1x8x128xf32> to vector<1xf32>
    %613 = vector.shape_cast %612 : vector<1xf32> to vector<1x1x1xf32>
    %614 = vector.extract %613[0, 0, 0] : f32 from vector<1x1x1xf32>
    %615 = vector.broadcast %614 : f32 to vector<1x1xf32>
    %cst_171 = arith.constant 1.000000e-24 : f32
    %616 = vector.broadcast %cst_171 : f32 to vector<1x1xf32>
    %617 = arith.maximumf %615, %616 : vector<1x1xf32>
    %618 = math.rsqrt %617 : vector<1x1xf32>
    %619 = vector.broadcast %618 : vector<1x1xf32> to vector<8x128xf32>
    %620 = arith.mulf %598, %619 : vector<8x128xf32>
    %621 = arith.subf %365, %367 : vector<8x128xf32>
    %622 = arith.mulf %621, %620 : vector<8x128xf32>
    %623 = vector.shape_cast %622 : vector<8x128xf32> to vector<1x8x128xf32>
    %cst_172 = arith.constant dense<0.000000e+00> : vector<1xf32>
    %624 = vector.multi_reduction <add>, %623, %cst_172 [1, 2] : vector<1x8x128xf32> to vector<1xf32>
    %625 = vector.shape_cast %624 : vector<1xf32> to vector<1x1x1xf32>
    %626 = vector.extract %625[0, 0, 0] : f32 from vector<1x1x1xf32>
    %627 = vector.broadcast %626 : f32 to vector<1x1xf32>
    %628 = vector.broadcast %627 : vector<1x1xf32> to vector<8x128xf32>
    %629 = arith.mulf %628, %620 : vector<8x128xf32>
    %630 = arith.subf %621, %629 : vector<8x128xf32>
    %cst_173 = arith.constant 7.000000e-03 : f32
    %631 = vector.broadcast %cst_173 : f32 to vector<8x128xf32>
    %632 = arith.mulf %631, %630 : vector<8x128xf32>
    %633 = arith.subf %365, %632 : vector<8x128xf32>
    %cst_174 = arith.constant 0.387979388 : f32
    %634 = vector.broadcast %cst_174 : f32 to vector<8x128xf32>
    %635 = arith.mulf %634, %620 : vector<8x128xf32>
    %636 = arith.subf %365, %635 : vector<8x128xf32>
    %637 = vector.broadcast %609 : vector<1x1xf32> to vector<8x128xf32>
    %638 = arith.mulf %637, %633 : vector<8x128xf32>
    %cst_175 = arith.constant 1.000000e+00 : f32
    %639 = vector.broadcast %cst_175 : f32 to vector<1x1xf32>
    %640 = arith.subf %639, %609 : vector<1x1xf32>
    %641 = vector.broadcast %640 : vector<1x1xf32> to vector<8x128xf32>
    %642 = arith.mulf %641, %636 : vector<8x128xf32>
    %643 = arith.addf %638, %642 : vector<8x128xf32>
    %644 = arith.subf %643, %367 : vector<8x128xf32>
    %645 = arith.mulf %644, %644 : vector<8x128xf32>
    %cst_176 = arith.constant dense<0.000000e+00> : vector<128xf32>
    %646 = vector.multi_reduction <add>, %645, %cst_176 [0] : vector<8x128xf32> to vector<128xf32>
    %647 = vector.shape_cast %646 : vector<128xf32> to vector<1x128xf32>
    %cst_177 = arith.constant 1.000000e-18 : f32
    %648 = vector.broadcast %cst_177 : f32 to vector<1x128xf32>
    %649 = arith.maximumf %647, %648 : vector<1x128xf32>
    %650 = math.rsqrt %649 : vector<1x128xf32>
    %cst_178 = arith.constant 1.600000e-01 : f32
    %651 = vector.broadcast %cst_178 : f32 to vector<1x128xf32>
    %652 = arith.mulf %651, %650 : vector<1x128xf32>
    %cst_179 = arith.constant 1.000000e+00 : f32
    %653 = vector.broadcast %cst_179 : f32 to vector<1x128xf32>
    %654 = arith.minimumf %652, %653 : vector<1x128xf32>
    %655 = vector.broadcast %654 : vector<1x128xf32> to vector<8x128xf32>
    %656 = arith.mulf %644, %655 : vector<8x128xf32>
    %657 = arith.addf %367, %656 : vector<8x128xf32>
    %658 = arith.mulf %621, %621 : vector<8x128xf32>
    %659 = vector.shape_cast %658 : vector<8x128xf32> to vector<1x8x128xf32>
    %cst_180 = arith.constant dense<0.000000e+00> : vector<1xf32>
    %660 = vector.multi_reduction <add>, %659, %cst_180 [1, 2] : vector<1x8x128xf32> to vector<1xf32>
    %661 = vector.shape_cast %660 : vector<1xf32> to vector<1x1x1xf32>
    %662 = vector.extract %661[0, 0, 0] : f32 from vector<1x1x1xf32>
    %663 = vector.broadcast %662 : f32 to vector<1x1xf32>
    %664 = arith.mulf %9, %609 : vector<1x1xf32>
    %c1_181 = arith.constant 1 : index
    %c0_182 = arith.constant 0 : index
    %c0_183 = arith.constant 0 : index
    %665 = vector.load %arg16[%c1_181, %c0_182, %c0_183] : memref<2x1x1xf32, #tpu.memory_space<vmem>>, vector<1x1x1xf32>
    %666 = vector.shape_cast %665 : vector<1x1x1xf32> to vector<1x1xf32>
    %667 = arith.cmpf olt, %663, %666 : vector<1x1xf32>
    %668 = arith.extui %667 : vector<1x1xi1> to vector<1x1xi32>
    %669 = arith.sitofp %668 : vector<1x1xi32> to vector<1x1xf32>
    %670 = arith.mulf %664, %669 : vector<1x1xf32>
    %cst_184 = arith.constant 5.000000e-01 : f32
    %671 = vector.broadcast %cst_184 : f32 to vector<1x1xf32>
    %672 = arith.cmpf ogt, %670, %671 : vector<1x1xf32>
    %c1_185 = arith.constant 1 : index
    %c0_186 = arith.constant 0 : index
    %c0_187 = arith.constant 0 : index
    %673 = vector.load %arg13[%c1_185, %c0_186, %c0_187] : memref<2x8x128xf32, #tpu.memory_space<vmem>>, vector<1x8x128xf32>
    %674 = vector.shape_cast %673 : vector<1x8x128xf32> to vector<8x128xf32>
    %675 = vector.shape_cast %672 : vector<1x1xi1> to vector<1x1xi1>
    %676 = vector.broadcast %675 : vector<1x1xi1> to vector<8x128xi1>
    %677 = arith.select %676, %365, %674 : vector<8x128xi1>, vector<8x128xf32>
    %c1_188 = arith.constant 1 : index
    %c0_189 = arith.constant 0 : index
    %c0_190 = arith.constant 0 : index
    %678 = vector.load %arg13[%c1_188, %c0_189, %c0_190] : memref<2x8x128xf32, #tpu.memory_space<vmem>>, vector<1x8x128xf32>
    %679 = vector.shape_cast %678 : vector<1x8x128xf32> to vector<8x128xf32>
    %680 = vector.shape_cast %677 : vector<8x128xf32> to vector<1x8x128xf32>
    tpu.vector_store %arg13[%c1_188, %c0_189, %c0_190], %680 {strides = array<i32>} : memref<2x8x128xf32, #tpu.memory_space<vmem>>, vector<1x8x128xf32>,
    %cst_191 = arith.constant 5.000000e-01 : f32
    %681 = vector.broadcast %cst_191 : f32 to vector<1x1xf32>
    %682 = arith.cmpf ogt, %670, %681 : vector<1x1xf32>
    %c1_192 = arith.constant 1 : index
    %c0_193 = arith.constant 0 : index
    %c0_194 = arith.constant 0 : index
    %683 = vector.load %arg16[%c1_192, %c0_193, %c0_194] : memref<2x1x1xf32, #tpu.memory_space<vmem>>, vector<1x1x1xf32>
    %684 = vector.shape_cast %683 : vector<1x1x1xf32> to vector<1x1xf32>
    %685 = arith.select %682, %663, %684 : vector<1x1xi1>, vector<1x1xf32>
    %c1_195 = arith.constant 1 : index
    %c0_196 = arith.constant 0 : index
    %c0_197 = arith.constant 0 : index
    %686 = vector.load %arg16[%c1_195, %c0_196, %c0_197] : memref<2x1x1xf32, #tpu.memory_space<vmem>>, vector<1x1x1xf32>
    %687 = vector.shape_cast %686 : vector<1x1x1xf32> to vector<1x1xf32>
    %688 = vector.shape_cast %685 : vector<1x1xf32> to vector<1x1x1xf32>
    tpu.vector_store %arg16[%c1_195, %c0_196, %c0_197], %688 {strides = array<i32>} : memref<2x1x1xf32, #tpu.memory_space<vmem>>, vector<1x1x1xf32>,
    %c1_198 = arith.constant 1 : index
    %c0_199 = arith.constant 0 : index
    %c0_200 = arith.constant 0 : index
    %689 = vector.load %arg17[%c1_198, %c0_199, %c0_200] : memref<2x1x1xf32, #tpu.memory_space<vmem>>, vector<1x1x1xf32>
    %690 = vector.shape_cast %689 : vector<1x1x1xf32> to vector<1x1xf32>
    %691 = arith.maximumf %690, %670 : vector<1x1xf32>
    %c1_201 = arith.constant 1 : index
    %c0_202 = arith.constant 0 : index
    %c0_203 = arith.constant 0 : index
    %692 = vector.load %arg17[%c1_201, %c0_202, %c0_203] : memref<2x1x1xf32, #tpu.memory_space<vmem>>, vector<1x1x1xf32>
    %693 = vector.shape_cast %692 : vector<1x1x1xf32> to vector<1x1xf32>
    %694 = vector.shape_cast %691 : vector<1x1xf32> to vector<1x1x1xf32>
    tpu.vector_store %arg17[%c1_201, %c0_202, %c0_203], %694 {strides = array<i32>} : memref<2x1x1xf32, #tpu.memory_space<vmem>>, vector<1x1x1xf32>,
    %cst_204 = arith.constant 5.000000e-01 : f32
    %695 = vector.broadcast %cst_204 : f32 to vector<1x1xf32>
    %696 = arith.cmpf ogt, %9, %695 : vector<1x1xf32>
    %697 = vector.shape_cast %696 : vector<1x1xi1> to vector<1x1xi1>
    %698 = vector.broadcast %697 : vector<1x1xi1> to vector<8x128xi1>
    %699 = arith.select %698, %657, %506 : vector<8x128xi1>, vector<8x128xf32>
    %c1_205 = arith.constant 1 : index
    %c0_206 = arith.constant 0 : index
    %c0_207 = arith.constant 0 : index
    %700 = vector.load %arg11[%c1_205, %c0_206, %c0_207] : memref<2x8x128xf32, #tpu.memory_space<vmem>>, vector<1x8x128xf32>
    %701 = vector.shape_cast %700 : vector<1x8x128xf32> to vector<8x128xf32>
    %702 = vector.shape_cast %699 : vector<8x128xf32> to vector<1x8x128xf32>
    tpu.vector_store %arg11[%c1_205, %c0_206, %c0_207], %702 {strides = array<i32>} : memref<2x8x128xf32, #tpu.memory_space<vmem>>, vector<1x8x128xf32>,
    %c1_208 = arith.constant 1 : index
    %c0_209 = arith.constant 0 : index
    %c0_210 = arith.constant 0 : index
    %703 = vector.load %arg12[%c1_208, %c0_209, %c0_210] : memref<2x8x128xf32, #tpu.memory_space<vmem>>, vector<1x8x128xf32>
    %704 = vector.shape_cast %703 : vector<1x8x128xf32> to vector<8x128xf32>
    %705 = vector.shape_cast %561 : vector<8x128xf32> to vector<1x8x128xf32>
    tpu.vector_store %arg12[%c1_208, %c0_209, %c0_210], %705 {strides = array<i32>} : memref<2x8x128xf32, #tpu.memory_space<vmem>>, vector<1x8x128xf32>,
    %706 = arith.mulf %358, %547 : vector<1x1xf32>
    %707 = arith.maximumf %9, %706 : vector<1x1xf32>
    %c0_211 = arith.constant 0 : index
    %c0_212 = arith.constant 0 : index
    %708 = vector.load %arg15[%c0_211, %c0_212] : memref<1x1xf32, #tpu.memory_space<vmem>>, vector<1x1xf32>
    tpu.vector_store %arg15[%c0_211, %c0_212], %707 {strides = array<i32>} : memref<1x1xf32, #tpu.memory_space<vmem>>, vector<1x1xf32>,
    %c3_i32 = arith.constant 3 : i32
    %709 = arith.cmpi eq, %arg0, %c3_i32 : i32
    %710 = arith.extui %709 : i1 to i32
    %c0_i32_213 = arith.constant 0 : i32
    %711 = arith.cmpi ne, %710, %c0_i32_213 : i32
    scf.if %711 {
      %c0_214 = arith.constant 0 : index
      %c0_215 = arith.constant 0 : index
      %c0_216 = arith.constant 0 : index
      %712 = vector.load %arg17[%c0_214, %c0_215, %c0_216] : memref<2x1x1xf32, #tpu.memory_space<vmem>>, vector<1x1x1xf32>
      %713 = vector.shape_cast %712 : vector<1x1x1xf32> to vector<1x1xf32>
      %cst_217 = arith.constant 5.000000e-01 : f32
      %714 = vector.broadcast %cst_217 : f32 to vector<1x1xf32>
      %715 = arith.cmpf ogt, %713, %714 : vector<1x1xf32>
      %c0_218 = arith.constant 0 : index
      %c0_219 = arith.constant 0 : index
      %c0_220 = arith.constant 0 : index
      %716 = vector.load %arg13[%c0_218, %c0_219, %c0_220] : memref<2x8x128xf32, #tpu.memory_space<vmem>>, vector<1x8x128xf32>
      %717 = vector.shape_cast %716 : vector<1x8x128xf32> to vector<8x128xf32>
      %c0_221 = arith.constant 0 : index
      %c0_222 = arith.constant 0 : index
      %c0_223 = arith.constant 0 : index
      %718 = vector.load %arg11[%c0_221, %c0_222, %c0_223] : memref<2x8x128xf32, #tpu.memory_space<vmem>>, vector<1x8x128xf32>
      %719 = vector.shape_cast %718 : vector<1x8x128xf32> to vector<8x128xf32>
      %720 = vector.shape_cast %715 : vector<1x1xi1> to vector<1x1xi1>
      %721 = vector.broadcast %720 : vector<1x1xi1> to vector<8x128xi1>
      %722 = arith.select %721, %717, %719 : vector<8x128xi1>, vector<8x128xf32>
      %cst_224 = arith.constant dense<0.000000e+00> : vector<32x128xf32>
      %723 = tpu.matmul %0, %722, %cst_224 {dimension_numbers = #tpu.dot_dimension_numbers<[1], [0], [0], [1], [0, 0, 1, 1], [], []>} : vector<32x8xf32>, vector<8x128xf32>, vector<32x128xf32> -> vector<32x128xf32>
      %724 = vector.broadcast %2 : vector<32x1xf32> to vector<32x128xf32>
      %725 = arith.addf %723, %724 : vector<32x128xf32>
      %cst_225 = arith.constant 0.000000e+00 : f32
      %726 = vector.broadcast %cst_225 : f32 to vector<32x128xf32>
      %727 = arith.maximumf %725, %726 : vector<32x128xf32>
      %cst_226 = arith.constant dense<0xFF800000> : vector<32xf32>
      %728 = vector.multi_reduction <maximumf>, %727, %cst_226 [1] : vector<32x128xf32> to vector<32xf32>
      %729 = vector.shape_cast %728 : vector<32xf32> to vector<32x1xf32>
      %730 = vector.broadcast %729 : vector<32x1xf32> to vector<32x128xf32>
      %731 = arith.mulf %730, %3 : vector<32x128xf32>
      %cst_227 = arith.constant dense<0.000000e+00> : vector<128xf32>
      %732 = vector.multi_reduction <add>, %731, %cst_227 [0] : vector<32x128xf32> to vector<128xf32>
      %733 = vector.shape_cast %732 : vector<128xf32> to vector<1x128xf32>
      %734 = arith.addf %733, %4 : vector<1x128xf32>
      %c0_228 = arith.constant 0 : index
      %c0_229 = arith.constant 0 : index
      %c0_230 = arith.constant 0 : index
      %735 = vector.load %arg9[%c0_228, %c0_229, %c0_230] : memref<2x8x128xf32, #tpu.memory_space<vmem>>, vector<1x8x128xf32>
      %736 = vector.shape_cast %735 : vector<1x8x128xf32> to vector<8x128xf32>
      %737 = vector.shape_cast %722 : vector<8x128xf32> to vector<1x8x128xf32>
      tpu.vector_store %arg9[%c0_228, %c0_229, %c0_230], %737 {strides = array<i32>} : memref<2x8x128xf32, #tpu.memory_space<vmem>>, vector<1x8x128xf32>,
      %c0_231 = arith.constant 0 : index
      %c0_232 = arith.constant 0 : index
      %c0_233 = arith.constant 0 : index
      %738 = vector.load %arg10[%c0_231, %c0_232, %c0_233] : memref<2x1x128xf32, #tpu.memory_space<vmem>>, vector<1x1x128xf32>
      %739 = vector.shape_cast %738 : vector<1x1x128xf32> to vector<1x128xf32>
      %740 = vector.shape_cast %734 : vector<1x128xf32> to vector<1x1x128xf32>
      tpu.vector_store %arg10[%c0_231, %c0_232, %c0_233], %740 {strides = array<i32>} : memref<2x1x128xf32, #tpu.memory_space<vmem>>, vector<1x1x128xf32>,
      %c1_234 = arith.constant 1 : index
      %c0_235 = arith.constant 0 : index
      %c0_236 = arith.constant 0 : index
      %741 = vector.load %arg17[%c1_234, %c0_235, %c0_236] : memref<2x1x1xf32, #tpu.memory_space<vmem>>, vector<1x1x1xf32>
      %742 = vector.shape_cast %741 : vector<1x1x1xf32> to vector<1x1xf32>
      %cst_237 = arith.constant 5.000000e-01 : f32
      %743 = vector.broadcast %cst_237 : f32 to vector<1x1xf32>
      %744 = arith.cmpf ogt, %742, %743 : vector<1x1xf32>
      %c1_238 = arith.constant 1 : index
      %c0_239 = arith.constant 0 : index
      %c0_240 = arith.constant 0 : index
      %745 = vector.load %arg13[%c1_238, %c0_239, %c0_240] : memref<2x8x128xf32, #tpu.memory_space<vmem>>, vector<1x8x128xf32>
      %746 = vector.shape_cast %745 : vector<1x8x128xf32> to vector<8x128xf32>
      %c1_241 = arith.constant 1 : index
      %c0_242 = arith.constant 0 : index
      %c0_243 = arith.constant 0 : index
      %747 = vector.load %arg11[%c1_241, %c0_242, %c0_243] : memref<2x8x128xf32, #tpu.memory_space<vmem>>, vector<1x8x128xf32>
      %748 = vector.shape_cast %747 : vector<1x8x128xf32> to vector<8x128xf32>
      %749 = vector.shape_cast %744 : vector<1x1xi1> to vector<1x1xi1>
      %750 = vector.broadcast %749 : vector<1x1xi1> to vector<8x128xi1>
      %751 = arith.select %750, %746, %748 : vector<8x128xi1>, vector<8x128xf32>
      %cst_244 = arith.constant dense<0.000000e+00> : vector<32x128xf32>
      %752 = tpu.matmul %0, %751, %cst_244 {dimension_numbers = #tpu.dot_dimension_numbers<[1], [0], [0], [1], [0, 0, 1, 1], [], []>} : vector<32x8xf32>, vector<8x128xf32>, vector<32x128xf32> -> vector<32x128xf32>
      %753 = vector.broadcast %2 : vector<32x1xf32> to vector<32x128xf32>
      %754 = arith.addf %752, %753 : vector<32x128xf32>
      %cst_245 = arith.constant 0.000000e+00 : f32
      %755 = vector.broadcast %cst_245 : f32 to vector<32x128xf32>
      %756 = arith.maximumf %754, %755 : vector<32x128xf32>
      %cst_246 = arith.constant dense<0xFF800000> : vector<32xf32>
      %757 = vector.multi_reduction <maximumf>, %756, %cst_246 [1] : vector<32x128xf32> to vector<32xf32>
      %758 = vector.shape_cast %757 : vector<32xf32> to vector<32x1xf32>
      %759 = vector.broadcast %758 : vector<32x1xf32> to vector<32x128xf32>
      %760 = arith.mulf %759, %3 : vector<32x128xf32>
      %cst_247 = arith.constant dense<0.000000e+00> : vector<128xf32>
      %761 = vector.multi_reduction <add>, %760, %cst_247 [0] : vector<32x128xf32> to vector<128xf32>
      %762 = vector.shape_cast %761 : vector<128xf32> to vector<1x128xf32>
      %763 = arith.addf %762, %4 : vector<1x128xf32>
      %c1_248 = arith.constant 1 : index
      %c0_249 = arith.constant 0 : index
      %c0_250 = arith.constant 0 : index
      %764 = vector.load %arg9[%c1_248, %c0_249, %c0_250] : memref<2x8x128xf32, #tpu.memory_space<vmem>>, vector<1x8x128xf32>
      %765 = vector.shape_cast %764 : vector<1x8x128xf32> to vector<8x128xf32>
      %766 = vector.shape_cast %751 : vector<8x128xf32> to vector<1x8x128xf32>
      tpu.vector_store %arg9[%c1_248, %c0_249, %c0_250], %766 {strides = array<i32>} : memref<2x8x128xf32, #tpu.memory_space<vmem>>, vector<1x8x128xf32>,
      %c1_251 = arith.constant 1 : index
      %c0_252 = arith.constant 0 : index
      %c0_253 = arith.constant 0 : index
      %767 = vector.load %arg10[%c1_251, %c0_252, %c0_253] : memref<2x1x128xf32, #tpu.memory_space<vmem>>, vector<1x1x128xf32>
      %768 = vector.shape_cast %767 : vector<1x1x128xf32> to vector<1x128xf32>
      %769 = vector.shape_cast %763 : vector<1x128xf32> to vector<1x1x128xf32>
      tpu.vector_store %arg10[%c1_251, %c0_252, %c0_253], %769 {strides = array<i32>} : memref<2x1x128xf32, #tpu.memory_space<vmem>>, vector<1x1x128xf32>,
    } else {
    }
    return
  }
  func.func @transform_0(%arg0: i32, %arg1: memref<2xi32, #tpu.memory_space<smem>>) -> (i32, i32, i32) {
    %c0_i32 = arith.constant 0 : i32
    %c0_i32_0 = arith.constant 0 : i32
    %c0_i32_1 = arith.constant 0 : i32
    %c0_i32_2 = arith.constant 0 : i32
    return %c0_i32, %c0_i32_0, %c0_i32_1 : i32, i32, i32
  }
  func.func @transform_1(%arg0: i32, %arg1: memref<2xi32, #tpu.memory_space<smem>>) -> (i32, i32, i32) {
    %c0_i32 = arith.constant 0 : i32
    %c0_i32_0 = arith.constant 0 : i32
    %c0_i32_1 = arith.constant 0 : i32
    %c0_i32_2 = arith.constant 0 : i32
    return %c0_i32, %c0_i32_0, %c0_i32_1 : i32, i32, i32
  }
  func.func @transform_2(%arg0: i32, %arg1: memref<2xi32, #tpu.memory_space<smem>>) -> (i32, i32) {
    %c0_i32 = arith.constant 0 : i32
    %c0_i32_0 = arith.constant 0 : i32
    %c0_i32_1 = arith.constant 0 : i32
    return %c0_i32, %c0_i32_0 : i32, i32
  }
  func.func @transform_3(%arg0: i32, %arg1: memref<2xi32, #tpu.memory_space<smem>>) -> (i32, i32) {
    %c0_i32 = arith.constant 0 : i32
    %c0_i32_0 = arith.constant 0 : i32
    %c0_i32_1 = arith.constant 0 : i32
    return %c0_i32, %c0_i32_0 : i32, i32
  }
  func.func @transform_4(%arg0: i32, %arg1: memref<2xi32, #tpu.memory_space<smem>>) -> (i32, i32) {
    %c0_i32 = arith.constant 0 : i32
    %c0_i32_0 = arith.constant 0 : i32
    %c0_i32_1 = arith.constant 0 : i32
    return %c0_i32, %c0_i32_0 : i32, i32
  }
  func.func @transform_5(%arg0: i32, %arg1: memref<2xi32, #tpu.memory_space<smem>>) -> (i32, i32) {
    %c0_i32 = arith.constant 0 : i32
    %c0_i32_0 = arith.constant 0 : i32
    %c0_i32_1 = arith.constant 0 : i32
    return %c0_i32, %c0_i32_0 : i32, i32
  }
  func.func @transform_6(%arg0: i32, %arg1: memref<2xi32, #tpu.memory_space<smem>>) -> (i32, i32) {
    %c0_i32 = arith.constant 0 : i32
    %c0_i32_0 = arith.constant 0 : i32
    %c0_i32_1 = arith.constant 0 : i32
    return %c0_i32, %c0_i32_0 : i32, i32
  }
  func.func @transform_7(%arg0: i32, %arg1: memref<2xi32, #tpu.memory_space<smem>>) -> (i32, i32, i32) {
    %c0_i32 = arith.constant 0 : i32
    %c0_i32_0 = arith.constant 0 : i32
    %c0_i32_1 = arith.constant 0 : i32
    %c0_i32_2 = arith.constant 0 : i32
    return %c0_i32, %c0_i32_0, %c0_i32_1 : i32, i32, i32
  }
  func.func @transform_8(%arg0: i32, %arg1: memref<2xi32, #tpu.memory_space<smem>>) -> (i32, i32, i32) {
    %c0_i32 = arith.constant 0 : i32
    %c0_i32_0 = arith.constant 0 : i32
    %c0_i32_1 = arith.constant 0 : i32
    %c0_i32_2 = arith.constant 0 : i32
    return %c0_i32, %c0_i32_0, %c0_i32_1 : i32, i32, i32
  }
}

</mosaic_0001>

<llo_original>
// kernel: _run_impl.1
$region0: #{_run_impl.1}
  #allocation0 [shape = 'u32[]', space=smem, size = 0x4, offset = 0x4, fixed_abs, tag = 'smem constant byte address 0x4 - core index']
  #allocation1 [shape = 'u32[72,128]{1,0:T(1,128)}', space=vmem, size = 0x9000, scoped, tag = 'internal scratch']
  #allocation2 [shape = 'f32[2,8,128]{2,1,0:T(8,128)}', space=vmem, size = 0x2000, scoped, tag = 'scratch operand']
  #allocation3 [shape = 'f32[2,8,128]{2,1,0:T(8,128)}', space=vmem, size = 0x2000, scoped, tag = 'scratch operand']
  #allocation4 [shape = 'f32[2,8,128]{2,1,0:T(8,128)}', space=vmem, size = 0x2000, scoped, tag = 'scratch operand']
  #allocation5 [shape = 'f32[8,128]{1,0:T(8,128)}', space=vmem, size = 0x1000, scoped, tag = 'scratch operand']
  #allocation6 [shape = 'f32[1,1]{1,0:T(1,128)}', space=vmem, size = 0x200, scoped, tag = 'scratch operand']
  #allocation7 [shape = 'f32[2,1,1]{2,1,0:T(1,128)}', space=vmem, size = 0x400, scoped, tag = 'scratch operand']
  #allocation8 [shape = 'f32[2,1,1]{2,1,0:T(1,128)}', space=vmem, size = 0x400, scoped, tag = 'scratch operand']
  #allocation9 [shape = 's32[1]{0}', space=sflag, size = 0x4, scoped, tag = 'scoped memory for _run_impl.1']
  #allocation10 [shape = 'u8[512]{0}', space=smem, size = 0x200, scoped, tag = 'prefetched SMEM operand 0']
  %s0 = inlined_call_operand.vmem [shape: s32[2], index: 0, kind: input, shape index: {}]
  %s1 = inlined_call_operand.vmem [shape: f32[2,8,128], index: 1, kind: input, shape index: {}]
  %s2 = inlined_call_operand.vmem [shape: f32[2,8,128], index: 2, kind: input, shape index: {}]
  %s3 = inlined_call_operand.vmem [shape: f32[32,8], index: 3, kind: input, shape index: {}]
  %s4 = inlined_call_operand.vmem [shape: f32[8,32], index: 4, kind: input, shape index: {}]
  %s5 = inlined_call_operand.vmem [shape: f32[32,1], index: 5, kind: input, shape index: {}]
  %s6 = inlined_call_operand.vmem [shape: f32[32,128], index: 6, kind: input, shape index: {}]
  %s7 = inlined_call_operand.vmem [shape: f32[1,128], index: 7, kind: input, shape index: {}]
  %s8 = inlined_call_operand.vmem [shape: f32[2,8,128], index: 8, kind: output, shape index: {0}]
  %s9 = inlined_call_operand.hbm [shape: f32[2,1,128], index: 9, kind: output, shape index: {1}]
  %10 = xla_tuple %s8, %s9
  %s11 = sld [smem:[#allocation0]]
  $region77: #{_run_impl.1} parent=0
    _
  %s13 = ssub.s32 1, %s11
  %s14 = scalar_select 0, %s13, %s11
  %s16 = sshll.u32 %s0, 4
  %s17 = int_to_ptr.vmem [resolvable:$true] %s16
  %19 = dma.vmem_to_smem %s17, 16, [#allocation10], [#allocation9]
  %21 = dma.done [#allocation9], 16
  %22 = sfence
  $region1: #{_run_impl.1} parent=0
    #allocation11 [shape = 'u8[1024]{0}', space=vmem, size = 0x400, scoped, tag = 'output window, operand 1, single buffered']
    #allocation12 [shape = 's32[2]{0}', space=sflag, size = 0x8, scoped, tag = 'scoped memory for _run_impl.1']
    %23 = vsyncpa [#allocation12], 0
    loop: start=0, step=1, limit=6
    $region2: #{_run_impl.1} parent=1 // loop_pre_header
      _
    $region3: #{_run_impl.1} parent=1 // loop_header
      %s25 = sphi 0, %s29
      %p26 = scmp.ge.s32.totalorder %s25, 6
      %s33 = sphi 0, %s33
      %s35 = sphi 0, %s33
      %s36 = sphi 0, %s35
      %s50 = sphi 0, %s36
      %s54 = sphi 0, %s54
      %s56 = sphi 0, %s54
      %s57 = sphi 0, %s56
      %s71 = sphi 0, %s57
      %s75 = sphi 0, %s75
      %s77 = sphi 0, %s75
      %s78 = sphi 0, %s77
      %s92 = sphi 0, %s78
      %s96 = sphi 0, %s96
      %s98 = sphi 0, %s96
      %s99 = sphi 0, %s98
      %s113 = sphi 0, %s99
      %s117 = sphi 0, %s117
      %s119 = sphi 0, %s117
      %s120 = sphi 0, %s119
      %s134 = sphi 0, %s120
      %s138 = sphi 0, %s138
      %s140 = sphi 0, %s138
      %s141 = sphi 0, %s140
      %s155 = sphi 0, %s141
      %s159 = sphi 0, %s159
      %s161 = sphi 0, %s159
      %s162 = sphi 0, %s161
      %s176 = sphi 0, %s162
      %s180 = sphi 0, %s180
      %s182 = sphi 0, %s180
      %s183 = sphi 0, %s182
      %s197 = sphi 0, %s183
      %s201 = sphi 0, %s201
      %s203 = sphi 0, %s201
      %s204 = sphi 0, %s203
      %s218 = sphi 0, %s204
    $region4: #{_run_impl.1} parent=1 // loop_header_branch
      %28 = sbr.rel (%p26) target = $region8
    $region5: #{_run_impl.1} parent=1 // loop_body
      %s30 = ssub.s32 %s25, 1
      %s31 = ssub.s32 %s25, 2
      %s32 = sadd.s32 %s25, 1
      %s34 = sadd.s32 %s33, 1
      %p37 = scmp.eq.s32.totalorder %s25, 3
      %p38 = scmp.ne.s32.totalorder %s33, %s35
      %p39 = scmp.eq.s32.totalorder %s25, 0
      %p40 = por %p38, %p39
      %p41 = scmp.ne.s32.totalorder %s33, %s35
      %p42 = scmp.eq.s32.totalorder %s30, 3
      %p43 = por %p41, %p42
      %p44 = scmp.ne.s32.totalorder %s35, %s36
      %p45 = scmp.eq.s32.totalorder %s30, 0
      %p46 = por %p44, %p45
      %p47 = scmp.ne.s32.totalorder %s35, %s36
      %p48 = scmp.eq.s32.totalorder %s31, 3
      %p49 = por %p47, %p48
      %p51 = scmp.ne.s32.totalorder %s36, %s50
      %p52 = scmp.eq.s32.totalorder %s31, 0
      %p53 = por %p51, %p52
      %s55 = sadd.s32 %s54, 1
      %p58 = scmp.eq.s32.totalorder %s25, 3
      %p59 = scmp.ne.s32.totalorder %s54, %s56
      %p60 = scmp.eq.s32.totalorder %s25, 0
      %p61 = por %p59, %p60
      %p62 = scmp.ne.s32.totalorder %s54, %s56
      %p63 = scmp.eq.s32.totalorder %s30, 3
      %p64 = por %p62, %p63
      %p65 = scmp.ne.s32.totalorder %s56, %s57
      %p66 = scmp.eq.s32.totalorder %s30, 0
      %p67 = por %p65, %p66
      %p68 = scmp.ne.s32.totalorder %s56, %s57
      %p69 = scmp.eq.s32.totalorder %s31, 3
      %p70 = por %p68, %p69
      %p72 = scmp.ne.s32.totalorder %s57, %s71
      %p73 = scmp.eq.s32.totalorder %s31, 0
      %p74 = por %p72, %p73
      %s76 = sadd.s32 %s75, 1
      %p79 = scmp.eq.s32.totalorder %s25, 3
      %p80 = scmp.ne.s32.totalorder %s75, %s77
      %p81 = scmp.eq.s32.totalorder %s25, 0
      %p82 = por %p80, %p81
      %p83 = scmp.ne.s32.totalorder %s75, %s77
      %p84 = scmp.eq.s32.totalorder %s30, 3
      %p85 = por %p83, %p84
      %p86 = scmp.ne.s32.totalorder %s77, %s78
      %p87 = scmp.eq.s32.totalorder %s30, 0
      %p88 = por %p86, %p87
      %p89 = scmp.ne.s32.totalorder %s77, %s78
      %p90 = scmp.eq.s32.totalorder %s31, 3
      %p91 = por %p89, %p90
      %p93 = scmp.ne.s32.totalorder %s78, %s92
      %p94 = scmp.eq.s32.totalorder %s31, 0
      %p95 = por %p93, %p94
      %s97 = sadd.s32 %s96, 1
      %p100 = scmp.eq.s32.totalorder %s25, 3
      %p101 = scmp.ne.s32.totalorder %s96, %s98
      %p102 = scmp.eq.s32.totalorder %s25, 0
      %p103 = por %p101, %p102
      %p104 = scmp.ne.s32.totalorder %s96, %s98
      %p105 = scmp.eq.s32.totalorder %s30, 3
      %p106 = por %p104, %p105
      %p107 = scmp.ne.s32.totalorder %s98, %s99
      %p108 = scmp.eq.s32.totalorder %s30, 0
      %p109 = por %p107, %p108
      %p110 = scmp.ne.s32.totalorder %s98, %s99
      %p111 = scmp.eq.s32.totalorder %s31, 3
      %p112 = por %p110, %p111
      %p114 = scmp.ne.s32.totalorder %s99, %s113
      %p115 = scmp.eq.s32.totalorder %s31, 0
      %p116 = por %p114, %p115
      %s118 = sadd.s32 %s117, 1
      %p121 = scmp.eq.s32.totalorder %s25, 3
      %p122 = scmp.ne.s32.totalorder %s117, %s119
      %p123 = scmp.eq.s32.totalorder %s25, 0
      %p124 = por %p122, %p123
      %p125 = scmp.ne.s32.totalorder %s117, %s119
      %p126 = scmp.eq.s32.totalorder %s30, 3
      %p127 = por %p125, %p126
      %p128 = scmp.ne.s32.totalorder %s119, %s120
      %p129 = scmp.eq.s32.totalorder %s30, 0
      %p130 = por %p128, %p129
      %p131 = scmp.ne.s32.totalorder %s119, %s120
      %p132 = scmp.eq.s32.totalorder %s31, 3
      %p133 = por %p131, %p132
      %p135 = scmp.ne.s32.totalorder %s120, %s134
      %p136 = scmp.eq.s32.totalorder %s31, 0
      %p137 = por %p135, %p136
      %s139 = sadd.s32 %s138, 1
      %p142 = scmp.eq.s32.totalorder %s25, 3
      %p143 = scmp.ne.s32.totalorder %s138, %s140
      %p144 = scmp.eq.s32.totalorder %s25, 0
      %p145 = por %p143, %p144
      %p146 = scmp.ne.s32.totalorder %s138, %s140
      %p147 = scmp.eq.s32.totalorder %s30, 3
      %p148 = por %p146, %p147
      %p149 = scmp.ne.s32.totalorder %s140, %s141
      %p150 = scmp.eq.s32.totalorder %s30, 0
      %p151 = por %p149, %p150
      %p152 = scmp.ne.s32.totalorder %s140, %s141
      %p153 = scmp.eq.s32.totalorder %s31, 3
      %p154 = por %p152, %p153
      %p156 = scmp.ne.s32.totalorder %s141, %s155
      %p157 = scmp.eq.s32.totalorder %s31, 0
      %p158 = por %p156, %p157
      %s160 = sadd.s32 %s159, 1
      %p163 = scmp.eq.s32.totalorder %s25, 3
      %p164 = scmp.ne.s32.totalorder %s159, %s161
      %p165 = scmp.eq.s32.totalorder %s25, 0
      %p166 = por %p164, %p165
      %p167 = scmp.ne.s32.totalorder %s159, %s161
      %p168 = scmp.eq.s32.totalorder %s30, 3
      %p169 = por %p167, %p168
      %p170 = scmp.ne.s32.totalorder %s161, %s162
      %p171 = scmp.eq.s32.totalorder %s30, 0
      %p172 = por %p170, %p171
      %p173 = scmp.ne.s32.totalorder %s161, %s162
      %p174 = scmp.eq.s32.totalorder %s31, 3
      %p175 = por %p173, %p174
      %p177 = scmp.ne.s32.totalorder %s162, %s176
      %p178 = scmp.eq.s32.totalorder %s31, 0
      %p179 = por %p177, %p178
      %s181 = sadd.s32 %s180, 1
      %p184 = scmp.eq.s32.totalorder %s25, 3
      %p185 = scmp.ne.s32.totalorder %s180, %s182
      %p186 = scmp.eq.s32.totalorder %s25, 0
      %p187 = por %p185, %p186
      %p188 = scmp.ne.s32.totalorder %s180, %s182
      %p189 = scmp.eq.s32.totalorder %s30, 3
      %p190 = por %p188, %p189
      %p191 = scmp.ne.s32.totalorder %s182, %s183
      %p192 = scmp.eq.s32.totalorder %s30, 0
      %p193 = por %p191, %p192
      %p194 = scmp.ne.s32.totalorder %s182, %s183
      %p195 = scmp.eq.s32.totalorder %s31, 3
      %p196 = por %p194, %p195
      %p198 = scmp.ne.s32.totalorder %s183, %s197
      %p199 = scmp.eq.s32.totalorder %s31, 0
      %p200 = por %p198, %p199
      %s202 = sadd.s32 %s201, 1
      %p205 = scmp.eq.s32.totalorder %s25, 3
      %p206 = scmp.ne.s32.totalorder %s201, %s203
      %p207 = scmp.eq.s32.totalorder %s25, 0
      %p208 = por %p206, %p207
      %p209 = scmp.ne.s32.totalorder %s201, %s203
      %p210 = scmp.eq.s32.totalorder %s30, 3
      %p211 = por %p209, %p210
      %p212 = scmp.ne.s32.totalorder %s203, %s204
      %p213 = scmp.eq.s32.totalorder %s30, 0
      %p214 = por %p212, %p213
      %p215 = scmp.ne.s32.totalorder %s203, %s204
      %p216 = scmp.eq.s32.totalorder %s31, 3
      %p217 = por %p215, %p216
      %p219 = scmp.ne.s32.totalorder %s204, %s218
      %p220 = scmp.eq.s32.totalorder %s31, 0
      %p221 = por %p219, %p220
      %p222 = scmp.le.s32.totalorder 1, %s25
      %p223 = scmp.lt.s32.totalorder %s25, 5
      %p224 = pnand %p222, %p223
      %p225 = pneg %p224
      // Predicated region
      $region9: #{_run_impl.1} parent=5 // pred_check
        _
      $region10: #{_run_impl.1} parent=5 // pred_check_branch
        %227 = sbr.rel (%p224) target = $region12
      $region11: #{_run_impl.1} parent=5 // pred_region
        %s228 = ssub.s32 %s25, 1
        // Predicated region
        $region13: #{_run_impl.1} parent=11 // pred_check
          %p229 = pneg %p46
        $region14: #{_run_impl.1} parent=11 // pred_check_branch
          %231 = sbr.rel (%p229) target = $region16
        $region15: #{_run_impl.1} parent=11 // pred_region
          _
        $region16: #{_run_impl.1} parent=11 // pred_fallthru
          _
        // Predicated region
        $region17: #{_run_impl.1} parent=11 // pred_check
          %p232 = pneg %p67
        $region18: #{_run_impl.1} parent=11 // pred_check_branch
          %234 = sbr.rel (%p232) target = $region20
        $region19: #{_run_impl.1} parent=11 // pred_region
          _
        $region20: #{_run_impl.1} parent=11 // pred_fallthru
          _
        // Predicated region
        $region21: #{_run_impl.1} parent=11 // pred_check
          %p235 = pneg %p88
        $region22: #{_run_impl.1} parent=11 // pred_check_branch
          %237 = sbr.rel (%p235) target = $region24
        $region23: #{_run_impl.1} parent=11 // pred_region
          _
        $region24: #{_run_impl.1} parent=11 // pred_fallthru
          _
        // Predicated region
        $region25: #{_run_impl.1} parent=11 // pred_check
          %p238 = pneg %p109
        $region26: #{_run_impl.1} parent=11 // pred_check_branch
          %240 = sbr.rel (%p238) target = $region28
        $region27: #{_run_impl.1} parent=11 // pred_region
          _
        $region28: #{_run_impl.1} parent=11 // pred_fallthru
          _
        // Predicated region
        $region29: #{_run_impl.1} parent=11 // pred_check
          %p241 = pneg %p130
        $region30: #{_run_impl.1} parent=11 // pred_check_branch
          %243 = sbr.rel (%p241) target = $region32
        $region31: #{_run_impl.1} parent=11 // pred_region
          _
        $region32: #{_run_impl.1} parent=11 // pred_fallthru
          _
        // Predicated region
        $region33: #{_run_impl.1} parent=11 // pred_check
          %p244 = pneg %p151
        $region34: #{_run_impl.1} parent=11 // pred_check_branch
          %246 = sbr.rel (%p244) target = $region36
        $region35: #{_run_impl.1} parent=11 // pred_region
          _
        $region36: #{_run_impl.1} parent=11 // pred_fallthru
          _
        // Predicated region
        $region37: #{_run_impl.1} parent=11 // pred_check
          %p247 = pneg %p172
        $region38: #{_run_impl.1} parent=11 // pred_check_branch
          %249 = sbr.rel (%p247) target = $region40
        $region39: #{_run_impl.1} parent=11 // pred_region
          _
        $region40: #{_run_impl.1} parent=11 // pred_fallthru
          _
      $region12: #{_run_impl.1} parent=5 // pred_fallthru
        _
      %p250 = scmp.lt.s32.totalorder %s25, 4
      // Predicated region
      $region41: #{_run_impl.1} parent=5 // pred_check
        %p251 = pneg %p250
      $region42: #{_run_impl.1} parent=5 // pred_check_branch
        %253 = sbr.rel (%p251) target = $region44
      $region43: #{_run_impl.1} parent=5 // pred_region
        _
      $region44: #{_run_impl.1} parent=5 // pred_fallthru
        _
      %p254 = scmp.le.s32.totalorder 1, %s25
      %p255 = scmp.lt.s32.totalorder %s25, 5
      %p256 = pnand %p254, %p255
      %p257 = pneg %p256
      // Predicated region
      $region45: #{_run_impl.1} parent=5 // pred_check
        _
      $region46: #{_run_impl.1} parent=5 // pred_check_branch
        %259 = sbr.rel (%p256) target = $region48
      $region47: #{_run_impl.1} parent=5 // pred_region
        %s260 = ssub.s32 %s25, 1
        %p261 = pneg %p46
        %p262 = pneg %p43
        %p263 = pneg %p67
        %p264 = pneg %p64
        %p265 = pneg %p88
        %p266 = pneg %p85
        %p267 = pneg %p109
        %p268 = pneg %p106
        %p269 = pneg %p130
        %p270 = pneg %p127
        %p271 = pneg %p151
        %p272 = pneg %p148
        %p273 = pneg %p172
        %p274 = pneg %p169
        %p275 = pneg %p193
        %p276 = pneg %p190
        %p277 = pneg %p214
        %p278 = pneg %p211
        %v279 = vld [vmem:[%s3] sm:$0xff]
        %v280 = vld [vmem:[%s3 + $0x8] sm:$0xff]
        %v281 = vld [vmem:[%s3 + $0x10] sm:$0xff]
        %v282 = vld [vmem:[%s3 + $0x18] sm:$0xff]
        %v283 = vld [vmem:[%s4] sm:$0xff]
        %v284 = vld [vmem:[%s5] sm:$0xff]
        %v285 = vld [vmem:[%s5 + $0x8] sm:$0xff]
        %v286 = vld [vmem:[%s5 + $0x10] sm:$0xff]
        %v287 = vld [vmem:[%s5 + $0x18] sm:$0xff]
        %v288 = vld [vmem:[%s6] sm:$0xff]
        %v289 = vld [vmem:[%s6 + $0x8] sm:$0xff]
        %v290 = vld [vmem:[%s6 + $0x10] sm:$0xff]
        %v291 = vld [vmem:[%s6 + $0x18] sm:$0xff]
        %v292 = vld [vmem:[%s7] sm:$0x1]
        %v293 = vlaneseq
        %v294 = vand.u32 %v293, 127
        %p295 = scmp.eq.s32.totalorder %s30, 0
        // Predicated region
        $region49: #{_run_impl.1} parent=47 // pred_check
          %p296 = pneg %p295
        $region50: #{_run_impl.1} parent=47 // pred_check_branch
          %298 = sbr.rel (%p296) target = $region52
        $region51: #{_run_impl.1} parent=47 // pred_region
          %v299 = vld [vmem:[%s1] sm:$0xff]
          %v300 = vld [vmem:[%s1 + $0x8] sm:$0xff]
          %301 = vst [vmem:[#allocation2] sm:$0xff] %v299
          %302 = vst [vmem:[#allocation2 + $0x8] sm:$0xff] %v300
          %v303 = vld [vmem:[%s1] sm:$0xff]
          %v304 = vld [vmem:[%s1 + $0x8] sm:$0xff]
          %305 = vst [vmem:[#allocation4] sm:$0xff] %v303
          %306 = vst [vmem:[#allocation4 + $0x8] sm:$0xff] %v304
          %307 = vst [vmem:[#allocation5] sm:$0xff] 0.0
          %vm308 = vcmask 0
          %309 = vst.msk [vmem:[#allocation6] sm:$0x1] %vm308, 0.0
          %310 = vst.msk [vmem:[#allocation8] sm:$0x1] %vm308, 0.0
          %311 = vst.msk [vmem:[#allocation8 + $0x1] sm:$0x1] %vm308, 0.0
          %312 = vst.msk [vmem:[#allocation7] sm:$0x1] %vm308, inf
          %313 = vst.msk [vmem:[#allocation7 + $0x1] sm:$0x1] %vm308, inf
          %s314 = sld [smem:[#allocation10]]
          %v315 = vstv %s314
          %vm316 = vcmp.eq.s32.totalorder %v294, %v315
          %v317 = vsel %vm316, 1, 0
          %v318 = vcvt.s32.f32 %v317
          %v319 = vld [vmem:[%s1] sm:$0xff]
          %321 = vset.pattern.permute.xlu0 0
          %322 = vperm.xlu0 %321, %v284
          %v323 = vpop.permute.xlu0 %322
          %326 = vset.pattern.permute.xlu0 0
          %327 = vperm.xlu0 %326, %v285
          %v328 = vpop.permute.xlu0 %327
          %331 = vset.pattern.permute.xlu0 0
          %332 = vperm.xlu0 %331, %v286
          %v333 = vpop.permute.xlu0 %332
          %336 = vset.pattern.permute.xlu0 0
          %337 = vperm.xlu0 %336, %v287
          %v338 = vpop.permute.xlu0 %337
          %vm340 = vcmask 64512
          %v342 = vsel %vm340, %v279, 0
          %v345 = vsel %vm340, %v280, 0
          %v348 = vsel %vm340, %v281, 0
          %v351 = vsel %vm340, %v282, 0
          %353 = vmatpush.msra.mxu0 0.0
          %354 = vmatpush.msra.mxu0 0.0
          %355 = vmatpush.msra.mxu0 0.0
          %356 = vmatpush.msra.mxu0 0.0
          %357 = vmatpush.msra.mxu0 0.0
          %358 = vmatpush.msra.mxu0 0.0
          %359 = vmatpush.msra.mxu0 0.0
          %360 = vmatpush.msra.mxu0 0.0
          %361 = vmatpush.msra.mxu0 0.0
          %362 = vmatpush.msra.mxu0 0.0
          %363 = vmatpush.msra.mxu0 0.0
          %364 = vmatpush.msra.mxu0 0.0
          %365 = vmatpush.msra.mxu0 0.0
          %366 = vmatpush.msra.mxu0 0.0
          %367 = vmatpush.msra.mxu0 0.0
          %368 = vmatpush.msra.mxu0 %v319
          %369 = vmatmul.f32.gmra.mxu0 %v342
          %v370 = vpop.f32.mrf.mxu0
          %v371 = vadd.f32 %v323, %v370
          %372 = vmatmul.f32.gmra.mxu0 %v345
          %v373 = vpop.f32.mrf.mxu0
          %v374 = vadd.f32 %v328, %v373
          %375 = vmatmul.f32.gmra.mxu0 %v348
          %v376 = vpop.f32.mrf.mxu0
          %v377 = vadd.f32 %v333, %v376
          %378 = vmatmul.f32.gmra.mxu0 %v351
          %v379 = vpop.f32.mrf.mxu0
          %v380 = vadd.f32 %v338, %v379
          %381 = vdwg.mxu0
          %v382 = vmax.f32 %v371, 0.0
          %v383 = vmax.f32 %v374, 0.0
          %v384 = vmax.f32 %v377, 0.0
          %v385 = vmax.f32 %v380, 0.0
          %386 = vmax.xlane.f32.xlu0 %v382
          %v387 = vpop.xlane.xlu0 %386
          %388 = vmax.xlane.f32.xlu0 %v383
          %v389 = vpop.xlane.xlu0 %388
          %390 = vmax.xlane.f32.xlu0 %v384
          %v391 = vpop.xlane.xlu0 %390
          %392 = vmax.xlane.f32.xlu0 %v385
          %v393 = vpop.xlane.xlu0 %392
          %v394 = vmul.f32 %v387, %v288
          %v395 = vmul.f32 %v389, %v289
          %v396 = vmul.f32 %v391, %v290
          %v397 = vmul.f32 %v393, %v291
          %v398 = vadd.f32 %v394, %v395
          %v399 = vadd.f32 %v398, %v396
          %v400 = vadd.f32 %v399, %v397
          %v401 = vrot.slane %v400, 4
          %v402 = vadd.f32 %v400, %v401
          %v403 = vrot.slane %v402, 2
          %v404 = vadd.f32 %v402, %v403
          %v405 = vrot.slane %v404, 1
          %v406 = vadd.f32 %v404, %v405
          %v407 = vadd.f32 %v406, %v292
          %v408 = vmul.f32 %v407, %v318
          %vm409 = vcmask 1040384
          %v410 = vsel %vm409, %v408, 0.0
          %411 = vadd.xlane.f32.xlu0 %v410
          %v412 = vpop.xlane.xlu0 %411
          %v413 = vmul.f32 %v318, 1e+10
          %v414 = vsub.f32 %v407, %v413
          %v415 = vsel %vm409, %v414, -inf
          %416 = vmax.xlane.f32.xlu0 %v415
          %v417 = vpop.xlane.xlu0 %416
          %vm418 = vcmp.ge.f32.partialorder %v414, %v417
          %v419 = vsel %vm418, %v294, 128
          %v420 = vsel %vm409, %v419, 2147483647
          %v421 = vand.u32 %v420, 65535
          %v422 = vshra.s32 %v420, 16
          %v423 = vcvt.s32.f32 %v421
          %v424 = vcvt.s32.f32 %v422
          %425 = vmin.xlane.f32.xlu0 %v424
          %v426 = vpop.xlane.xlu0 %425
          %vm427 = vcmp.eq.f32.partialorder %v424, %v426
          %v428 = vsel %vm427, %v423, inf
          %429 = vmin.xlane.f32.xlu0 %v428
          %v430 = vpop.xlane.xlu0 %429
          %v431 = vcvt.f32.s32 %v430
          %v432 = vcvt.f32.s32 %v426
          %v433 = vshll.u32 %v432, 16
          %v434 = vadd.s32 %v433, %v431
          %vm435 = vcmp.eq.s32.totalorder %v294, %v434
          %v436 = vsel %vm435, 1, 0
          %v437 = vcvt.s32.f32 %v436
          %v438 = vsub.f32 %v412, %v417
          %vm439 = vcmp.gt.f32.partialorder %v438, 0.0
          %v440 = vsel %vm439, 1, 0
          %v441 = vcvt.s32.f32 %v440
          %v442 = vsub.f32 %v318, %v437
          %v443 = vmul.f32 %v441, %v442
          %v444 = vperm.slane %v443, 0
          %v445 = vmul.f32 %v288, %v444
          %v446 = vmul.f32 %v289, %v444
          %v447 = vmul.f32 %v290, %v444
          %v448 = vmul.f32 %v291, %v444
          %449 = vadd.xlane.f32.xlu0 %v445
          %v450 = vpop.xlane.xlu0 %449
          %451 = vadd.xlane.f32.xlu0 %v446
          %v452 = vpop.xlane.xlu0 %451
          %453 = vadd.xlane.f32.xlu0 %v447
          %v454 = vpop.xlane.xlu0 %453
          %455 = vadd.xlane.f32.xlu0 %v448
          %v456 = vpop.xlane.xlu0 %455
          %vm457 = vcmp.ge.f32.partialorder %v382, %v387
          %vm458 = vcmp.ge.f32.partialorder %v383, %v389
          %vm459 = vcmp.ge.f32.partialorder %v384, %v391
          %vm460 = vcmp.ge.f32.partialorder %v385, %v393
          %vm461 = vcmp.gt.f32.partialorder %v371, 0.0
          %vm462 = vcmp.gt.f32.partialorder %v374, 0.0
          %vm463 = vcmp.gt.f32.partialorder %v377, 0.0
          %vm464 = vcmp.gt.f32.partialorder %v380, 0.0
          %vm465 = vmand %vm457, %vm461
          %vm466 = vmand %vm458, %vm462
          %vm467 = vmand %vm459, %vm463
          %vm468 = vmand %vm460, %vm464
          %v469 = vsel %vm465, 1, 0
          %v470 = vsel %vm466, 1, 0
          %v471 = vsel %vm467, 1, 0
          %v472 = vsel %vm468, 1, 0
          %v473 = vcvt.s32.f32 %v469
          %v474 = vcvt.s32.f32 %v470
          %v475 = vcvt.s32.f32 %v471
          %v476 = vcvt.s32.f32 %v472
          %v477 = vmul.f32 %v450, %v473
          %v478 = vmul.f32 %v452, %v474
          %v479 = vmul.f32 %v454, %v475
          %v480 = vmul.f32 %v456, %v476
          %vm481 = vcmask 261120
          %v483 = vsel %vm481, %v283, 0
          %485 = vmatpush.msra.mxu0 0.0
          %486 = vmatpush.msra.mxu0 0.0
          %487 = vmatpush.msra.mxu0 0.0
          %488 = vmatpush.msra.mxu0 0.0
          %489 = vmatpush.msra.mxu0 0.0
          %490 = vmatpush.msra.mxu0 0.0
          %491 = vmatpush.msra.mxu0 0.0
          %492 = vmatpush.msra.mxu0 0.0
          %493 = vmatpush.msra.mxu0 0.0
          %494 = vmatpush.msra.mxu0 0.0
          %495 = vmatpush.msra.mxu0 0.0
          %496 = vmatpush.msra.mxu0 0.0
          %497 = vmatpush.msra.mxu0 %v480
          %498 = vmatpush.msra.mxu0 %v479
          %499 = vmatpush.msra.mxu0 %v478
          %500 = vmatpush.msra.mxu0 %v477
          %501 = vmatmul.f32.gmra.mxu0 %v483
          %v502 = vpop.f32.mrf.mxu0
          %v503 = vadd.f32 0.0, %v502
          %504 = vdwg.mxu0
          %505 = vst [vmem:[#allocation3] sm:$0xff] %v503
          %s506 = sld [smem:[#allocation10 + $0x1]]
          %v507 = vstv %s506
          %vm508 = vcmp.eq.s32.totalorder %v294, %v507
          %v509 = vsel %vm508, 1, 0
          %v510 = vcvt.s32.f32 %v509
          %s511 = scalar_lea.vmem %s1, 8
          %v512 = vld [vmem:[%s511] sm:$0xff]
          %513 = vmatpush.msra.mxu0 0.0
          %514 = vmatpush.msra.mxu0 0.0
          %515 = vmatpush.msra.mxu0 0.0
          %516 = vmatpush.msra.mxu0 0.0
          %517 = vmatpush.msra.mxu0 0.0
          %518 = vmatpush.msra.mxu0 0.0
          %519 = vmatpush.msra.mxu0 0.0
          %520 = vmatpush.msra.mxu0 0.0
          %521 = vmatpush.msra.mxu0 0.0
          %522 = vmatpush.msra.mxu0 0.0
          %523 = vmatpush.msra.mxu0 0.0
          %524 = vmatpush.msra.mxu0 0.0
          %525 = vmatpush.msra.mxu0 0.0
          %526 = vmatpush.msra.mxu0 0.0
          %527 = vmatpush.msra.mxu0 0.0
          %528 = vmatpush.msra.mxu0 %v512
          %529 = vmatmul.f32.gmra.mxu0 %v342
          %v530 = vpop.f32.mrf.mxu0
          %v531 = vadd.f32 %v323, %v530
          %532 = vmatmul.f32.gmra.mxu0 %v345
          %v533 = vpop.f32.mrf.mxu0
          %v534 = vadd.f32 %v328, %v533
          %535 = vmatmul.f32.gmra.mxu0 %v348
          %v536 = vpop.f32.mrf.mxu0
          %v537 = vadd.f32 %v333, %v536
          %538 = vmatmul.f32.gmra.mxu0 %v351
          %v539 = vpop.f32.mrf.mxu0
          %v540 = vadd.f32 %v338, %v539
          %541 = vdwg.mxu0
          %v542 = vmax.f32 %v531, 0.0
          %v543 = vmax.f32 %v534, 0.0
          %v544 = vmax.f32 %v537, 0.0
          %v545 = vmax.f32 %v540, 0.0
          %546 = vmax.xlane.f32.xlu0 %v542
          %v547 = vpop.xlane.xlu0 %546
          %548 = vmax.xlane.f32.xlu0 %v543
          %v549 = vpop.xlane.xlu0 %548
          %550 = vmax.xlane.f32.xlu0 %v544
          %v551 = vpop.xlane.xlu0 %550
          %552 = vmax.xlane.f32.xlu0 %v545
          %v553 = vpop.xlane.xlu0 %552
          %v554 = vmul.f32 %v547, %v288
          %v555 = vmul.f32 %v549, %v289
          %v556 = vmul.f32 %v551, %v290
          %v557 = vmul.f32 %v553, %v291
          %v558 = vadd.f32 %v554, %v555
          %v559 = vadd.f32 %v558, %v556
          %v560 = vadd.f32 %v559, %v557
          %v561 = vrot.slane %v560, 4
          %v562 = vadd.f32 %v560, %v561
          %v563 = vrot.slane %v562, 2
          %v564 = vadd.f32 %v562, %v563
          %v565 = vrot.slane %v564, 1
          %v566 = vadd.f32 %v564, %v565
          %v567 = vadd.f32 %v566, %v292
          %v568 = vmul.f32 %v567, %v510
          %v569 = vsel %vm409, %v568, 0.0
          %570 = vadd.xlane.f32.xlu0 %v569
          %v571 = vpop.xlane.xlu0 %570
          %v572 = vmul.f32 %v510, 1e+10
          %v573 = vsub.f32 %v567, %v572
          %v574 = vsel %vm409, %v573, -inf
          %575 = vmax.xlane.f32.xlu0 %v574
          %v576 = vpop.xlane.xlu0 %575
          %vm577 = vcmp.ge.f32.partialorder %v573, %v576
          %v578 = vsel %vm577, %v294, 128
          %v579 = vsel %vm409, %v578, 2147483647
          %v580 = vand.u32 %v579, 65535
          %v581 = vshra.s32 %v579, 16
          %v582 = vcvt.s32.f32 %v580
          %v583 = vcvt.s32.f32 %v581
          %584 = vmin.xlane.f32.xlu0 %v583
          %v585 = vpop.xlane.xlu0 %584
          %vm586 = vcmp.eq.f32.partialorder %v583, %v585
          %v587 = vsel %vm586, %v582, inf
          %588 = vmin.xlane.f32.xlu0 %v587
          %v589 = vpop.xlane.xlu0 %588
          %v590 = vcvt.f32.s32 %v589
          %v591 = vcvt.f32.s32 %v585
          %v592 = vshll.u32 %v591, 16
          %v593 = vadd.s32 %v592, %v590
          %vm594 = vcmp.eq.s32.totalorder %v294, %v593
          %v595 = vsel %vm594, 1, 0
          %v596 = vcvt.s32.f32 %v595
          %v597 = vsub.f32 %v571, %v576
          %vm598 = vcmp.gt.f32.partialorder %v597, 0.0
          %v599 = vsel %vm598, 1, 0
          %v600 = vcvt.s32.f32 %v599
          %v601 = vsub.f32 %v510, %v596
          %v602 = vmul.f32 %v600, %v601
          %v603 = vperm.slane %v602, 0
          %v604 = vmul.f32 %v288, %v603
          %v605 = vmul.f32 %v289, %v603
          %v606 = vmul.f32 %v290, %v603
          %v607 = vmul.f32 %v291, %v603
          %608 = vadd.xlane.f32.xlu0 %v604
          %v609 = vpop.xlane.xlu0 %608
          %610 = vadd.xlane.f32.xlu0 %v605
          %v611 = vpop.xlane.xlu0 %610
          %612 = vadd.xlane.f32.xlu0 %v606
          %v613 = vpop.xlane.xlu0 %612
          %614 = vadd.xlane.f32.xlu0 %v607
          %v615 = vpop.xlane.xlu0 %614
          %vm616 = vcmp.ge.f32.partialorder %v542, %v547
          %vm617 = vcmp.ge.f32.partialorder %v543, %v549
          %vm618 = vcmp.ge.f32.partialorder %v544, %v551
          %vm619 = vcmp.ge.f32.partialorder %v545, %v553
          %vm620 = vcmp.gt.f32.partialorder %v531, 0.0
          %vm621 = vcmp.gt.f32.partialorder %v534, 0.0
          %vm622 = vcmp.gt.f32.partialorder %v537, 0.0
          %vm623 = vcmp.gt.f32.partialorder %v540, 0.0
          %vm624 = vmand %vm616, %vm620
          %vm625 = vmand %vm617, %vm621
          %vm626 = vmand %vm618, %vm622
          %vm627 = vmand %vm619, %vm623
          %v628 = vsel %vm624, 1, 0
          %v629 = vsel %vm625, 1, 0
          %v630 = vsel %vm626, 1, 0
          %v631 = vsel %vm627, 1, 0
          %v632 = vcvt.s32.f32 %v628
          %v633 = vcvt.s32.f32 %v629
          %v634 = vcvt.s32.f32 %v630
          %v635 = vcvt.s32.f32 %v631
          %v636 = vmul.f32 %v609, %v632
          %v637 = vmul.f32 %v611, %v633
          %v638 = vmul.f32 %v613, %v634
          %v639 = vmul.f32 %v615, %v635
          %640 = vmatpush.msra.mxu0 0.0
          %641 = vmatpush.msra.mxu0 0.0
          %642 = vmatpush.msra.mxu0 0.0
          %643 = vmatpush.msra.mxu0 0.0
          %644 = vmatpush.msra.mxu0 0.0
          %645 = vmatpush.msra.mxu0 0.0
          %646 = vmatpush.msra.mxu0 0.0
          %647 = vmatpush.msra.mxu0 0.0
          %648 = vmatpush.msra.mxu0 0.0
          %649 = vmatpush.msra.mxu0 0.0
          %650 = vmatpush.msra.mxu0 0.0
          %651 = vmatpush.msra.mxu0 0.0
          %652 = vmatpush.msra.mxu0 %v639
          %653 = vmatpush.msra.mxu0 %v638
          %654 = vmatpush.msra.mxu0 %v637
          %655 = vmatpush.msra.mxu0 %v636
          %656 = vmatmul.f32.gmra.mxu0 %v483
          %v657 = vpop.f32.mrf.mxu0
          %v658 = vadd.f32 0.0, %v657
          %659 = vdwg.mxu0
          %s660 = scalar_lea.vmem [#allocation3], 8
          %661 = vst [vmem:[%s660] sm:$0xff] %v658
        $region52: #{_run_impl.1} parent=47 // pred_fallthru
          _
        %v662 = vld [vmem:[#allocation6] sm:$0x1]
        %s663 = sld [smem:[#allocation10]]
        %v664 = vstv %s663
        %vm665 = vcmp.eq.s32.totalorder %v294, %v664
        %v666 = vsel %vm665, 1, 0
        %v667 = vcvt.s32.f32 %v666
        %v668 = vld [vmem:[#allocation2] sm:$0xff]
        %v669 = vld [vmem:[%s1] sm:$0xff]
        %v670 = vld [vmem:[%s2] sm:$0xff]
        %v671 = vld [vmem:[#allocation3] sm:$0xff]
        %v672 = vmul.f32 %v670, %v670
        %v674 = vrot.slane %v672, 1
        %v676 = vadd.f32 %v672, %v674
        %vm677 = vcmp.gt.f32.partialorder %v676, 1e-12
        %v678 = vmax.f32 %v676, 1e-20
        %v679 = vrsqrt.pop %v678
        %v680 = vmul.f32 %v679, %v678
        %v681 = vmul.f32 %v680, %v679
        %v682 = vmul.f32 0.5, %v681
        %v683 = vsub.f32 1.5, %v682
        %v684 = vmul.f32 %v679, %v683
        %vm685 = vweird.f32 %v678
        %vm686 = vweird.f32 %v679
        %vm687 = vmor %vm685, %vm686
        %v688 = vsel %vm687, %v679, %v684
        %v689 = vsub.f32 0.0, %v670
        %v691 = vrot.slane %v688, 7
        %v693 = vmul.f32 %v689, %v691
        %v695 = vrot.slane %v693, 1
        %v697 = vsel %vm677, %v695, 1.0
        %v698 = vmul.f32 %v670, %v688
        %v699 = vsel %vm677, %v698, 0.0
        %v701 = vrot.slane %v699, 6
        %v703 = vmul.f32 %v689, %v701
        %v705 = vrot.slane %v697, 6
        %v707 = vmul.f32 %v670, %v705
        %v708 = vmul.f32 %v670, %v699
        %v709 = vrot.slane %v697, 7
        %v711 = vmul.f32 %v670, %v709
        %v713 = vrot.slane %v711, 1
        %v715 = vsub.f32 %v708, %v713
        %v716 = vmul.f32 %v668, %v670
        %v717 = vrot.slane %v716, 4
        %v718 = vadd.f32 %v716, %v717
        %v719 = vrot.slane %v718, 2
        %v720 = vadd.f32 %v718, %v719
        %v721 = vrot.slane %v720, 1
        %v722 = vadd.f32 %v720, %v721
        %v723 = vmul.f32 %v722, %v670
        %v724 = vsub.f32 %v668, %v723
        %v725 = vmul.f32 %v697, %v724
        %v727 = vrot.slane %v724, 1
        %v729 = vmul.f32 %v699, %v727
        %v730 = vadd.f32 %v725, %v729
        %v731 = vmul.f32 %v724, 0.0
        %v733 = vrot.slane %v731, 2
        %v735 = vadd.f32 %v730, %v733
        %v736 = vrot.slane %v724, 6
        %v738 = vmul.f32 %v703, %v736
        %v739 = vrot.slane %v724, 7
        %v741 = vmul.f32 %v707, %v739
        %v742 = vadd.f32 %v738, %v741
        %v743 = vrot.slane %v724, 2
        %v745 = vmul.f32 %v715, %v743
        %v747 = vrot.slane %v745, 6
        %v749 = vadd.f32 %v742, %v747
        %v750 = vmul.f32 %v670, %v724
        %v752 = vrot.slane %v750, 1
        %v754 = vadd.f32 %v750, %v752
        %v755 = vrot.slane %v750, 2
        %v757 = vadd.f32 %v754, %v755
        %v758 = vmul.f32 %v697, %v671
        %v760 = vrot.slane %v671, 1
        %v762 = vmul.f32 %v699, %v760
        %v763 = vadd.f32 %v758, %v762
        %v764 = vmul.f32 %v671, 0.0
        %v766 = vrot.slane %v764, 2
        %v768 = vadd.f32 %v763, %v766
        %v769 = vrot.slane %v671, 6
        %v771 = vmul.f32 %v703, %v769
        %v772 = vrot.slane %v671, 7
        %v774 = vmul.f32 %v707, %v772
        %v775 = vadd.f32 %v771, %v774
        %v776 = vrot.slane %v671, 2
        %v778 = vmul.f32 %v715, %v776
        %v780 = vrot.slane %v778, 6
        %v782 = vadd.f32 %v775, %v780
        %v783 = vmul.f32 %v768, %v768
        %v784 = vmul.f32 %v782, %v782
        %v786 = vrot.slane %v784, 2
        %v788 = vadd.f32 %v783, %v786
        %vm789 = vcmask 1040384
        %v790 = vsel %vm789, %v788, 0.0
        %791 = vadd.xlane.f32.xlu0 %v790
        %v792 = vpop.xlane.xlu0 %791
        %v793 = vrot.slane %v792, 4
        %v794 = vadd.f32 %v792, %v793
        %v795 = vrot.slane %v794, 2
        %v796 = vadd.f32 %v794, %v795
        %v797 = vrot.slane %v796, 1
        %v798 = vadd.f32 %v796, %v797
        %s799 = vtos %v798
        %v800 = vstv %s799
        %v801 = vmax.f32 %v800, 1e-18
        %v802 = vrsqrt.pop %v801
        %v803 = vmul.f32 %v802, %v801
        %v804 = vmul.f32 %v803, %v802
        %v805 = vmul.f32 0.5, %v804
        %v806 = vsub.f32 1.5, %v805
        %v807 = vmul.f32 %v802, %v806
        %vm808 = vweird.f32 %v801
        %vm809 = vweird.f32 %v802
        %vm810 = vmor %vm808, %vm809
        %v811 = vsel %vm810, %v802, %v807
        %v812 = vmul.f32 %v811, 0.3879794
        %v813 = vmul.f32 %v812, %v768
        %v814 = vsub.f32 %v735, %v813
        %v815 = vmul.f32 %v812, %v782
        %v816 = vsub.f32 %v749, %v815
        %v817 = vmul.f32 %v697, %v814
        %v818 = vmul.f32 %v703, %v816
        %v820 = vrot.slane %v818, 2
        %v822 = vadd.f32 %v817, %v820
        %v823 = vmul.f32 %v670, %v757
        %v824 = vadd.f32 %v822, %v823
        %v825 = vadd.f32 %v824, %v723
        %v826 = vmul.f32 %v699, %v814
        %v827 = vmul.f32 %v707, %v816
        %v829 = vrot.slane %v827, 2
        %v831 = vadd.f32 %v826, %v829
        %v833 = vrot.slane %v757, 7
        %v835 = vmul.f32 %v670, %v833
        %v837 = vrot.slane %v835, 1
        %v839 = vadd.f32 %v831, %v837
        %v841 = vrot.slane %v723, 1
        %v843 = vadd.f32 %v839, %v841
        %v844 = vmul.f32 %v814, 0.0
        %v846 = vrot.slane %v816, 2
        %v848 = vmul.f32 %v715, %v846
        %v849 = vadd.f32 %v844, %v848
        %v850 = vrot.slane %v757, 6
        %v852 = vmul.f32 %v670, %v850
        %v854 = vrot.slane %v852, 2
        %v856 = vadd.f32 %v849, %v854
        %v857 = vrot.slane %v723, 2
        %v859 = vadd.f32 %v856, %v857
        %v860 = vsub.f32 %v825, %v669
        %v862 = vrot.slane %v669, 1
        %v864 = vsub.f32 %v843, %v862
        %v865 = vrot.slane %v669, 2
        %v867 = vsub.f32 %v859, %v865
        %v868 = vmul.f32 %v860, %v860
        %v869 = vmul.f32 %v864, %v864
        %v870 = vadd.f32 %v868, %v869
        %v871 = vmul.f32 %v867, %v867
        %v872 = vadd.f32 %v870, %v871
        %v873 = vmax.f32 %v872, 1e-18
        %v874 = vrsqrt.pop %v873
        %v875 = vmul.f32 %v874, %v873
        %v876 = vmul.f32 %v875, %v874
        %v877 = vmul.f32 0.5, %v876
        %v878 = vsub.f32 1.5, %v877
        %v879 = vmul.f32 %v874, %v878
        %vm880 = vweird.f32 %v873
        %vm881 = vweird.f32 %v874
        %vm882 = vmor %vm880, %vm881
        %v883 = vsel %vm882, %v874, %v879
        %v884 = vmul.f32 %v883, 0.16
        %v885 = vmin.f32 %v884, 1.0
        %v886 = vmul.f32 %v860, %v885
        %v887 = vadd.f32 %v669, %v886
        %888 = vst [vmem:[#allocation5] sm:$0x1] %v887
        %v889 = vmul.f32 %v864, %v885
        %v891 = vrot.slane %v889, 7
        %v893 = vadd.f32 %v669, %v891
        %894 = vst [vmem:[#allocation5] sm:$0x2] %v893
        %v895 = vmul.f32 %v867, %v885
        %v897 = vrot.slane %v895, 6
        %v899 = vadd.f32 %v669, %v897
        %900 = vst [vmem:[#allocation5] sm:$0x4] %v899
        %v901 = vld [vmem:[#allocation5] sm:$0xff]
        %903 = vset.pattern.permute.xlu0 0
        %904 = vperm.xlu0 %903, %v284
        %v905 = vpop.permute.xlu0 %904
        %908 = vset.pattern.permute.xlu0 0
        %909 = vperm.xlu0 %908, %v285
        %v910 = vpop.permute.xlu0 %909
        %913 = vset.pattern.permute.xlu0 0
        %914 = vperm.xlu0 %913, %v286
        %v915 = vpop.permute.xlu0 %914
        %918 = vset.pattern.permute.xlu0 0
        %919 = vperm.xlu0 %918, %v287
        %v920 = vpop.permute.xlu0 %919
        %vm922 = vcmask 64512
        %v924 = vsel %vm922, %v279, 0
        %v927 = vsel %vm922, %v280, 0
        %v930 = vsel %vm922, %v281, 0
        %v933 = vsel %vm922, %v282, 0
        %935 = vmatpush.msra.mxu0 0.0
        %936 = vmatpush.msra.mxu0 0.0
        %937 = vmatpush.msra.mxu0 0.0
        %938 = vmatpush.msra.mxu0 0.0
        %939 = vmatpush.msra.mxu0 0.0
        %940 = vmatpush.msra.mxu0 0.0
        %941 = vmatpush.msra.mxu0 0.0
        %942 = vmatpush.msra.mxu0 0.0
        %943 = vmatpush.msra.mxu0 0.0
        %944 = vmatpush.msra.mxu0 0.0
        %945 = vmatpush.msra.mxu0 0.0
        %946 = vmatpush.msra.mxu0 0.0
        %947 = vmatpush.msra.mxu0 0.0
        %948 = vmatpush.msra.mxu0 0.0
        %949 = vmatpush.msra.mxu0 0.0
        %950 = vmatpush.msra.mxu0 %v901
        %951 = vmatmul.f32.gmra.mxu0 %v924
        %v952 = vpop.f32.mrf.mxu0
        %v953 = vadd.f32 %v905, %v952
        %954 = vmatmul.f32.gmra.mxu0 %v927
        %v955 = vpop.f32.mrf.mxu0
        %v956 = vadd.f32 %v910, %v955
        %957 = vmatmul.f32.gmra.mxu0 %v930
        %v958 = vpop.f32.mrf.mxu0
        %v959 = vadd.f32 %v915, %v958
        %960 = vmatmul.f32.gmra.mxu0 %v933
        %v961 = vpop.f32.mrf.mxu0
        %v962 = vadd.f32 %v920, %v961
        %963 = vdwg.mxu0
        %v964 = vmax.f32 %v953, 0.0
        %v965 = vmax.f32 %v956, 0.0
        %v966 = vmax.f32 %v959, 0.0
        %v967 = vmax.f32 %v962, 0.0
        %968 = vmax.xlane.f32.xlu0 %v964
        %v969 = vpop.xlane.xlu0 %968
        %970 = vmax.xlane.f32.xlu0 %v965
        %v971 = vpop.xlane.xlu0 %970
        %972 = vmax.xlane.f32.xlu0 %v966
        %v973 = vpop.xlane.xlu0 %972
        %974 = vmax.xlane.f32.xlu0 %v967
        %v975 = vpop.xlane.xlu0 %974
        %v976 = vmul.f32 %v969, %v288
        %v977 = vmul.f32 %v971, %v289
        %v978 = vmul.f32 %v973, %v290
        %v979 = vmul.f32 %v975, %v291
        %v980 = vadd.f32 %v976, %v977
        %v981 = vadd.f32 %v980, %v978
        %v982 = vadd.f32 %v981, %v979
        %v983 = vrot.slane %v982, 4
        %v984 = vadd.f32 %v982, %v983
        %v985 = vrot.slane %v984, 2
        %v986 = vadd.f32 %v984, %v985
        %v987 = vrot.slane %v986, 1
        %v988 = vadd.f32 %v986, %v987
        %v989 = vadd.f32 %v988, %v292
        %v990 = vmul.f32 %v989, %v667
        %v991 = vsel %vm789, %v990, 0.0
        %992 = vadd.xlane.f32.xlu0 %v991
        %v993 = vpop.xlane.xlu0 %992
        %v994 = vmul.f32 %v667, 1e+10
        %v995 = vsub.f32 %v989, %v994
        %v996 = vsel %vm789, %v995, -inf
        %997 = vmax.xlane.f32.xlu0 %v996
        %v998 = vpop.xlane.xlu0 %997
        %vm999 = vcmp.ge.f32.partialorder %v995, %v998
        %v1000 = vsel %vm999, %v294, 128
        %v1001 = vsel %vm789, %v1000, 2147483647
        %v1002 = vand.u32 %v1001, 65535
        %v1003 = vshra.s32 %v1001, 16
        %v1004 = vcvt.s32.f32 %v1002
        %v1005 = vcvt.s32.f32 %v1003
        %1006 = vmin.xlane.f32.xlu0 %v1005
        %v1007 = vpop.xlane.xlu0 %1006
        %vm1008 = vcmp.eq.f32.partialorder %v1005, %v1007
        %v1009 = vsel %vm1008, %v1004, inf
        %1010 = vmin.xlane.f32.xlu0 %v1009
        %v1011 = vpop.xlane.xlu0 %1010
        %v1012 = vcvt.f32.s32 %v1011
        %v1013 = vcvt.f32.s32 %v1007
        %v1014 = vshll.u32 %v1013, 16
        %v1015 = vadd.s32 %v1014, %v1012
        %vm1016 = vcmp.eq.s32.totalorder %v294, %v1015
        %v1017 = vsel %vm1016, 1, 0
        %v1018 = vcvt.s32.f32 %v1017
        %v1019 = vsub.f32 %v993, %v998
        %vm1020 = vcmp.gt.f32.partialorder %v1019, 0.0
        %v1021 = vsel %vm1020, 1, 0
        %v1022 = vcvt.s32.f32 %v1021
        %v1023 = vsub.f32 %v667, %v1018
        %v1024 = vmul.f32 %v1022, %v1023
        %vm1025 = vcmp.gt.f32.partialorder %v998, %v993
        %v1026 = vsel %vm1025, 1, 0
        %v1027 = vcvt.s32.f32 %v1026
        %v1028 = vperm.slane %v1024, 0
        %v1029 = vmul.f32 %v288, %v1028
        %v1030 = vmul.f32 %v289, %v1028
        %v1031 = vmul.f32 %v290, %v1028
        %v1032 = vmul.f32 %v291, %v1028
        %1033 = vadd.xlane.f32.xlu0 %v1029
        %v1034 = vpop.xlane.xlu0 %1033
        %1035 = vadd.xlane.f32.xlu0 %v1030
        %v1036 = vpop.xlane.xlu0 %1035
        %1037 = vadd.xlane.f32.xlu0 %v1031
        %v1038 = vpop.xlane.xlu0 %1037
        %1039 = vadd.xlane.f32.xlu0 %v1032
        %v1040 = vpop.xlane.xlu0 %1039
        %vm1041 = vcmp.ge.f32.partialorder %v964, %v969
        %vm1042 = vcmp.ge.f32.partialorder %v965, %v971
        %vm1043 = vcmp.ge.f32.partialorder %v966, %v973
        %vm1044 = vcmp.ge.f32.partialorder %v967, %v975
        %vm1045 = vcmp.gt.f32.partialorder %v953, 0.0
        %vm1046 = vcmp.gt.f32.partialorder %v956, 0.0
        %vm1047 = vcmp.gt.f32.partialorder %v959, 0.0
        %vm1048 = vcmp.gt.f32.partialorder %v962, 0.0
        %vm1049 = vmand %vm1041, %vm1045
        %vm1050 = vmand %vm1042, %vm1046
        %vm1051 = vmand %vm1043, %vm1047
        %vm1052 = vmand %vm1044, %vm1048
        %v1053 = vsel %vm1049, 1, 0
        %v1054 = vsel %vm1050, 1, 0
        %v1055 = vsel %vm1051, 1, 0
        %v1056 = vsel %vm1052, 1, 0
        %v1057 = vcvt.s32.f32 %v1053
        %v1058 = vcvt.s32.f32 %v1054
        %v1059 = vcvt.s32.f32 %v1055
        %v1060 = vcvt.s32.f32 %v1056
        %v1061 = vmul.f32 %v1034, %v1057
        %v1062 = vmul.f32 %v1036, %v1058
        %v1063 = vmul.f32 %v1038, %v1059
        %v1064 = vmul.f32 %v1040, %v1060
        %vm1065 = vcmask 261120
        %v1067 = vsel %vm1065, %v283, 0
        %1069 = vmatpush.msra.mxu0 0.0
        %1070 = vmatpush.msra.mxu0 0.0
        %1071 = vmatpush.msra.mxu0 0.0
        %1072 = vmatpush.msra.mxu0 0.0
        %1073 = vmatpush.msra.mxu0 0.0
        %1074 = vmatpush.msra.mxu0 0.0
        %1075 = vmatpush.msra.mxu0 0.0
        %1076 = vmatpush.msra.mxu0 0.0
        %1077 = vmatpush.msra.mxu0 0.0
        %1078 = vmatpush.msra.mxu0 0.0
        %1079 = vmatpush.msra.mxu0 0.0
        %1080 = vmatpush.msra.mxu0 0.0
        %1081 = vmatpush.msra.mxu0 %v1064
        %1082 = vmatpush.msra.mxu0 %v1063
        %1083 = vmatpush.msra.mxu0 %v1062
        %1084 = vmatpush.msra.mxu0 %v1061
        %1085 = vmatmul.f32.gmra.mxu0 %v1067
        %v1086 = vpop.f32.mrf.mxu0
        %v1087 = vadd.f32 0.0, %v1086
        %1088 = vdwg.mxu0
        %1089 = vmatpush.msra.mxu0 0.0
        %1090 = vmatpush.msra.mxu0 0.0
        %1091 = vmatpush.msra.mxu0 0.0
        %1092 = vmatpush.msra.mxu0 0.0
        %1093 = vmatpush.msra.mxu0 0.0
        %1094 = vmatpush.msra.mxu0 0.0
        %1095 = vmatpush.msra.mxu0 0.0
        %1096 = vmatpush.msra.mxu0 0.0
        %1097 = vmatpush.msra.mxu0 0.0
        %1098 = vmatpush.msra.mxu0 0.0
        %1099 = vmatpush.msra.mxu0 0.0
        %1100 = vmatpush.msra.mxu0 0.0
        %1101 = vmatpush.msra.mxu0 0.0
        %1102 = vmatpush.msra.mxu0 0.0
        %1103 = vmatpush.msra.mxu0 0.0
        %1104 = vmatpush.msra.mxu0 %v668
        %1105 = vmatmul.f32.gmra.mxu0 %v924
        %v1106 = vpop.f32.mrf.mxu0
        %v1107 = vadd.f32 %v905, %v1106
        %1108 = vmatmul.f32.gmra.mxu0 %v927
        %v1109 = vpop.f32.mrf.mxu0
        %v1110 = vadd.f32 %v910, %v1109
        %1111 = vmatmul.f32.gmra.mxu0 %v930
        %v1112 = vpop.f32.mrf.mxu0
        %v1113 = vadd.f32 %v915, %v1112
        %1114 = vmatmul.f32.gmra.mxu0 %v933
        %v1115 = vpop.f32.mrf.mxu0
        %v1116 = vadd.f32 %v920, %v1115
        %1117 = vdwg.mxu0
        %v1118 = vmax.f32 %v1107, 0.0
        %v1119 = vmax.f32 %v1110, 0.0
        %v1120 = vmax.f32 %v1113, 0.0
        %v1121 = vmax.f32 %v1116, 0.0
        %1122 = vmax.xlane.f32.xlu0 %v1118
        %v1123 = vpop.xlane.xlu0 %1122
        %1124 = vmax.xlane.f32.xlu0 %v1119
        %v1125 = vpop.xlane.xlu0 %1124
        %1126 = vmax.xlane.f32.xlu0 %v1120
        %v1127 = vpop.xlane.xlu0 %1126
        %1128 = vmax.xlane.f32.xlu0 %v1121
        %v1129 = vpop.xlane.xlu0 %1128
        %v1130 = vmul.f32 %v1123, %v288
        %v1131 = vmul.f32 %v1125, %v289
        %v1132 = vmul.f32 %v1127, %v290
        %v1133 = vmul.f32 %v1129, %v291
        %v1134 = vadd.f32 %v1130, %v1131
        %v1135 = vadd.f32 %v1134, %v1132
        %v1136 = vadd.f32 %v1135, %v1133
        %v1137 = vrot.slane %v1136, 4
        %v1138 = vadd.f32 %v1136, %v1137
        %v1139 = vrot.slane %v1138, 2
        %v1140 = vadd.f32 %v1138, %v1139
        %v1141 = vrot.slane %v1140, 1
        %v1142 = vadd.f32 %v1140, %v1141
        %v1143 = vadd.f32 %v1142, %v292
        %v1144 = vsel %vm789, %v1143, -inf
        %1145 = vmax.xlane.f32.xlu0 %v1144
        %v1146 = vpop.xlane.xlu0 %1145
        %v1147 = vsub.f32 %v1143, %v1146
        %v1148 = vmul.f32 %v1147, 1.442695
        %v1149 = vpow.pop %v1148
        %v1150 = vsel %vm789, %v1149, 0.0
        %1151 = vadd.xlane.f32.xlu0 %v1150
        %v1152 = vpop.xlane.xlu0 %1151
        %v1153 = vrcp.pop %v1152
        %v1154 = vmul.f32 %v1149, %v1153
        %v1155 = vsub.f32 %v667, %v1154
        %v1156 = vperm.slane %v1155, 0
        %v1157 = vmul.f32 %v288, %v1156
        %v1158 = vmul.f32 %v289, %v1156
        %v1159 = vmul.f32 %v290, %v1156
        %v1160 = vmul.f32 %v291, %v1156
        %1161 = vadd.xlane.f32.xlu0 %v1157
        %v1162 = vpop.xlane.xlu0 %1161
        %1163 = vadd.xlane.f32.xlu0 %v1158
        %v1164 = vpop.xlane.xlu0 %1163
        %1165 = vadd.xlane.f32.xlu0 %v1159
        %v1166 = vpop.xlane.xlu0 %1165
        %1167 = vadd.xlane.f32.xlu0 %v1160
        %v1168 = vpop.xlane.xlu0 %1167
        %vm1169 = vcmp.ge.f32.partialorder %v1118, %v1123
        %vm1170 = vcmp.ge.f32.partialorder %v1119, %v1125
        %vm1171 = vcmp.ge.f32.partialorder %v1120, %v1127
        %vm1172 = vcmp.ge.f32.partialorder %v1121, %v1129
        %vm1173 = vcmp.gt.f32.partialorder %v1107, 0.0
        %vm1174 = vcmp.gt.f32.partialorder %v1110, 0.0
        %vm1175 = vcmp.gt.f32.partialorder %v1113, 0.0
        %vm1176 = vcmp.gt.f32.partialorder %v1116, 0.0
        %vm1177 = vmand %vm1169, %vm1173
        %vm1178 = vmand %vm1170, %vm1174
        %vm1179 = vmand %vm1171, %vm1175
        %vm1180 = vmand %vm1172, %vm1176
        %v1181 = vsel %vm1177, 1, 0
        %v1182 = vsel %vm1178, 1, 0
        %v1183 = vsel %vm1179, 1, 0
        %v1184 = vsel %vm1180, 1, 0
        %v1185 = vcvt.s32.f32 %v1181
        %v1186 = vcvt.s32.f32 %v1182
        %v1187 = vcvt.s32.f32 %v1183
        %v1188 = vcvt.s32.f32 %v1184
        %v1189 = vmul.f32 %v1162, %v1185
        %v1190 = vmul.f32 %v1164, %v1186
        %v1191 = vmul.f32 %v1166, %v1187
        %v1192 = vmul.f32 %v1168, %v1188
        %1193 = vmatpush.msra.mxu0 0.0
        %1194 = vmatpush.msra.mxu0 0.0
        %1195 = vmatpush.msra.mxu0 0.0
        %1196 = vmatpush.msra.mxu0 0.0
        %1197 = vmatpush.msra.mxu0 0.0
        %1198 = vmatpush.msra.mxu0 0.0
        %1199 = vmatpush.msra.mxu0 0.0
        %1200 = vmatpush.msra.mxu0 0.0
        %1201 = vmatpush.msra.mxu0 0.0
        %1202 = vmatpush.msra.mxu0 0.0
        %1203 = vmatpush.msra.mxu0 0.0
        %1204 = vmatpush.msra.mxu0 0.0
        %1205 = vmatpush.msra.mxu0 %v1192
        %1206 = vmatpush.msra.mxu0 %v1191
        %1207 = vmatpush.msra.mxu0 %v1190
        %1208 = vmatpush.msra.mxu0 %v1189
        %1209 = vmatmul.f32.gmra.mxu0 %v1067
        %v1210 = vpop.f32.mrf.mxu0
        %v1211 = vadd.f32 0.0, %v1210
        %1212 = vdwg.mxu0
        %v1213 = vmul.f32 %v1143, %v667
        %v1214 = vsel %vm789, %v1213, 0.0
        %1215 = vadd.xlane.f32.xlu0 %v1214
        %v1216 = vpop.xlane.xlu0 %1215
        %v1217 = vsub.f32 %v1143, %v994
        %v1218 = vsel %vm789, %v1217, -inf
        %1219 = vmax.xlane.f32.xlu0 %v1218
        %v1220 = vpop.xlane.xlu0 %1219
        %vm1221 = vcmp.gt.f32.partialorder %v1220, %v1216
        %v1222 = vsel %vm1221, 1, 0
        %v1223 = vcvt.s32.f32 %v1222
        %v1224 = vmul.f32 %v1211, %v1211
        %1225 = vadd.xlane.f32.xlu0 %v1224
        %v1226 = vpop.xlane.xlu0 %1225
        %v1227 = vrot.slane %v1226, 4
        %v1228 = vadd.f32 %v1226, %v1227
        %v1229 = vrot.slane %v1228, 2
        %v1230 = vadd.f32 %v1228, %v1229
        %v1231 = vrot.slane %v1230, 1
        %v1232 = vadd.f32 %v1230, %v1231
        %s1233 = vtos %v1232
        %v1234 = vstv %s1233
        %v1235 = vmax.f32 %v1234, 1e-24
        %v1236 = vrsqrt.pop %v1235
        %v1237 = vmul.f32 %v1236, %v1235
        %v1238 = vmul.f32 %v1237, %v1236
        %v1239 = vmul.f32 0.5, %v1238
        %v1240 = vsub.f32 1.5, %v1239
        %v1241 = vmul.f32 %v1236, %v1240
        %vm1242 = vweird.f32 %v1235
        %vm1243 = vweird.f32 %v1236
        %vm1244 = vmor %vm1242, %vm1243
        %v1245 = vsel %vm1244, %v1236, %v1241
        %v1246 = vmul.f32 %v1211, %v1245
        %v1247 = vsub.f32 %v668, %v669
        %v1248 = vmul.f32 %v1247, %v1246
        %1249 = vadd.xlane.f32.xlu0 %v1248
        %v1250 = vpop.xlane.xlu0 %1249
        %v1251 = vrot.slane %v1250, 4
        %v1252 = vadd.f32 %v1250, %v1251
        %v1253 = vrot.slane %v1252, 2
        %v1254 = vadd.f32 %v1252, %v1253
        %v1255 = vrot.slane %v1254, 1
        %v1256 = vadd.f32 %v1254, %v1255
        %s1257 = vtos %v1256
        %v1258 = vstv %s1257
        %v1259 = vmul.f32 %v1258, %v1246
        %v1260 = vsub.f32 %v1247, %v1259
        %v1261 = vmul.f32 %v1260, 0.007
        %v1262 = vsub.f32 %v668, %v1261
        %v1263 = vmul.f32 %v1246, 0.3879794
        %v1264 = vsub.f32 %v668, %v1263
        %v1265 = vperm.slane %v1223, 0
        %v1266 = vmul.f32 %v1265, %v1262
        %v1267 = vsub.f32 1.0, %v1223
        %v1268 = vperm.slane %v1267, 0
        %v1269 = vmul.f32 %v1268, %v1264
        %v1270 = vadd.f32 %v1266, %v1269
        %v1271 = vsub.f32 %v1270, %v669
        %v1272 = vmul.f32 %v1271, %v1271
        %v1273 = vrot.slane %v1272, 4
        %v1274 = vadd.f32 %v1272, %v1273
        %v1275 = vrot.slane %v1274, 2
        %v1276 = vadd.f32 %v1274, %v1275
        %v1277 = vrot.slane %v1276, 1
        %v1278 = vadd.f32 %v1276, %v1277
        %v1279 = vmax.f32 %v1278, 1e-18
        %v1280 = vrsqrt.pop %v1279
        %v1281 = vmul.f32 %v1280, %v1279
        %v1282 = vmul.f32 %v1281, %v1280
        %v1283 = vmul.f32 0.5, %v1282
        %v1284 = vsub.f32 1.5, %v1283
        %v1285 = vmul.f32 %v1280, %v1284
        %vm1286 = vweird.f32 %v1279
        %vm1287 = vweird.f32 %v1280
        %vm1288 = vmor %vm1286, %vm1287
        %v1289 = vsel %vm1288, %v1280, %v1285
        %v1290 = vmul.f32 %v1289, 0.16
        %v1291 = vmin.f32 %v1290, 1.0
        %v1292 = vmul.f32 %v1271, %v1291
        %v1293 = vadd.f32 %v669, %v1292
        %v1294 = vmul.f32 %v1247, %v1247
        %1295 = vadd.xlane.f32.xlu0 %v1294
        %v1296 = vpop.xlane.xlu0 %1295
        %v1297 = vrot.slane %v1296, 4
        %v1298 = vadd.f32 %v1296, %v1297
        %v1299 = vrot.slane %v1298, 2
        %v1300 = vadd.f32 %v1298, %v1299
        %v1301 = vrot.slane %v1300, 1
        %v1302 = vadd.f32 %v1300, %v1301
        %s1303 = vtos %v1302
        %v1304 = vstv %s1303
        %v1305 = vmul.f32 %v662, %v1223
        %v1306 = vld [vmem:[#allocation7] sm:$0x1]
        %vm1307 = vcmp.lt.f32.partialorder %v1304, %v1306
        %v1308 = vsel %vm1307, 1, 0
        %v1309 = vcvt.s32.f32 %v1308
        %v1310 = vmul.f32 %v1305, %v1309
        %vm1311 = vcmp.gt.f32.partialorder %v1310, 0.5
        %v1312 = vld [vmem:[#allocation4] sm:$0xff]
        %v1313 = vsel %vm1311, 1, 0
        %v1314 = vperm.slane %v1313, 0
        %1315 = vset.pattern.permute.xlu0 0
        %1316 = vperm.xlu0 %1315, %v1314
        %v1317 = vpop.permute.xlu0 %1316
        %vm1318 = vcmp.eq.s32.totalorder %v1317, 1
        %v1319 = vsel %vm1318, %v668, %v1312
        %1320 = vst [vmem:[#allocation4] sm:$0xff] %v1319
        %v1321 = vld [vmem:[#allocation7] sm:$0x1]
        %v1322 = vsel %vm1311, %v1304, %v1321
        %vm1323 = vcmask 0
        %1324 = vst.msk [vmem:[#allocation7] sm:$0x1] %vm1323, %v1322
        %v1325 = vld [vmem:[#allocation8] sm:$0x1]
        %v1326 = vmax.f32 %v1325, %v1310
        %1327 = vst.msk [vmem:[#allocation8] sm:$0x1] %vm1323, %v1326
        %vm1328 = vcmp.gt.f32.partialorder %v662, 0.5
        %v1329 = vsel %vm1328, 1, 0
        %v1330 = vperm.slane %v1329, 0
        %1331 = vset.pattern.permute.xlu0 0
        %1332 = vperm.xlu0 %1331, %v1330
        %v1333 = vpop.permute.xlu0 %1332
        %vm1334 = vcmp.eq.s32.totalorder %v1333, 1
        %v1335 = vsel %vm1334, %v1293, %v901
        %1336 = vst [vmem:[#allocation2] sm:$0xff] %v1335
        %1337 = vst [vmem:[#allocation3] sm:$0xff] %v1087
        %s1338 = sld [smem:[#allocation10 + $0x1]]
        %v1339 = vstv %s1338
        %vm1340 = vcmp.eq.s32.totalorder %v294, %v1339
        %v1341 = vsel %vm1340, 1, 0
        %v1342 = vcvt.s32.f32 %v1341
        %s1343 = scalar_lea.vmem [#allocation2], 8
        %v1344 = vld [vmem:[%s1343] sm:$0xff]
        %s1345 = scalar_lea.vmem %s1, 8
        %v1346 = vld [vmem:[%s1345] sm:$0xff]
        %s1347 = scalar_lea.vmem %s2, 8
        %v1348 = vld [vmem:[%s1347] sm:$0xff]
        %s1349 = scalar_lea.vmem [#allocation3], 8
        %v1350 = vld [vmem:[%s1349] sm:$0xff]
        %v1351 = vmul.f32 %v1348, %v1348
        %v1353 = vrot.slane %v1351, 1
        %v1355 = vadd.f32 %v1351, %v1353
        %vm1356 = vcmp.gt.f32.partialorder %v1355, 1e-12
        %v1357 = vmax.f32 %v1355, 1e-20
        %v1358 = vrsqrt.pop %v1357
        %v1359 = vmul.f32 %v1358, %v1357
        %v1360 = vmul.f32 %v1359, %v1358
        %v1361 = vmul.f32 0.5, %v1360
        %v1362 = vsub.f32 1.5, %v1361
        %v1363 = vmul.f32 %v1358, %v1362
        %vm1364 = vweird.f32 %v1357
        %vm1365 = vweird.f32 %v1358
        %vm1366 = vmor %vm1364, %vm1365
        %v1367 = vsel %vm1366, %v1358, %v1363
        %v1368 = vsub.f32 0.0, %v1348
        %v1370 = vrot.slane %v1367, 7
        %v1372 = vmul.f32 %v1368, %v1370
        %v1374 = vrot.slane %v1372, 1
        %v1376 = vsel %vm1356, %v1374, 1.0
        %v1377 = vmul.f32 %v1348, %v1367
        %v1378 = vsel %vm1356, %v1377, 0.0
        %v1380 = vrot.slane %v1378, 6
        %v1382 = vmul.f32 %v1368, %v1380
        %v1384 = vrot.slane %v1376, 6
        %v1386 = vmul.f32 %v1348, %v1384
        %v1387 = vmul.f32 %v1348, %v1378
        %v1388 = vrot.slane %v1376, 7
        %v1390 = vmul.f32 %v1348, %v1388
        %v1392 = vrot.slane %v1390, 1
        %v1394 = vsub.f32 %v1387, %v1392
        %v1395 = vmul.f32 %v1344, %v1348
        %v1396 = vrot.slane %v1395, 4
        %v1397 = vadd.f32 %v1395, %v1396
        %v1398 = vrot.slane %v1397, 2
        %v1399 = vadd.f32 %v1397, %v1398
        %v1400 = vrot.slane %v1399, 1
        %v1401 = vadd.f32 %v1399, %v1400
        %v1402 = vmul.f32 %v1401, %v1348
        %v1403 = vsub.f32 %v1344, %v1402
        %v1404 = vmul.f32 %v1376, %v1403
        %v1406 = vrot.slane %v1403, 1
        %v1408 = vmul.f32 %v1378, %v1406
        %v1409 = vadd.f32 %v1404, %v1408
        %v1410 = vmul.f32 %v1403, 0.0
        %v1412 = vrot.slane %v1410, 2
        %v1414 = vadd.f32 %v1409, %v1412
        %v1415 = vrot.slane %v1403, 6
        %v1417 = vmul.f32 %v1382, %v1415
        %v1418 = vrot.slane %v1403, 7
        %v1420 = vmul.f32 %v1386, %v1418
        %v1421 = vadd.f32 %v1417, %v1420
        %v1422 = vrot.slane %v1403, 2
        %v1424 = vmul.f32 %v1394, %v1422
        %v1426 = vrot.slane %v1424, 6
        %v1428 = vadd.f32 %v1421, %v1426
        %v1429 = vmul.f32 %v1348, %v1403
        %v1431 = vrot.slane %v1429, 1
        %v1433 = vadd.f32 %v1429, %v1431
        %v1434 = vrot.slane %v1429, 2
        %v1436 = vadd.f32 %v1433, %v1434
        %v1437 = vmul.f32 %v1376, %v1350
        %v1439 = vrot.slane %v1350, 1
        %v1441 = vmul.f32 %v1378, %v1439
        %v1442 = vadd.f32 %v1437, %v1441
        %v1443 = vmul.f32 %v1350, 0.0
        %v1445 = vrot.slane %v1443, 2
        %v1447 = vadd.f32 %v1442, %v1445
        %v1448 = vrot.slane %v1350, 6
        %v1450 = vmul.f32 %v1382, %v1448
        %v1451 = vrot.slane %v1350, 7
        %v1453 = vmul.f32 %v1386, %v1451
        %v1454 = vadd.f32 %v1450, %v1453
        %v1455 = vrot.slane %v1350, 2
        %v1457 = vmul.f32 %v1394, %v1455
        %v1459 = vrot.slane %v1457, 6
        %v1461 = vadd.f32 %v1454, %v1459
        %v1462 = vmul.f32 %v1447, %v1447
        %v1463 = vmul.f32 %v1461, %v1461
        %v1465 = vrot.slane %v1463, 2
        %v1467 = vadd.f32 %v1462, %v1465
        %v1468 = vsel %vm789, %v1467, 0.0
        %1469 = vadd.xlane.f32.xlu0 %v1468
        %v1470 = vpop.xlane.xlu0 %1469
        %v1471 = vrot.slane %v1470, 4
        %v1472 = vadd.f32 %v1470, %v1471
        %v1473 = vrot.slane %v1472, 2
        %v1474 = vadd.f32 %v1472, %v1473
        %v1475 = vrot.slane %v1474, 1
        %v1476 = vadd.f32 %v1474, %v1475
        %s1477 = vtos %v1476
        %v1478 = vstv %s1477
        %v1479 = vmax.f32 %v1478, 1e-18
        %v1480 = vrsqrt.pop %v1479
        %v1481 = vmul.f32 %v1480, %v1479
        %v1482 = vmul.f32 %v1481, %v1480
        %v1483 = vmul.f32 0.5, %v1482
        %v1484 = vsub.f32 1.5, %v1483
        %v1485 = vmul.f32 %v1480, %v1484
        %vm1486 = vweird.f32 %v1479
        %vm1487 = vweird.f32 %v1480
        %vm1488 = vmor %vm1486, %vm1487
        %v1489 = vsel %vm1488, %v1480, %v1485
        %v1490 = vmul.f32 %v1489, 0.3879794
        %v1491 = vmul.f32 %v1490, %v1447
        %v1492 = vsub.f32 %v1414, %v1491
        %v1493 = vmul.f32 %v1490, %v1461
        %v1494 = vsub.f32 %v1428, %v1493
        %v1495 = vmul.f32 %v1376, %v1492
        %v1496 = vmul.f32 %v1382, %v1494
        %v1498 = vrot.slane %v1496, 2
        %v1500 = vadd.f32 %v1495, %v1498
        %v1501 = vmul.f32 %v1348, %v1436
        %v1502 = vadd.f32 %v1500, %v1501
        %v1503 = vadd.f32 %v1502, %v1402
        %v1504 = vmul.f32 %v1378, %v1492
        %v1505 = vmul.f32 %v1386, %v1494
        %v1507 = vrot.slane %v1505, 2
        %v1509 = vadd.f32 %v1504, %v1507
        %v1511 = vrot.slane %v1436, 7
        %v1513 = vmul.f32 %v1348, %v1511
        %v1515 = vrot.slane %v1513, 1
        %v1517 = vadd.f32 %v1509, %v1515
        %v1519 = vrot.slane %v1402, 1
        %v1521 = vadd.f32 %v1517, %v1519
        %v1522 = vmul.f32 %v1492, 0.0
        %v1524 = vrot.slane %v1494, 2
        %v1526 = vmul.f32 %v1394, %v1524
        %v1527 = vadd.f32 %v1522, %v1526
        %v1528 = vrot.slane %v1436, 6
        %v1530 = vmul.f32 %v1348, %v1528
        %v1532 = vrot.slane %v1530, 2
        %v1534 = vadd.f32 %v1527, %v1532
        %v1535 = vrot.slane %v1402, 2
        %v1537 = vadd.f32 %v1534, %v1535
        %v1538 = vsub.f32 %v1503, %v1346
        %v1540 = vrot.slane %v1346, 1
        %v1542 = vsub.f32 %v1521, %v1540
        %v1543 = vrot.slane %v1346, 2
        %v1545 = vsub.f32 %v1537, %v1543
        %v1546 = vmul.f32 %v1538, %v1538
        %v1547 = vmul.f32 %v1542, %v1542
        %v1548 = vadd.f32 %v1546, %v1547
        %v1549 = vmul.f32 %v1545, %v1545
        %v1550 = vadd.f32 %v1548, %v1549
        %v1551 = vmax.f32 %v1550, 1e-18
        %v1552 = vrsqrt.pop %v1551
        %v1553 = vmul.f32 %v1552, %v1551
        %v1554 = vmul.f32 %v1553, %v1552
        %v1555 = vmul.f32 0.5, %v1554
        %v1556 = vsub.f32 1.5, %v1555
        %v1557 = vmul.f32 %v1552, %v1556
        %vm1558 = vweird.f32 %v1551
        %vm1559 = vweird.f32 %v1552
        %vm1560 = vmor %vm1558, %vm1559
        %v1561 = vsel %vm1560, %v1552, %v1557
        %v1562 = vmul.f32 %v1561, 0.16
        %v1563 = vmin.f32 %v1562, 1.0
        %v1564 = vmul.f32 %v1538, %v1563
        %v1565 = vadd.f32 %v1346, %v1564
        %1566 = vst [vmem:[#allocation5] sm:$0x1] %v1565
        %v1567 = vmul.f32 %v1542, %v1563
        %v1569 = vrot.slane %v1567, 7
        %v1571 = vadd.f32 %v1346, %v1569
        %1572 = vst [vmem:[#allocation5] sm:$0x2] %v1571
        %v1573 = vmul.f32 %v1545, %v1563
        %v1575 = vrot.slane %v1573, 6
        %v1577 = vadd.f32 %v1346, %v1575
        %1578 = vst [vmem:[#allocation5] sm:$0x4] %v1577
        %v1579 = vld [vmem:[#allocation5] sm:$0xff]
        %1580 = vmatpush.msra.mxu0 0.0
        %1581 = vmatpush.msra.mxu0 0.0
        %1582 = vmatpush.msra.mxu0 0.0
        %1583 = vmatpush.msra.mxu0 0.0
        %1584 = vmatpush.msra.mxu0 0.0
        %1585 = vmatpush.msra.mxu0 0.0
        %1586 = vmatpush.msra.mxu0 0.0
        %1587 = vmatpush.msra.mxu0 0.0
        %1588 = vmatpush.msra.mxu0 0.0
        %1589 = vmatpush.msra.mxu0 0.0
        %1590 = vmatpush.msra.mxu0 0.0
        %1591 = vmatpush.msra.mxu0 0.0
        %1592 = vmatpush.msra.mxu0 0.0
        %1593 = vmatpush.msra.mxu0 0.0
        %1594 = vmatpush.msra.mxu0 0.0
        %1595 = vmatpush.msra.mxu0 %v1579
        %1596 = vmatmul.f32.gmra.mxu0 %v924
        %v1597 = vpop.f32.mrf.mxu0
        %v1598 = vadd.f32 %v905, %v1597
        %1599 = vmatmul.f32.gmra.mxu0 %v927
        %v1600 = vpop.f32.mrf.mxu0
        %v1601 = vadd.f32 %v910, %v1600
        %1602 = vmatmul.f32.gmra.mxu0 %v930
        %v1603 = vpop.f32.mrf.mxu0
        %v1604 = vadd.f32 %v915, %v1603
        %1605 = vmatmul.f32.gmra.mxu0 %v933
        %v1606 = vpop.f32.mrf.mxu0
        %v1607 = vadd.f32 %v920, %v1606
        %1608 = vdwg.mxu0
        %v1609 = vmax.f32 %v1598, 0.0
        %v1610 = vmax.f32 %v1601, 0.0
        %v1611 = vmax.f32 %v1604, 0.0
        %v1612 = vmax.f32 %v1607, 0.0
        %1613 = vmax.xlane.f32.xlu0 %v1609
        %v1614 = vpop.xlane.xlu0 %1613
        %1615 = vmax.xlane.f32.xlu0 %v1610
        %v1616 = vpop.xlane.xlu0 %1615
        %1617 = vmax.xlane.f32.xlu0 %v1611
        %v1618 = vpop.xlane.xlu0 %1617
        %1619 = vmax.xlane.f32.xlu0 %v1612
        %v1620 = vpop.xlane.xlu0 %1619
        %v1621 = vmul.f32 %v1614, %v288
        %v1622 = vmul.f32 %v1616, %v289
        %v1623 = vmul.f32 %v1618, %v290
        %v1624 = vmul.f32 %v1620, %v291
        %v1625 = vadd.f32 %v1621, %v1622
        %v1626 = vadd.f32 %v1625, %v1623
        %v1627 = vadd.f32 %v1626, %v1624
        %v1628 = vrot.slane %v1627, 4
        %v1629 = vadd.f32 %v1627, %v1628
        %v1630 = vrot.slane %v1629, 2
        %v1631 = vadd.f32 %v1629, %v1630
        %v1632 = vrot.slane %v1631, 1
        %v1633 = vadd.f32 %v1631, %v1632
        %v1634 = vadd.f32 %v1633, %v292
        %v1635 = vmul.f32 %v1634, %v1342
        %v1636 = vsel %vm789, %v1635, 0.0
        %1637 = vadd.xlane.f32.xlu0 %v1636
        %v1638 = vpop.xlane.xlu0 %1637
        %v1639 = vmul.f32 %v1342, 1e+10
        %v1640 = vsub.f32 %v1634, %v1639
        %v1641 = vsel %vm789, %v1640, -inf
        %1642 = vmax.xlane.f32.xlu0 %v1641
        %v1643 = vpop.xlane.xlu0 %1642
        %vm1644 = vcmp.ge.f32.partialorder %v1640, %v1643
        %v1645 = vsel %vm1644, %v294, 128
        %v1646 = vsel %vm789, %v1645, 2147483647
        %v1647 = vand.u32 %v1646, 65535
        %v1648 = vshra.s32 %v1646, 16
        %v1649 = vcvt.s32.f32 %v1647
        %v1650 = vcvt.s32.f32 %v1648
        %1651 = vmin.xlane.f32.xlu0 %v1650
        %v1652 = vpop.xlane.xlu0 %1651
        %vm1653 = vcmp.eq.f32.partialorder %v1650, %v1652
        %v1654 = vsel %vm1653, %v1649, inf
        %1655 = vmin.xlane.f32.xlu0 %v1654
        %v1656 = vpop.xlane.xlu0 %1655
        %v1657 = vcvt.f32.s32 %v1656
        %v1658 = vcvt.f32.s32 %v1652
        %v1659 = vshll.u32 %v1658, 16
        %v1660 = vadd.s32 %v1659, %v1657
        %vm1661 = vcmp.eq.s32.totalorder %v294, %v1660
        %v1662 = vsel %vm1661, 1, 0
        %v1663 = vcvt.s32.f32 %v1662
        %v1664 = vsub.f32 %v1638, %v1643
        %vm1665 = vcmp.gt.f32.partialorder %v1664, 0.0
        %v1666 = vsel %vm1665, 1, 0
        %v1667 = vcvt.s32.f32 %v1666
        %v1668 = vsub.f32 %v1342, %v1663
        %v1669 = vmul.f32 %v1667, %v1668
        %vm1670 = vcmp.gt.f32.partialorder %v1643, %v1638
        %v1671 = vsel %vm1670, 1, 0
        %v1672 = vcvt.s32.f32 %v1671
        %v1673 = vperm.slane %v1669, 0
        %v1674 = vmul.f32 %v288, %v1673
        %v1675 = vmul.f32 %v289, %v1673
        %v1676 = vmul.f32 %v290, %v1673
        %v1677 = vmul.f32 %v291, %v1673
        %1678 = vadd.xlane.f32.xlu0 %v1674
        %v1679 = vpop.xlane.xlu0 %1678
        %1680 = vadd.xlane.f32.xlu0 %v1675
        %v1681 = vpop.xlane.xlu0 %1680
        %1682 = vadd.xlane.f32.xlu0 %v1676
        %v1683 = vpop.xlane.xlu0 %1682
        %1684 = vadd.xlane.f32.xlu0 %v1677
        %v1685 = vpop.xlane.xlu0 %1684
        %vm1686 = vcmp.ge.f32.partialorder %v1609, %v1614
        %vm1687 = vcmp.ge.f32.partialorder %v1610, %v1616
        %vm1688 = vcmp.ge.f32.partialorder %v1611, %v1618
        %vm1689 = vcmp.ge.f32.partialorder %v1612, %v1620
        %vm1690 = vcmp.gt.f32.partialorder %v1598, 0.0
        %vm1691 = vcmp.gt.f32.partialorder %v1601, 0.0
        %vm1692 = vcmp.gt.f32.partialorder %v1604, 0.0
        %vm1693 = vcmp.gt.f32.partialorder %v1607, 0.0
        %vm1694 = vmand %vm1686, %vm1690
        %vm1695 = vmand %vm1687, %vm1691
        %vm1696 = vmand %vm1688, %vm1692
        %vm1697 = vmand %vm1689, %vm1693
        %v1698 = vsel %vm1694, 1, 0
        %v1699 = vsel %vm1695, 1, 0
        %v1700 = vsel %vm1696, 1, 0
        %v1701 = vsel %vm1697, 1, 0
        %v1702 = vcvt.s32.f32 %v1698
        %v1703 = vcvt.s32.f32 %v1699
        %v1704 = vcvt.s32.f32 %v1700
        %v1705 = vcvt.s32.f32 %v1701
        %v1706 = vmul.f32 %v1679, %v1702
        %v1707 = vmul.f32 %v1681, %v1703
        %v1708 = vmul.f32 %v1683, %v1704
        %v1709 = vmul.f32 %v1685, %v1705
        %1710 = vmatpush.msra.mxu0 0.0
        %1711 = vmatpush.msra.mxu0 0.0
        %1712 = vmatpush.msra.mxu0 0.0
        %1713 = vmatpush.msra.mxu0 0.0
        %1714 = vmatpush.msra.mxu0 0.0
        %1715 = vmatpush.msra.mxu0 0.0
        %1716 = vmatpush.msra.mxu0 0.0
        %1717 = vmatpush.msra.mxu0 0.0
        %1718 = vmatpush.msra.mxu0 0.0
        %1719 = vmatpush.msra.mxu0 0.0
        %1720 = vmatpush.msra.mxu0 0.0
        %1721 = vmatpush.msra.mxu0 0.0
        %1722 = vmatpush.msra.mxu0 %v1709
        %1723 = vmatpush.msra.mxu0 %v1708
        %1724 = vmatpush.msra.mxu0 %v1707
        %1725 = vmatpush.msra.mxu0 %v1706
        %1726 = vmatmul.f32.gmra.mxu0 %v1067
        %v1727 = vpop.f32.mrf.mxu0
        %v1728 = vadd.f32 0.0, %v1727
        %1729 = vdwg.mxu0
        %1730 = vmatpush.msra.mxu0 0.0
        %1731 = vmatpush.msra.mxu0 0.0
        %1732 = vmatpush.msra.mxu0 0.0
        %1733 = vmatpush.msra.mxu0 0.0
        %1734 = vmatpush.msra.mxu0 0.0
        %1735 = vmatpush.msra.mxu0 0.0
        %1736 = vmatpush.msra.mxu0 0.0
        %1737 = vmatpush.msra.mxu0 0.0
        %1738 = vmatpush.msra.mxu0 0.0
        %1739 = vmatpush.msra.mxu0 0.0
        %1740 = vmatpush.msra.mxu0 0.0
        %1741 = vmatpush.msra.mxu0 0.0
        %1742 = vmatpush.msra.mxu0 0.0
        %1743 = vmatpush.msra.mxu0 0.0
        %1744 = vmatpush.msra.mxu0 0.0
        %1745 = vmatpush.msra.mxu0 %v1344
        %1746 = vmatmul.f32.gmra.mxu0 %v924
        %v1747 = vpop.f32.mrf.mxu0
        %v1748 = vadd.f32 %v905, %v1747
        %1749 = vmatmul.f32.gmra.mxu0 %v927
        %v1750 = vpop.f32.mrf.mxu0
        %v1751 = vadd.f32 %v910, %v1750
        %1752 = vmatmul.f32.gmra.mxu0 %v930
        %v1753 = vpop.f32.mrf.mxu0
        %v1754 = vadd.f32 %v915, %v1753
        %1755 = vmatmul.f32.gmra.mxu0 %v933
        %v1756 = vpop.f32.mrf.mxu0
        %v1757 = vadd.f32 %v920, %v1756
        %1758 = vdwg.mxu0
        %v1759 = vmax.f32 %v1748, 0.0
        %v1760 = vmax.f32 %v1751, 0.0
        %v1761 = vmax.f32 %v1754, 0.0
        %v1762 = vmax.f32 %v1757, 0.0
        %1763 = vmax.xlane.f32.xlu0 %v1759
        %v1764 = vpop.xlane.xlu0 %1763
        %1765 = vmax.xlane.f32.xlu0 %v1760
        %v1766 = vpop.xlane.xlu0 %1765
        %1767 = vmax.xlane.f32.xlu0 %v1761
        %v1768 = vpop.xlane.xlu0 %1767
        %1769 = vmax.xlane.f32.xlu0 %v1762
        %v1770 = vpop.xlane.xlu0 %1769
        %v1771 = vmul.f32 %v1764, %v288
        %v1772 = vmul.f32 %v1766, %v289
        %v1773 = vmul.f32 %v1768, %v290
        %v1774 = vmul.f32 %v1770, %v291
        %v1775 = vadd.f32 %v1771, %v1772
        %v1776 = vadd.f32 %v1775, %v1773
        %v1777 = vadd.f32 %v1776, %v1774
        %v1778 = vrot.slane %v1777, 4
        %v1779 = vadd.f32 %v1777, %v1778
        %v1780 = vrot.slane %v1779, 2
        %v1781 = vadd.f32 %v1779, %v1780
        %v1782 = vrot.slane %v1781, 1
        %v1783 = vadd.f32 %v1781, %v1782
        %v1784 = vadd.f32 %v1783, %v292
        %v1785 = vsel %vm789, %v1784, -inf
        %1786 = vmax.xlane.f32.xlu0 %v1785
        %v1787 = vpop.xlane.xlu0 %1786
        %v1788 = vsub.f32 %v1784, %v1787
        %v1789 = vmul.f32 %v1788, 1.442695
        %v1790 = vpow.pop %v1789
        %v1791 = vsel %vm789, %v1790, 0.0
        %1792 = vadd.xlane.f32.xlu0 %v1791
        %v1793 = vpop.xlane.xlu0 %1792
        %v1794 = vrcp.pop %v1793
        %v1795 = vmul.f32 %v1790, %v1794
        %v1796 = vsub.f32 %v1342, %v1795
        %v1797 = vperm.slane %v1796, 0
        %v1798 = vmul.f32 %v288, %v1797
        %v1799 = vmul.f32 %v289, %v1797
        %v1800 = vmul.f32 %v290, %v1797
        %v1801 = vmul.f32 %v291, %v1797
        %1802 = vadd.xlane.f32.xlu0 %v1798
        %v1803 = vpop.xlane.xlu0 %1802
        %1804 = vadd.xlane.f32.xlu0 %v1799
        %v1805 = vpop.xlane.xlu0 %1804
        %1806 = vadd.xlane.f32.xlu0 %v1800
        %v1807 = vpop.xlane.xlu0 %1806
        %1808 = vadd.xlane.f32.xlu0 %v1801
        %v1809 = vpop.xlane.xlu0 %1808
        %vm1810 = vcmp.ge.f32.partialorder %v1759, %v1764
        %vm1811 = vcmp.ge.f32.partialorder %v1760, %v1766
        %vm1812 = vcmp.ge.f32.partialorder %v1761, %v1768
        %vm1813 = vcmp.ge.f32.partialorder %v1762, %v1770
        %vm1814 = vcmp.gt.f32.partialorder %v1748, 0.0
        %vm1815 = vcmp.gt.f32.partialorder %v1751, 0.0
        %vm1816 = vcmp.gt.f32.partialorder %v1754, 0.0
        %vm1817 = vcmp.gt.f32.partialorder %v1757, 0.0
        %vm1818 = vmand %vm1810, %vm1814
        %vm1819 = vmand %vm1811, %vm1815
        %vm1820 = vmand %vm1812, %vm1816
        %vm1821 = vmand %vm1813, %vm1817
        %v1822 = vsel %vm1818, 1, 0
        %v1823 = vsel %vm1819, 1, 0
        %v1824 = vsel %vm1820, 1, 0
        %v1825 = vsel %vm1821, 1, 0
        %v1826 = vcvt.s32.f32 %v1822
        %v1827 = vcvt.s32.f32 %v1823
        %v1828 = vcvt.s32.f32 %v1824
        %v1829 = vcvt.s32.f32 %v1825
        %v1830 = vmul.f32 %v1803, %v1826
        %v1831 = vmul.f32 %v1805, %v1827
        %v1832 = vmul.f32 %v1807, %v1828
        %v1833 = vmul.f32 %v1809, %v1829
        %1834 = vmatpush.msra.mxu0 0.0
        %1835 = vmatpush.msra.mxu0 0.0
        %1836 = vmatpush.msra.mxu0 0.0
        %1837 = vmatpush.msra.mxu0 0.0
        %1838 = vmatpush.msra.mxu0 0.0
        %1839 = vmatpush.msra.mxu0 0.0
        %1840 = vmatpush.msra.mxu0 0.0
        %1841 = vmatpush.msra.mxu0 0.0
        %1842 = vmatpush.msra.mxu0 0.0
        %1843 = vmatpush.msra.mxu0 0.0
        %1844 = vmatpush.msra.mxu0 0.0
        %1845 = vmatpush.msra.mxu0 0.0
        %1846 = vmatpush.msra.mxu0 %v1833
        %1847 = vmatpush.msra.mxu0 %v1832
        %1848 = vmatpush.msra.mxu0 %v1831
        %1849 = vmatpush.msra.mxu0 %v1830
        %1850 = vmatmul.f32.gmra.mxu0 %v1067
        %v1851 = vpop.f32.mrf.mxu0
        %v1852 = vadd.f32 0.0, %v1851
        %1853 = vdwg.mxu0
        %v1854 = vmul.f32 %v1784, %v1342
        %v1855 = vsel %vm789, %v1854, 0.0
        %1856 = vadd.xlane.f32.xlu0 %v1855
        %v1857 = vpop.xlane.xlu0 %1856
        %v1858 = vsub.f32 %v1784, %v1639
        %v1859 = vsel %vm789, %v1858, -inf
        %1860 = vmax.xlane.f32.xlu0 %v1859
        %v1861 = vpop.xlane.xlu0 %1860
        %vm1862 = vcmp.gt.f32.partialorder %v1861, %v1857
        %v1863 = vsel %vm1862, 1, 0
        %v1864 = vcvt.s32.f32 %v1863
        %v1865 = vmul.f32 %v1852, %v1852
        %1866 = vadd.xlane.f32.xlu0 %v1865
        %v1867 = vpop.xlane.xlu0 %1866
        %v1868 = vrot.slane %v1867, 4
        %v1869 = vadd.f32 %v1867, %v1868
        %v1870 = vrot.slane %v1869, 2
        %v1871 = vadd.f32 %v1869, %v1870
        %v1872 = vrot.slane %v1871, 1
        %v1873 = vadd.f32 %v1871, %v1872
        %s1874 = vtos %v1873
        %v1875 = vstv %s1874
        %v1876 = vmax.f32 %v1875, 1e-24
        %v1877 = vrsqrt.pop %v1876
        %v1878 = vmul.f32 %v1877, %v1876
        %v1879 = vmul.f32 %v1878, %v1877
        %v1880 = vmul.f32 0.5, %v1879
        %v1881 = vsub.f32 1.5, %v1880
        %v1882 = vmul.f32 %v1877, %v1881
        %vm1883 = vweird.f32 %v1876
        %vm1884 = vweird.f32 %v1877
        %vm1885 = vmor %vm1883, %vm1884
        %v1886 = vsel %vm1885, %v1877, %v1882
        %v1887 = vmul.f32 %v1852, %v1886
        %v1888 = vsub.f32 %v1344, %v1346
        %v1889 = vmul.f32 %v1888, %v1887
        %1890 = vadd.xlane.f32.xlu0 %v1889
        %v1891 = vpop.xlane.xlu0 %1890
        %v1892 = vrot.slane %v1891, 4
        %v1893 = vadd.f32 %v1891, %v1892
        %v1894 = vrot.slane %v1893, 2
        %v1895 = vadd.f32 %v1893, %v1894
        %v1896 = vrot.slane %v1895, 1
        %v1897 = vadd.f32 %v1895, %v1896
        %s1898 = vtos %v1897
        %v1899 = vstv %s1898
        %v1900 = vmul.f32 %v1899, %v1887
        %v1901 = vsub.f32 %v1888, %v1900
        %v1902 = vmul.f32 %v1901, 0.007
        %v1903 = vsub.f32 %v1344, %v1902
        %v1904 = vmul.f32 %v1887, 0.3879794
        %v1905 = vsub.f32 %v1344, %v1904
        %v1906 = vperm.slane %v1864, 0
        %v1907 = vmul.f32 %v1906, %v1903
        %v1908 = vsub.f32 1.0, %v1864
        %v1909 = vperm.slane %v1908, 0
        %v1910 = vmul.f32 %v1909, %v1905
        %v1911 = vadd.f32 %v1907, %v1910
        %v1912 = vsub.f32 %v1911, %v1346
        %v1913 = vmul.f32 %v1912, %v1912
        %v1914 = vrot.slane %v1913, 4
        %v1915 = vadd.f32 %v1913, %v1914
        %v1916 = vrot.slane %v1915, 2
        %v1917 = vadd.f32 %v1915, %v1916
        %v1918 = vrot.slane %v1917, 1
        %v1919 = vadd.f32 %v1917, %v1918
        %v1920 = vmax.f32 %v1919, 1e-18
        %v1921 = vrsqrt.pop %v1920
        %v1922 = vmul.f32 %v1921, %v1920
        %v1923 = vmul.f32 %v1922, %v1921
        %v1924 = vmul.f32 0.5, %v1923
        %v1925 = vsub.f32 1.5, %v1924
        %v1926 = vmul.f32 %v1921, %v1925
        %vm1927 = vweird.f32 %v1920
        %vm1928 = vweird.f32 %v1921
        %vm1929 = vmor %vm1927, %vm1928
        %v1930 = vsel %vm1929, %v1921, %v1926
        %v1931 = vmul.f32 %v1930, 0.16
        %v1932 = vmin.f32 %v1931, 1.0
        %v1933 = vmul.f32 %v1912, %v1932
        %v1934 = vadd.f32 %v1346, %v1933
        %v1935 = vmul.f32 %v1888, %v1888
        %1936 = vadd.xlane.f32.xlu0 %v1935
        %v1937 = vpop.xlane.xlu0 %1936
        %v1938 = vrot.slane %v1937, 4
        %v1939 = vadd.f32 %v1937, %v1938
        %v1940 = vrot.slane %v1939, 2
        %v1941 = vadd.f32 %v1939, %v1940
        %v1942 = vrot.slane %v1941, 1
        %v1943 = vadd.f32 %v1941, %v1942
        %s1944 = vtos %v1943
        %v1945 = vstv %s1944
        %v1946 = vmul.f32 %v662, %v1864
        %s1947 = scalar_lea.vmem [#allocation7], 1
        %v1948 = vld [vmem:[%s1947] sm:$0x1]
        %vm1949 = vcmp.lt.f32.partialorder %v1945, %v1948
        %v1950 = vsel %vm1949, 1, 0
        %v1951 = vcvt.s32.f32 %v1950
        %v1952 = vmul.f32 %v1946, %v1951
        %vm1953 = vcmp.gt.f32.partialorder %v1952, 0.5
        %s1954 = scalar_lea.vmem [#allocation4], 8
        %v1955 = vld [vmem:[%s1954] sm:$0xff]
        %v1956 = vsel %vm1953, 1, 0
        %v1957 = vperm.slane %v1956, 0
        %1958 = vset.pattern.permute.xlu0 0
        %1959 = vperm.xlu0 %1958, %v1957
        %v1960 = vpop.permute.xlu0 %1959
        %vm1961 = vcmp.eq.s32.totalorder %v1960, 1
        %v1962 = vsel %vm1961, %v1344, %v1955
        %1963 = vst [vmem:[%s1954] sm:$0xff] %v1962
        %v1964 = vld [vmem:[%s1947] sm:$0x1]
        %v1965 = vsel %vm1953, %v1945, %v1964
        %1966 = vst.msk [vmem:[%s1947] sm:$0x1] %vm1323, %v1965
        %s1967 = scalar_lea.vmem [#allocation8], 1
        %v1968 = vld [vmem:[%s1967] sm:$0x1]
        %v1969 = vmax.f32 %v1968, %v1952
        %1970 = vst.msk [vmem:[%s1967] sm:$0x1] %vm1323, %v1969
        %v1971 = vsel %vm1334, %v1934, %v1579
        %1972 = vst [vmem:[%s1343] sm:$0xff] %v1971
        %1973 = vst [vmem:[%s1349] sm:$0xff] %v1728
        %v1974 = vmul.f32 %v1027, %v1672
        %v1975 = vmax.f32 %v662, %v1974
        %1976 = vst.msk [vmem:[#allocation6] sm:$0x1] %vm1323, %v1975
        %p1977 = scmp.eq.s32.totalorder %s30, 3
        // Predicated region
        $region53: #{_run_impl.1} parent=47 // pred_check
          %p1978 = pneg %p1977
        $region54: #{_run_impl.1} parent=47 // pred_check_branch
          %1980 = sbr.rel (%p1978) target = $region56
        $region55: #{_run_impl.1} parent=47 // pred_region
          %v1981 = vld [vmem:[#allocation8] sm:$0x1]
          %vm1982 = vcmp.gt.f32.partialorder %v1981, 0.5
          %v1983 = vld [vmem:[#allocation4] sm:$0xff]
          %v1984 = vld [vmem:[#allocation2] sm:$0xff]
          %v1985 = vsel %vm1982, 1, 0
          %v1986 = vperm.slane %v1985, 0
          %1987 = vset.pattern.permute.xlu0 0
          %1988 = vperm.xlu0 %1987, %v1986
          %v1989 = vpop.permute.xlu0 %1988
          %vm1990 = vcmp.eq.s32.totalorder %v1989, 1
          %v1991 = vsel %vm1990, %v1983, %v1984
          %1992 = vmatpush.msra.mxu0 0.0
          %1993 = vmatpush.msra.mxu0 0.0
          %1994 = vmatpush.msra.mxu0 0.0
          %1995 = vmatpush.msra.mxu0 0.0
          %1996 = vmatpush.msra.mxu0 0.0
          %1997 = vmatpush.msra.mxu0 0.0
          %1998 = vmatpush.msra.mxu0 0.0
          %1999 = vmatpush.msra.mxu0 0.0
          %2000 = vmatpush.msra.mxu0 0.0
          %2001 = vmatpush.msra.mxu0 0.0
          %2002 = vmatpush.msra.mxu0 0.0
          %2003 = vmatpush.msra.mxu0 0.0
          %2004 = vmatpush.msra.mxu0 0.0
          %2005 = vmatpush.msra.mxu0 0.0
          %2006 = vmatpush.msra.mxu0 0.0
          %2007 = vmatpush.msra.mxu0 %v1991
          %2008 = vmatmul.f32.gmra.mxu0 %v924
          %v2009 = vpop.f32.mrf.mxu0
          %v2010 = vadd.f32 %v905, %v2009
          %2011 = vmatmul.f32.gmra.mxu0 %v927
          %v2012 = vpop.f32.mrf.mxu0
          %v2013 = vadd.f32 %v910, %v2012
          %2014 = vmatmul.f32.gmra.mxu0 %v930
          %v2015 = vpop.f32.mrf.mxu0
          %v2016 = vadd.f32 %v915, %v2015
          %2017 = vmatmul.f32.gmra.mxu0 %v933
          %v2018 = vpop.f32.mrf.mxu0
          %v2019 = vadd.f32 %v920, %v2018
          %2020 = vdwg.mxu0
          %v2021 = vmax.f32 %v2010, 0.0
          %v2022 = vmax.f32 %v2013, 0.0
          %v2023 = vmax.f32 %v2016, 0.0
          %v2024 = vmax.f32 %v2019, 0.0
          %2025 = vmax.xlane.f32.xlu0 %v2021
          %v2026 = vpop.xlane.xlu0 %2025
          %2027 = vmax.xlane.f32.xlu0 %v2022
          %v2028 = vpop.xlane.xlu0 %2027
          %2029 = vmax.xlane.f32.xlu0 %v2023
          %v2030 = vpop.xlane.xlu0 %2029
          %2031 = vmax.xlane.f32.xlu0 %v2024
          %v2032 = vpop.xlane.xlu0 %2031
          %v2033 = vmul.f32 %v2026, %v288
          %v2034 = vmul.f32 %v2028, %v289
          %v2035 = vmul.f32 %v2030, %v290
          %v2036 = vmul.f32 %v2032, %v291
          %v2037 = vadd.f32 %v2033, %v2034
          %v2038 = vadd.f32 %v2037, %v2035
          %v2039 = vadd.f32 %v2038, %v2036
          %v2040 = vrot.slane %v2039, 4
          %v2041 = vadd.f32 %v2039, %v2040
          %v2042 = vrot.slane %v2041, 2
          %v2043 = vadd.f32 %v2041, %v2042
          %v2044 = vrot.slane %v2043, 1
          %v2045 = vadd.f32 %v2043, %v2044
          %v2046 = vadd.f32 %v2045, %v292
          %2047 = vst [vmem:[%s8] sm:$0xff] %v1991
          %2048 = vst [vmem:[#allocation11] sm:$0x1] %v2046
          %v2049 = vld [vmem:[%s1967] sm:$0x1]
          %vm2050 = vcmp.gt.f32.partialorder %v2049, 0.5
          %v2051 = vld [vmem:[%s1954] sm:$0xff]
          %v2052 = vld [vmem:[%s1343] sm:$0xff]
          %v2053 = vsel %vm2050, 1, 0
          %v2054 = vperm.slane %v2053, 0
          %2055 = vset.pattern.permute.xlu0 0
          %2056 = vperm.xlu0 %2055, %v2054
          %v2057 = vpop.permute.xlu0 %2056
          %vm2058 = vcmp.eq.s32.totalorder %v2057, 1
          %v2059 = vsel %vm2058, %v2051, %v2052
          %2060 = vmatpush.msra.mxu0 0.0
          %2061 = vmatpush.msra.mxu0 0.0
          %2062 = vmatpush.msra.mxu0 0.0
          %2063 = vmatpush.msra.mxu0 0.0
          %2064 = vmatpush.msra.mxu0 0.0
          %2065 = vmatpush.msra.mxu0 0.0
          %2066 = vmatpush.msra.mxu0 0.0
          %2067 = vmatpush.msra.mxu0 0.0
          %2068 = vmatpush.msra.mxu0 0.0
          %2069 = vmatpush.msra.mxu0 0.0
          %2070 = vmatpush.msra.mxu0 0.0
          %2071 = vmatpush.msra.mxu0 0.0
          %2072 = vmatpush.msra.mxu0 0.0
          %2073 = vmatpush.msra.mxu0 0.0
          %2074 = vmatpush.msra.mxu0 0.0
          %2075 = vmatpush.msra.mxu0 %v2059
          %2076 = vmatmul.f32.gmra.mxu0 %v924
          %v2077 = vpop.f32.mrf.mxu0
          %v2078 = vadd.f32 %v905, %v2077
          %2079 = vmatmul.f32.gmra.mxu0 %v927
          %v2080 = vpop.f32.mrf.mxu0
          %v2081 = vadd.f32 %v910, %v2080
          %2082 = vmatmul.f32.gmra.mxu0 %v930
          %v2083 = vpop.f32.mrf.mxu0
          %v2084 = vadd.f32 %v915, %v2083
          %2085 = vmatmul.f32.gmra.mxu0 %v933
          %v2086 = vpop.f32.mrf.mxu0
          %v2087 = vadd.f32 %v920, %v2086
          %2088 = vdwg.mxu0
          %v2089 = vmax.f32 %v2078, 0.0
          %v2090 = vmax.f32 %v2081, 0.0
          %v2091 = vmax.f32 %v2084, 0.0
          %v2092 = vmax.f32 %v2087, 0.0
          %2093 = vmax.xlane.f32.xlu0 %v2089
          %v2094 = vpop.xlane.xlu0 %2093
          %2095 = vmax.xlane.f32.xlu0 %v2090
          %v2096 = vpop.xlane.xlu0 %2095
          %2097 = vmax.xlane.f32.xlu0 %v2091
          %v2098 = vpop.xlane.xlu0 %2097
          %2099 = vmax.xlane.f32.xlu0 %v2092
          %v2100 = vpop.xlane.xlu0 %2099
          %v2101 = vmul.f32 %v2094, %v288
          %v2102 = vmul.f32 %v2096, %v289
          %v2103 = vmul.f32 %v2098, %v290
          %v2104 = vmul.f32 %v2100, %v291
          %v2105 = vadd.f32 %v2101, %v2102
          %v2106 = vadd.f32 %v2105, %v2103
          %v2107 = vadd.f32 %v2106, %v2104
          %v2108 = vrot.slane %v2107, 4
          %v2109 = vadd.f32 %v2107, %v2108
          %v2110 = vrot.slane %v2109, 2
          %v2111 = vadd.f32 %v2109, %v2110
          %v2112 = vrot.slane %v2111, 1
          %v2113 = vadd.f32 %v2111, %v2112
          %v2114 = vadd.f32 %v2113, %v292
          %s2115 = scalar_lea.vmem %s8, 8
          %2116 = vst [vmem:[%s2115] sm:$0xff] %v2059
          %s2117 = scalar_lea.vmem [#allocation11], 1
          %2118 = vst [vmem:[%s2117] sm:$0x1] %v2114
        $region56: #{_run_impl.1} parent=47 // pred_fallthru
          _
        // Predicated region
        $region57: #{_run_impl.1} parent=47 // pred_check
          %p2119 = pneg %p190
        $region58: #{_run_impl.1} parent=47 // pred_check_branch
          %2121 = sbr.rel (%p2119) target = $region60
        $region59: #{_run_impl.1} parent=47 // pred_region
          _
        $region60: #{_run_impl.1} parent=47 // pred_fallthru
          _
        // Predicated region
        $region61: #{_run_impl.1} parent=47 // pred_check
          %p2122 = pneg %p211
        $region62: #{_run_impl.1} parent=47 // pred_check_branch
          %2124 = sbr.rel (%p2122) target = $region64
        $region63: #{_run_impl.1} parent=47 // pred_region
          %2126 = vsyncadd [#allocation12], 0
          %s2127 = sshll.u32 [#allocation11], 4
          %s2128 = int_to_ptr.vmem [resolvable:$true] %s2127
          %s2129 = sshll.u32 %s9, 4
          %s2130 = int_to_ptr.hbm [resolvable:$true] %s2129
          %2135 = dma.vmem_to_hbm [thread:$0]  %s2128, 32, %s2130, [#allocation12], 16, 16, 1
        $region64: #{_run_impl.1} parent=47 // pred_fallthru
          _
        // Predicated region
        $region65: #{_run_impl.1} parent=47 // pred_check
          %p2136 = pneg %p190
        $region66: #{_run_impl.1} parent=47 // pred_check_branch
          %2138 = sbr.rel (%p2136) target = $region68
        $region67: #{_run_impl.1} parent=47 // pred_region
          _
        $region68: #{_run_impl.1} parent=47 // pred_fallthru
          _
        // Predicated region
        $region69: #{_run_impl.1} parent=47 // pred_check
          %p2139 = pneg %p211
        $region70: #{_run_impl.1} parent=47 // pred_check_branch
          %2141 = sbr.rel (%p2139) target = $region72
        $region71: #{_run_impl.1} parent=47 // pred_region
          %2143 = dma.done [#allocation12], 32
        $region72: #{_run_impl.1} parent=47 // pred_fallthru
          _
      $region48: #{_run_impl.1} parent=5 // pred_fallthru
        _
      %p2144 = scmp.le.s32.totalorder 2, %s25
      // Predicated region
      $region73: #{_run_impl.1} parent=5 // pred_check
        %p2145 = pneg %p2144
      $region74: #{_run_impl.1} parent=5 // pred_check_branch
        %2147 = sbr.rel (%p2145) target = $region76
      $region75: #{_run_impl.1} parent=5 // pred_region
        %s2148 = ssub.s32 %s25, 2
      $region76: #{_run_impl.1} parent=5 // pred_fallthru
        _
    $region6: #{_run_impl.1} parent=1 // loop_footer
      %s29 = sadd.s32 1, %s25
    $region7: #{_run_impl.1} parent=1 // loop_footer_branch
      %24 = sbr.rel target = $region3
    $region8: #{_run_impl.1} parent=1 // loop_exit
      _
    %2149 = vsyncpa [#allocation12], 1
    %s2150 = scalar_lea.sflag [#allocation12], 1
    %2151 = vsyncpa %s2150, 1

</llo_original>
